<compile_context>
chip_gen: v7x
topology: tpu7x:2x2x1
jax: 0.10.0
libtpu: 0.0.40
codegen_flags: <defaults>
</compile_context>

<pallas_src>
import numpy as np
import jax
import jax.numpy as jnp
from jax.experimental import pallas as pl
from jax.experimental.pallas import tpu as pltpu

EPS = 1e-3
SIGMA = 0.05  # GaussianActivationLayer(init_sigma=0.1*random.random()) -> deterministic 0.05


def _pick_vmem_limit():
    cap = None
    try:
        cap = getattr(pltpu.get_tpu_info(), "vmem_capacity_bytes", None)
    except Exception:
        cap = None
    if not cap:
        cap = 64 * 1024 * 1024
    # ~3/4 of physical: ~96 MiB on 128-MiB parts (v5e/v6e), ~48 MiB on v7x.
    return int(min(cap * 3 // 4, 100 * 1024 * 1024))


VMEM_LIMIT = _pick_vmem_limit()


# ----------------------------- activations ---------------------------------
def _identity(x):
    return x


def _relu(x):
    return jnp.maximum(x, 0.0)


def _gaussian(sigma):
    inv = 1.0 / (2.0 * float(sigma) * float(sigma))

    def f(x):
        # TODO(synk): GaussianActivationLayer assumed to be exp(-x^2 / (2*sigma^2))
        return jnp.exp(-(x * x) * inv)

    return f


# --------------------------- fused conv block kernel ------------------------
def _make_conv_block_kernel(H, W, SH, KH, KW, Cin, Cout, pad, act, pool, group):
    """conv(KHxKW,'same') [BN scale folded into w] -> +b1 -> act -> *s2+b2
       -> optional 2x2/stride-2 average pool, for one (batch, row-strip) step."""
    n_strips = H // SH
    Hp, Wp = H + 2 * pad, W + 2 * pad
    ntaps = KH * KW
    taps = [(dy, dx) for dy in range(KH) for dx in range(KW)]

    def body(x_ref, w_ref, b1_ref, s2_ref, b2_ref, o_ref, xp_ref, tmp_ref):
        s = pl.program_id(1)

        if pad > 0:
            # Build the zero-padded image once per batch element in VMEM
            # (no wrapper-side jnp.pad -> no extra HBM round trip per layer).
            @pl.when(s == 0)
            def _():
                xp_ref[...] = jnp.zeros((Hp, Wp, Cin), xp_ref.dtype)
                for j in range(n_strips):
                    xp_ref[pl.ds(pad + j * SH, SH), pl.ds(pad, W), :] = (
                        x_ref[0, pl.ds(j * SH, SH)])

        h0 = pl.multiple_of(s * SH, SH)
        if pad > 0:
            xs = xp_ref[pl.ds(h0, SH + KH - 1), :, :]        # (SH+KH-1, Wp, Cin)
        else:
            xs = x_ref[0, pl.ds(h0, SH + KH - 1)]             # KH == 1 here

        # Tap-grouped shifted-window matmuls: `group` taps share one MXU push
        # (K = group*Cin), bf16 operands with f32 accumulation.
        acc = jnp.zeros((SH * W, Cout), jnp.float32)
        t0 = 0
        while t0 < ntaps:
            grp = taps[t0:t0 + group]
            pieces = [xs[dy:dy + SH, dx:dx + W, :] for (dy, dx) in grp]
            patch = pieces[0] if len(pieces) == 1 else jnp.concatenate(pieces, axis=-1)
            patch = patch.reshape(SH * W, len(grp) * Cin)
            wg = w_ref[t0 * Cin:(t0 + len(grp)) * Cin, :]
            acc = acc + jnp.dot(patch, wg, preferred_element_type=jnp.float32)
            t0 += len(grp)

        out = act(acc + b1_ref[...]) * s2_ref[...] + b2_ref[...]   # f32 elementwise

        if pool:
            # 2x2/stride-2 average pool on the VPU: H pairs via a free leading-axis
            # reshape, W pairs via sublane-strided loads from a VMEM scratch.
            r = out.reshape(SH // 2, 2, W, Cout)
            tmp_ref[...] = (r[:, 0] + r[:, 1]).reshape((SH // 2) * W, Cout)
            half = (SH // 2) * (W // 2)
            ev = tmp_ref[pl.ds(0, half, stride=2), :]
            od = tmp_ref[pl.ds(1, half, stride=2), :]
            out = (ev + od) * 0.25

        o_ref[0] = out.astype(o_ref.dtype)

    if pad > 0 and pool:
        def kernel(x, w, b1, s2, b2, o, xp, tmp):
            body(x, w, b1, s2, b2, o, xp, tmp)
    elif pad > 0:
        def kernel(x, w, b1, s2, b2, o, xp):
            body(x, w, b1, s2, b2, o, xp, None)
    elif pool:
        def kernel(x, w, b1, s2, b2, o, tmp):
            body(x, w, b1, s2, b2, o, None, tmp)
    else:
        def kernel(x, w, b1, s2, b2, o):
            body(x, w, b1, s2, b2, o, None, None)
    return kernel


def _pick_strip(H, W, Cout, pool, n_groups):
    """Largest row strip whose f32 accumulator stays ~256-512 KiB, with >=2
    strips per image when possible (v7x has 2 TensorCores)."""
    budget = (512 if n_groups <= 3 else 256) * 1024
    row_budget = max(8, budget // (4 * max(Cout, 128)))
    cands = [c for c in range(1, H + 1)
             if H % c == 0 and (not pool or c % 2 == 0) and c * W <= row_budget]
    if not cands:
        cands = [2] if (pool and H % 2 == 0) else [1]
    small = [c for c in cands if c <= max(1, H // 2)]
    return max(small or cands)


def conv_block(x_nhwc, layer, *, ksize, pad, act, pool):
    """x: (N,H,W,Cin) -> (N,PH,PW,Cout) bf16.  layer = (w_bf16, b1, s2, b2)."""
    wf, b1, s2, b2 = layer
    N, H, W, Cin = x_nhwc.shape
    KH = KW = ksize
    Cout = wf.shape[-1]
    assert wf.shape == (KH, KW, Cin, Cout)
    assert (H + 2 * pad - KH + 1, W + 2 * pad - KW + 1) == (H, W), "'same'/1x1 only"

    group = min(KH * KW, max(1, 256 // Cin))     # fill the 256-deep MXU contraction
    n_groups = -(-(KH * KW) // group)
    SH = _pick_strip(H, W, Cout, pool, n_groups)
    n_strips = H // SH
    assert H % SH == 0 and (not pool or (SH % 2 == 0 and W % 2 == 0))

    if pool:
        PH, PW = H // 2, W // 2
        SP = (SH // 2) * PW
    else:
        PH, PW = H, W
        SP = SH * W

    def vec(v):
        return jnp.asarray(v, jnp.float32).reshape(1, Cout)

    x = x_nhwc.astype(jnp.bfloat16)                       # no-op after the 1st layer
    w2d = wf.reshape(KH * KW * Cin, Cout)                 # bf16, BN folded at init

    in_specs = [
        pl.BlockSpec((1, H, W, Cin), lambda n, s: (n, 0, 0, 0)),
        pl.BlockSpec((KH * KW * Cin, Cout), lambda n, s: (0, 0)),
        pl.BlockSpec((1, Cout), lambda n, s: (0, 0)),
        pl.BlockSpec((1, Cout), lambda n, s: (0, 0)),
        pl.BlockSpec((1, Cout), lambda n, s: (0, 0)),
    ]
    scratch = []
    if pad > 0:
        scratch.append(pltpu.VMEM((H + 2 * pad, W + 2 * pad, Cin), jnp.bfloat16))
    if pool:
        scratch.append(pltpu.VMEM(((SH // 2) * W, Cout), jnp.float32))

    kernel = _make_conv_block_kernel(H, W, SH, KH, KW, Cin, Cout, pad, act, pool, group)
    out = pl.pallas_call(
        kernel,
        out_shape=jax.ShapeDtypeStruct((N, PH * PW, Cout), jnp.bfloat16),
        grid=(N, n_strips),
        in_specs=in_specs,
        out_specs=pl.BlockSpec((1, SP, Cout), lambda n, s: (n, s, 0)),
        scratch_shapes=scratch,
        compiler_params=pltpu.CompilerParams(
            dimension_semantics=("parallel", "arbitrary" if pad > 0 else "parallel"),
            vmem_limit_bytes=VMEM_LIMIT),
    )(x, w2d, vec(b1), vec(s2), vec(b2))
    return out.reshape(N, PH, PW, Cout)


# ------------------------------- dense kernel -------------------------------
def _dense_kernel(x_ref, w_ref, b_ref, o_ref):
    k = pl.program_id(0)

    @pl.when(k == 0)
    def _():
        o_ref[...] = jnp.zeros_like(o_ref)

    # Output block index is constant across k -> VMEM-resident accumulator.
    o_ref[...] += jnp.dot(x_ref[...], w_ref[...], preferred_element_type=jnp.float32)

    @pl.when(k == pl.num_programs(0) - 1)
    def _():
        o_ref[...] += b_ref[...]


def _weight_spec(kt, M, nk):
    idx = lambda k: (k, 0)
    if nk >= 3:
        try:
            return pl.BlockSpec((kt, M), idx, pipeline_mode=pl.Buffered(3))
        except Exception:
            pass
    return pl.BlockSpec((kt, M), idx)


def dense(x, w, b):
    """K-tiled dense: x (N,K) @ w (K,M) + b; bf16 operands, f32 accumulation."""
    N, K = x.shape
    M = w.shape[1]
    kt = K
    for cand in (16384, 8192, 4096, 2048, 1024, 512, 256, 128):
        if K % cand == 0:
            kt = cand
            break
    nk = K // kt
    return pl.pallas_call(
        _dense_kernel,
        out_shape=jax.ShapeDtypeStruct((N, M), jnp.float32),
        grid=(nk,),
        in_specs=[pl.BlockSpec((N, kt), lambda k: (0, k)),
                  _weight_spec(kt, M, nk),
                  pl.BlockSpec((1, M), lambda k: (0, 0))],
        out_specs=pl.BlockSpec((N, M), lambda k: (0, 0)),
        compiler_params=pltpu.CompilerParams(
            dimension_semantics=("arbitrary",),
            vmem_limit_bytes=VMEM_LIMIT),
    )(x.astype(jnp.bfloat16), w.astype(jnp.bfloat16),
      jnp.asarray(b, jnp.float32).reshape(1, M))


# --------------------------- spatial attention kernel -----------------------
def _make_attn_kernel(HW, C):
    def kernel(l_ref, g_ref, w_ref, c_ref, go_ref):
        lf = l_ref[0]                                          # (HW, C) bf16
        w_col = w_ref[...]                                     # (C, 1)  bf16
        # logits = (l + g) . w  ==  l @ w  +  g . w   (no (HW,C) transpose)
        lw = jnp.dot(lf, w_col, preferred_element_type=jnp.float32)      # (HW, 1)
        gw = jnp.dot(g_ref[...], w_col.astype(jnp.float32),
                     preferred_element_type=jnp.float32)                  # (1, 1) f32
        logits = jnp.transpose(lw) + gw                        # lane-dense (1, HW)
        m = jnp.max(logits, axis=-1, keepdims=True)
        e = jnp.exp(logits - m)
        a = e / jnp.sum(e, axis=-1, keepdims=True)             # softmax over H*W
        c_ref[0] = logits                                      # raw (pre-softmax) map
        # g_out = sum_hw a * l as an MXU matvec: (1,HW) @ (HW,C)
        go_ref[...] = jnp.dot(a.astype(jnp.bfloat16), lf,
                              preferred_element_type=jnp.float32)
    return kernel


def spatial_attn(l_nhwc, g_vec, w_attn):
    """SpatialAttn(normalize_attn=True): c (N,1,H,W) pre-softmax map, g (N,C)."""
    # TODO(synk): for very large H*W this should be tiled over H*W with an
    # online softmax; whole-map blocks fit VMEM comfortably at these sizes.
    N, H, W, C = l_nhwc.shape
    HW = H * W
    kernel = _make_attn_kernel(HW, C)
    c, go = pl.pallas_call(
        kernel,
        out_shape=(jax.ShapeDtypeStruct((N, 1, HW), jnp.float32),
                   jax.ShapeDtypeStruct((N, C), jnp.float32)),
        grid=(N,),
        in_specs=[pl.BlockSpec((1, HW, C), lambda n: (n, 0, 0)),
                  pl.BlockSpec((1, C), lambda n: (n, 0)),
                  pl.BlockSpec((C, 1), lambda n: (0, 0))],
        out_specs=(pl.BlockSpec((1, 1, HW), lambda n: (n, 0, 0)),
                   pl.BlockSpec((1, C), lambda n: (n, 0))),
        compiler_params=pltpu.CompilerParams(
            dimension_semantics=("parallel",),
            vmem_limit_bytes=VMEM_LIMIT),
    )(l_nhwc.reshape(N, HW, C).astype(jnp.bfloat16),
      g_vec.astype(jnp.float32),
      w_attn)
    return c.reshape(N, 1, H, W), go


# ------------------------------- parameters ---------------------------------
def init_params(key, S, cin=3):
    k_final = S // 8   # module hard-codes 32 (256x256 inputs); scaled to sample size
    keys = jax.random.split(key, 24)

    def conv_w(k, kh, kw, ci, co):
        return jax.random.normal(k, (kh, kw, ci, co), jnp.float32) / np.sqrt(kh * kw * ci)

    def bn(k, c):
        k1, k2 = jax.random.split(k)
        gamma = 1.0 + 0.1 * jax.random.normal(k1, (c,), jnp.float32)
        beta = 0.1 * jax.random.normal(k2, (c,), jnp.float32)
        # eval-mode BN with default running stats (mean=0, var=1), eps=1e-3
        scale = gamma / jnp.sqrt(1.0 + EPS)
        return scale, beta

    p = {}
    # TODO(synk): canonical fixed SRM 30-filter bank not reproduced; synthetic deterministic weights.
    p['srm_w'] = conv_w(keys[0], 5, 5, cin, 30)
    p['bn1_s'], p['bn1_b'] = bn(keys[1], 30)

    p['c1_w'] = conv_w(keys[2], 3, 3, 30, 64)
    p['bn_f1_s'], p['bn_f1_b'] = bn(keys[3], 64)

    p['c2_w'] = conv_w(keys[4], 3, 3, 64, 128)
    p['bn2a_s'], p['bn2a_b'] = bn(keys[5], 128)
    p['bn2b_s'], p['bn2b_b'] = bn(keys[6], 128)

    p['c3_w'] = conv_w(keys[7], 3, 3, 128, 256)
    p['bn3a_s'], p['bn3a_b'] = bn(keys[8], 256)
    p['bn3b_s'], p['bn3b_b'] = bn(keys[9], 256)

    p['c4_w'] = conv_w(keys[10], 3, 3, 256, 256)
    p['bn4a_s'], p['bn4a_b'] = bn(keys[11], 256)
    p['bn4b_s'], p['bn4b_b'] = bn(keys[12], 256)

    # 4th block final Conv2d(256,256,kernel_size=spatial,bias=True) flattened as a dense layer
    p['c5_w'] = (jax.random.normal(keys[13], (k_final * k_final * 256, 256), jnp.float32)
                 / np.sqrt(k_final * k_final * 256))
    p['c5_b'] = 0.01 * jax.random.normal(keys[14], (256,), jnp.float32)

    p['proj1_w'] = conv_w(keys[15], 1, 1, 64, 256)
    p['proj2_w'] = conv_w(keys[16], 1, 1, 128, 256)
    p['attn1_w'] = jax.random.normal(keys[17], (256, 1), jnp.float32) / 16.0
    p['attn2_w'] = jax.random.normal(keys[18], (256, 1), jnp.float32) / 16.0
    p['attn3_w'] = jax.random.normal(keys[19], (256, 1), jnp.float32) / 16.0

    p['fc_w'] = jax.random.normal(keys[20], (256 * 3, 2), jnp.float32) / np.sqrt(256 * 3)
    p['fc_b'] = 0.01 * jax.random.normal(keys[21], (2,), jnp.float32)
    return p


def fold_params(p):
    """One-time BN-scale folding + bf16 weight cast (no per-forward casts)."""
    f32 = jnp.float32

    def conv_layer(w, s1, b1, s2, b2):
        co = w.shape[-1]
        wf = (w.astype(f32) * jnp.asarray(s1, f32).reshape(1, 1, 1, co)).astype(jnp.bfloat16)
        return (wf, jnp.asarray(b1, f32), jnp.asarray(s2, f32), jnp.asarray(b2, f32))

    ones = lambda c: jnp.ones((c,), f32)
    zeros = lambda c: jnp.zeros((c,), f32)

    q = {}
    q['srm'] = conv_layer(p['srm_w'], p['bn1_s'], p['bn1_b'], ones(30), zeros(30))
    q['c1'] = conv_layer(p['c1_w'], ones(64), zeros(64), p['bn_f1_s'], p['bn_f1_b'])
    q['c2'] = conv_layer(p['c2_w'], p['bn2a_s'], p['bn2a_b'], p['bn2b_s'], p['bn2b_b'])
    q['c3'] = conv_layer(p['c3_w'], p['bn3a_s'], p['bn3a_b'], p['bn3b_s'], p['bn3b_b'])
    q['c4'] = conv_layer(p['c4_w'], p['bn4a_s'], p['bn4a_b'], p['bn4b_s'], p['bn4b_b'])
    q['proj1'] = conv_layer(p['proj1_w'], ones(256), zeros(256), ones(256), zeros(256))
    q['proj2'] = conv_layer(p['proj2_w'], ones(256), zeros(256), ones(256), zeros(256))
    q['c5_w'] = p['c5_w'].astype(jnp.bfloat16)
    q['c5_b'] = p['c5_b'].astype(f32)
    q['attn1_w'] = p['attn1_w'].astype(jnp.bfloat16)
    q['attn2_w'] = p['attn2_w'].astype(jnp.bfloat16)
    q['attn3_w'] = p['attn3_w'].astype(jnp.bfloat16)
    q['fc_w'] = p['fc_w'].astype(jnp.bfloat16)
    q['fc_b'] = p['fc_b'].astype(f32)
    return q


# ------------------------------ full forward --------------------------------
def srm_kov_net_forward(params, x_nchw):
    x = jnp.transpose(x_nchw, (0, 2, 3, 1)).astype(jnp.bfloat16)   # NCHW -> NHWC

    # SRMConv (5x5, pad 2, no bias) + BatchNorm2d(30)
    out = conv_block(x, params['srm'], ksize=5, pad=2, act=_identity, pool=False)

    # first block: Conv3x3(30->64,no bias) -> GaussianActivation -> BN(64) -> AvgPool2x2
    f1 = conv_block(out, params['c1'], ksize=3, pad=1, act=_gaussian(SIGMA), pool=True)

    # second block: ConvBn(64->128)=Conv+BN+ReLU -> BN(128) -> AvgPool2x2
    f2 = conv_block(f1, params['c2'], ksize=3, pad=1, act=_relu, pool=True)

    # third block: ConvBn(128->256) -> BN(256)
    f3 = conv_block(f2, params['c3'], ksize=3, pad=1, act=_relu, pool=False)

    # fourth block: ConvBn(256->256) -> BN -> AvgPool -> Conv(k=spatial, bias) -> Dropout(eval=id)
    f4 = conv_block(f3, params['c4'], ksize=3, pad=1, act=_relu, pool=True)
    Np, PH, PW, C4 = f4.shape
    g = dense(f4.reshape(Np, PH * PW * C4), params['c5_w'], params['c5_b'])   # (N,256)
    # Dropout(p=0.5) is identity in eval mode.

    # attention branch
    p1 = conv_block(f1, params['proj1'], ksize=1, pad=0, act=_identity, pool=False)
    p2 = conv_block(f2, params['proj2'], ksize=1, pad=0, act=_identity, pool=False)
    c1, g1 = spatial_attn(p1, g, params['attn1_w'])
    c2, g2 = spatial_attn(p2, g, params['attn2_w'])
    c3, g3 = spatial_attn(f3, g, params['attn3_w'])

    feat = jnp.concatenate([g1, g2, g3], axis=1)                  # (N, 768)
    logits = dense(feat, params['fc_w'], params['fc_b'])          # (N, 2)
    return [logits, c1, c2, c3]


# ---------------------------------- main -------------------------------------
if __name__ == "__main__":
    N, CIN, S = 2, 3, 32
    key = jax.random.PRNGKey(0)
    kx, kp = jax.random.split(key)
    x = jax.random.normal(kx, (N, CIN, S, S), jnp.float32)        # NCHW, like PyTorch
    params = fold_params(init_params(kp, S, CIN))                 # fold/cast ONCE

    outs = srm_kov_net_forward(params, x)
    outs = jax.block_until_ready(outs)
    logits, c1, c2, c3 = outs

    assert logits.shape == (N, 2)
    assert c1.shape == (N, 1, S // 2, S // 2)
    assert c2.shape == (N, 1, S // 4, S // 4)
    assert c3.shape == (N, 1, S // 4, S // 4)
    assert all(bool(jnp.all(jnp.isfinite(o))) for o in [logits, c1, c2, c3])
    print("KERNEL_OK")
</pallas_src>

<mosaic_0001>
module attributes {stable_mosaic.version = 11 : i64} {
  func.func @kernel(%arg0: i32, %arg1: i32, %arg2: memref<1x32x32x3xbf16, #tpu.memory_space<vmem>>, %arg3: memref<75x30xbf16, #tpu.memory_space<vmem>>, %arg4: memref<1x30xf32, #tpu.memory_space<vmem>>, %arg5: memref<1x30xf32, #tpu.memory_space<vmem>>, %arg6: memref<1x30xf32, #tpu.memory_space<vmem>>, %arg7: memref<1x512x30xbf16, #tpu.memory_space<vmem>>, %arg8: memref<36x36x3xbf16, #tpu.memory_space<vmem>>) attributes {dimension_semantics = [#tpu.dimension_semantics<parallel>, #tpu.dimension_semantics<arbitrary>], iteration_bounds = array<i64: 2, 2>, scalar_prefetch = 0 : i64, scratch_operands = 1 : i64, tpu.core_type = #tpu.core_type<tc>, window_params = [{transform_indices = @transform_0, window_bounds = array<i64: 1, 32, 32, 3>}, {pipeline_mode = #tpu.pipeline_mode<synchronous>, transform_indices = @transform_1, window_bounds = array<i64: 75, 30>}, {pipeline_mode = #tpu.pipeline_mode<synchronous>, transform_indices = @transform_2, window_bounds = array<i64: 1, 30>}, {pipeline_mode = #tpu.pipeline_mode<synchronous>, transform_indices = @transform_3, window_bounds = array<i64: 1, 30>}, {pipeline_mode = #tpu.pipeline_mode<synchronous>, transform_indices = @transform_4, window_bounds = array<i64: 1, 30>}, {transform_indices = @transform_5, window_bounds = array<i64: 1, 512, 30>}]} {
    %c0_i32 = arith.constant 0 : i32
    %0 = arith.cmpi eq, %arg1, %c0_i32 : i32
    %1 = arith.extui %0 : i1 to i32
    %c0_i32_0 = arith.constant 0 : i32
    %2 = arith.cmpi ne, %1, %c0_i32_0 : i32
    scf.if %2 {
      %cst_14 = arith.constant 0.000000e+00 : bf16
      %53 = vector.broadcast %cst_14 : bf16 to vector<36x36x3xbf16>
      %c0_15 = arith.constant 0 : index
      %c0_16 = arith.constant 0 : index
      %c0_17 = arith.constant 0 : index
      %54 = vector.load %arg8[%c0_15, %c0_16, %c0_17] : memref<36x36x3xbf16, #tpu.memory_space<vmem>>, vector<36x36x3xbf16>
      tpu.vector_store %arg8[%c0_15, %c0_16, %c0_17], %53 {strides = array<i32>} : memref<36x36x3xbf16, #tpu.memory_space<vmem>>, vector<36x36x3xbf16>,
      %c0_18 = arith.constant 0 : index
      %c0_19 = arith.constant 0 : index
      %c0_20 = arith.constant 0 : index
      %c0_21 = arith.constant 0 : index
      %55 = vector.load %arg2[%c0_18, %c0_19, %c0_20, %c0_21] : memref<1x32x32x3xbf16, #tpu.memory_space<vmem>>, vector<1x16x32x3xbf16>
      %56 = vector.shape_cast %55 : vector<1x16x32x3xbf16> to vector<16x32x3xbf16>
      %c2 = arith.constant 2 : index
      %c2_22 = arith.constant 2 : index
      %c0_23 = arith.constant 0 : index
      %57 = vector.load %arg8[%c2, %c2_22, %c0_23] : memref<36x36x3xbf16, #tpu.memory_space<vmem>>, vector<16x32x3xbf16>
      tpu.vector_store %arg8[%c2, %c2_22, %c0_23], %56 {strides = array<i32>} : memref<36x36x3xbf16, #tpu.memory_space<vmem>>, vector<16x32x3xbf16>,
      %c0_24 = arith.constant 0 : index
      %c16 = arith.constant 16 : index
      %c0_25 = arith.constant 0 : index
      %c0_26 = arith.constant 0 : index
      %58 = vector.load %arg2[%c0_24, %c16, %c0_25, %c0_26] : memref<1x32x32x3xbf16, #tpu.memory_space<vmem>>, vector<1x16x32x3xbf16>
      %59 = vector.shape_cast %58 : vector<1x16x32x3xbf16> to vector<16x32x3xbf16>
      %c18 = arith.constant 18 : index
      %c2_27 = arith.constant 2 : index
      %c0_28 = arith.constant 0 : index
      %60 = vector.load %arg8[%c18, %c2_27, %c0_28] : memref<36x36x3xbf16, #tpu.memory_space<vmem>>, vector<16x32x3xbf16>
      tpu.vector_store %arg8[%c18, %c2_27, %c0_28], %59 {strides = array<i32>} : memref<36x36x3xbf16, #tpu.memory_space<vmem>>, vector<16x32x3xbf16>,
    } else {
    }
    %c16_i32 = arith.constant 16 : i32
    %3 = arith.muli %arg1, %c16_i32 : i32
    %4 = tpu.assume_multiple %3, 16 : i32
    %5 = arith.index_cast %4 : i32 to index
    %c0 = arith.constant 0 : index
    %c0_1 = arith.constant 0 : index
    %6 = vector.load %arg8[%5, %c0, %c0_1] : memref<36x36x3xbf16, #tpu.memory_space<vmem>>, vector<20x36x3xbf16>
    %cst = arith.constant 0.000000e+00 : f32
    %7 = vector.broadcast %cst : f32 to vector<512x30xf32>
    %8 = vector.extract_strided_slice %6 {offsets = [0, 0, 0], sizes = [16, 32, 3], strides = [1, 1, 1]} : vector<20x36x3xbf16> to vector<16x32x3xbf16>
    %9 = vector.extract_strided_slice %6 {offsets = [0, 1, 0], sizes = [16, 32, 3], strides = [1, 1, 1]} : vector<20x36x3xbf16> to vector<16x32x3xbf16>
    %10 = vector.extract_strided_slice %6 {offsets = [0, 2, 0], sizes = [16, 32, 3], strides = [1, 1, 1]} : vector<20x36x3xbf16> to vector<16x32x3xbf16>
    %11 = vector.extract_strided_slice %6 {offsets = [0, 3, 0], sizes = [16, 32, 3], strides = [1, 1, 1]} : vector<20x36x3xbf16> to vector<16x32x3xbf16>
    %12 = vector.extract_strided_slice %6 {offsets = [0, 4, 0], sizes = [16, 32, 3], strides = [1, 1, 1]} : vector<20x36x3xbf16> to vector<16x32x3xbf16>
    %13 = vector.extract_strided_slice %6 {offsets = [1, 0, 0], sizes = [16, 32, 3], strides = [1, 1, 1]} : vector<20x36x3xbf16> to vector<16x32x3xbf16>
    %14 = vector.extract_strided_slice %6 {offsets = [1, 1, 0], sizes = [16, 32, 3], strides = [1, 1, 1]} : vector<20x36x3xbf16> to vector<16x32x3xbf16>
    %15 = vector.extract_strided_slice %6 {offsets = [1, 2, 0], sizes = [16, 32, 3], strides = [1, 1, 1]} : vector<20x36x3xbf16> to vector<16x32x3xbf16>
    %16 = vector.extract_strided_slice %6 {offsets = [1, 3, 0], sizes = [16, 32, 3], strides = [1, 1, 1]} : vector<20x36x3xbf16> to vector<16x32x3xbf16>
    %17 = vector.extract_strided_slice %6 {offsets = [1, 4, 0], sizes = [16, 32, 3], strides = [1, 1, 1]} : vector<20x36x3xbf16> to vector<16x32x3xbf16>
    %18 = vector.extract_strided_slice %6 {offsets = [2, 0, 0], sizes = [16, 32, 3], strides = [1, 1, 1]} : vector<20x36x3xbf16> to vector<16x32x3xbf16>
    %19 = vector.extract_strided_slice %6 {offsets = [2, 1, 0], sizes = [16, 32, 3], strides = [1, 1, 1]} : vector<20x36x3xbf16> to vector<16x32x3xbf16>
    %20 = vector.extract_strided_slice %6 {offsets = [2, 2, 0], sizes = [16, 32, 3], strides = [1, 1, 1]} : vector<20x36x3xbf16> to vector<16x32x3xbf16>
    %21 = vector.extract_strided_slice %6 {offsets = [2, 3, 0], sizes = [16, 32, 3], strides = [1, 1, 1]} : vector<20x36x3xbf16> to vector<16x32x3xbf16>
    %22 = vector.extract_strided_slice %6 {offsets = [2, 4, 0], sizes = [16, 32, 3], strides = [1, 1, 1]} : vector<20x36x3xbf16> to vector<16x32x3xbf16>
    %23 = vector.extract_strided_slice %6 {offsets = [3, 0, 0], sizes = [16, 32, 3], strides = [1, 1, 1]} : vector<20x36x3xbf16> to vector<16x32x3xbf16>
    %24 = vector.extract_strided_slice %6 {offsets = [3, 1, 0], sizes = [16, 32, 3], strides = [1, 1, 1]} : vector<20x36x3xbf16> to vector<16x32x3xbf16>
    %25 = vector.extract_strided_slice %6 {offsets = [3, 2, 0], sizes = [16, 32, 3], strides = [1, 1, 1]} : vector<20x36x3xbf16> to vector<16x32x3xbf16>
    %26 = vector.extract_strided_slice %6 {offsets = [3, 3, 0], sizes = [16, 32, 3], strides = [1, 1, 1]} : vector<20x36x3xbf16> to vector<16x32x3xbf16>
    %27 = vector.extract_strided_slice %6 {offsets = [3, 4, 0], sizes = [16, 32, 3], strides = [1, 1, 1]} : vector<20x36x3xbf16> to vector<16x32x3xbf16>
    %28 = vector.extract_strided_slice %6 {offsets = [4, 0, 0], sizes = [16, 32, 3], strides = [1, 1, 1]} : vector<20x36x3xbf16> to vector<16x32x3xbf16>
    %29 = vector.extract_strided_slice %6 {offsets = [4, 1, 0], sizes = [16, 32, 3], strides = [1, 1, 1]} : vector<20x36x3xbf16> to vector<16x32x3xbf16>
    %30 = vector.extract_strided_slice %6 {offsets = [4, 2, 0], sizes = [16, 32, 3], strides = [1, 1, 1]} : vector<20x36x3xbf16> to vector<16x32x3xbf16>
    %31 = vector.extract_strided_slice %6 {offsets = [4, 3, 0], sizes = [16, 32, 3], strides = [1, 1, 1]} : vector<20x36x3xbf16> to vector<16x32x3xbf16>
    %32 = vector.extract_strided_slice %6 {offsets = [4, 4, 0], sizes = [16, 32, 3], strides = [1, 1, 1]} : vector<20x36x3xbf16> to vector<16x32x3xbf16>
    %33 = tpu.concatenate %8, %9, %10, %11, %12, %13, %14, %15, %16, %17, %18, %19, %20, %21, %22, %23 in 2 : vector<16x32x3xbf16>, vector<16x32x3xbf16>, vector<16x32x3xbf16>, vector<16x32x3xbf16>, vector<16x32x3xbf16>, vector<16x32x3xbf16>, vector<16x32x3xbf16>, vector<16x32x3xbf16>, vector<16x32x3xbf16>, vector<16x32x3xbf16>, vector<16x32x3xbf16>, vector<16x32x3xbf16>, vector<16x32x3xbf16>, vector<16x32x3xbf16>, vector<16x32x3xbf16>, vector<16x32x3xbf16> -> vector<16x32x48xbf16>
    %34 = tpu.concatenate %24, %25, %26, %27, %28, %29, %30, %31, %32 in 2 : vector<16x32x3xbf16>, vector<16x32x3xbf16>, vector<16x32x3xbf16>, vector<16x32x3xbf16>, vector<16x32x3xbf16>, vector<16x32x3xbf16>, vector<16x32x3xbf16>, vector<16x32x3xbf16>, vector<16x32x3xbf16> -> vector<16x32x27xbf16>
    %35 = tpu.concatenate %33, %34 in 2 : vector<16x32x48xbf16>, vector<16x32x27xbf16> -> vector<16x32x75xbf16>
    %36 = vector.shape_cast %35 : vector<16x32x75xbf16> to vector<512x75xbf16>
    %c0_2 = arith.constant 0 : index
    %c0_3 = arith.constant 0 : index
    %37 = vector.load %arg3[%c0_2, %c0_3] : memref<75x30xbf16, #tpu.memory_space<vmem>>, vector<75x30xbf16>
    %cst_4 = arith.constant dense<0.000000e+00> : vector<512x30xf32>
    %38 = tpu.matmul %36, %37, %cst_4 {dimension_numbers = #tpu.dot_dimension_numbers<[1], [0], [0], [1], [0, 0, 1, 1], [], []>} : vector<512x75xbf16>, vector<75x30xbf16>, vector<512x30xf32> -> vector<512x30xf32>
    %39 = arith.addf %7, %38 : vector<512x30xf32>
    %c0_5 = arith.constant 0 : index
    %c0_6 = arith.constant 0 : index
    %40 = vector.load %arg4[%c0_5, %c0_6] : memref<1x30xf32, #tpu.memory_space<vmem>>, vector<1x30xf32>
    %41 = vector.broadcast %40 : vector<1x30xf32> to vector<512x30xf32>
    %42 = arith.addf %39, %41 : vector<512x30xf32>
    %c0_7 = arith.constant 0 : index
    %c0_8 = arith.constant 0 : index
    %43 = vector.load %arg5[%c0_7, %c0_8] : memref<1x30xf32, #tpu.memory_space<vmem>>, vector<1x30xf32>
    %44 = vector.broadcast %43 : vector<1x30xf32> to vector<512x30xf32>
    %45 = arith.mulf %42, %44 : vector<512x30xf32>
    %c0_9 = arith.constant 0 : index
    %c0_10 = arith.constant 0 : index
    %46 = vector.load %arg6[%c0_9, %c0_10] : memref<1x30xf32, #tpu.memory_space<vmem>>, vector<1x30xf32>
    %47 = vector.broadcast %46 : vector<1x30xf32> to vector<512x30xf32>
    %48 = arith.addf %45, %47 : vector<512x30xf32>
    %49 = arith.truncf %48 : vector<512x30xf32> to vector<512x30xbf16>
    %c0_11 = arith.constant 0 : index
    %c0_12 = arith.constant 0 : index
    %c0_13 = arith.constant 0 : index
    %50 = vector.load %arg7[%c0_11, %c0_12, %c0_13] : memref<1x512x30xbf16, #tpu.memory_space<vmem>>, vector<1x512x30xbf16>
    %51 = vector.shape_cast %50 : vector<1x512x30xbf16> to vector<512x30xbf16>
    %52 = vector.shape_cast %49 : vector<512x30xbf16> to vector<1x512x30xbf16>
    tpu.vector_store %arg7[%c0_11, %c0_12, %c0_13], %52 {strides = array<i32>} : memref<1x512x30xbf16, #tpu.memory_space<vmem>>, vector<1x512x30xbf16>,
    return
  }
  func.func @transform_0(%arg0: i32, %arg1: i32) -> (i32, i32, i32, i32) {
    %c0_i32 = arith.constant 0 : i32
    %c0_i32_0 = arith.constant 0 : i32
    %c0_i32_1 = arith.constant 0 : i32
    %c0_i32_2 = arith.constant 0 : i32
    return %arg0, %c0_i32, %c0_i32_0, %c0_i32_1 : i32, i32, i32, i32
  }
  func.func @transform_1(%arg0: i32, %arg1: i32) -> (i32, i32) {
    %c0_i32 = arith.constant 0 : i32
    %c0_i32_0 = arith.constant 0 : i32
    %c0_i32_1 = arith.constant 0 : i32
    return %c0_i32, %c0_i32_0 : i32, i32
  }
  func.func @transform_2(%arg0: i32, %arg1: i32) -> (i32, i32) {
    %c0_i32 = arith.constant 0 : i32
    %c0_i32_0 = arith.constant 0 : i32
    %c0_i32_1 = arith.constant 0 : i32
    return %c0_i32, %c0_i32_0 : i32, i32
  }
  func.func @transform_3(%arg0: i32, %arg1: i32) -> (i32, i32) {
    %c0_i32 = arith.constant 0 : i32
    %c0_i32_0 = arith.constant 0 : i32
    %c0_i32_1 = arith.constant 0 : i32
    return %c0_i32, %c0_i32_0 : i32, i32
  }
  func.func @transform_4(%arg0: i32, %arg1: i32) -> (i32, i32) {
    %c0_i32 = arith.constant 0 : i32
    %c0_i32_0 = arith.constant 0 : i32
    %c0_i32_1 = arith.constant 0 : i32
    return %c0_i32, %c0_i32_0 : i32, i32
  }
  func.func @transform_5(%arg0: i32, %arg1: i32) -> (i32, i32, i32) {
    %c0_i32 = arith.constant 0 : i32
    %c0_i32_0 = arith.constant 0 : i32
    return %arg0, %arg1, %c0_i32 : i32, i32, i32
  }
}

</mosaic_0001>

<llo_original>
// kernel: tpu_custom_call.1
$region0: #{tpu_custom_call.1}
  #allocation0 [shape = 'u32[]', space=smem, size = 0x4, offset = 0x4, fixed_abs, tag = 'smem constant byte address 0x4 - core index']
  #allocation1 [shape = 'u32[144,128]{1,0:T(1,128)}', space=vmem, size = 0x12000, scoped, tag = 'internal scratch']
  #allocation2 [shape = 'bf16[36,36,3]{2,1,0:T(8,128)(2,1)}', space=vmem, size = 0x5a000, scoped, tag = 'scratch operand']
  %s0 = inlined_call_operand.vmem [shape: bf16[2,32,32,3], index: 0, kind: input, shape index: {}]
  %s1 = inlined_call_operand.vmem [shape: bf16[75,30], index: 1, kind: input, shape index: {}]
  %s2 = inlined_call_operand.vmem [shape: f32[1,30], index: 2, kind: input, shape index: {}]
  %s3 = inlined_call_operand.vmem [shape: f32[1,30], index: 3, kind: input, shape index: {}]
  %s4 = inlined_call_operand.vmem [shape: f32[1,30], index: 4, kind: input, shape index: {}]
  %s5 = inlined_call_operand.vmem [shape: bf16[2,1024,30], index: 5, kind: output, shape index: {}]
  %s6 = sld [smem:[#allocation0]]
  $region57: #{tpu_custom_call.1} parent=0
    _
  %s8 = ssub.s32 1, %s6
  %s9 = scalar_select 0, %s8, %s6
  loop: start=0, step=1, limit=6
  $region2: #{tpu_custom_call.1} parent=0 // loop_pre_header
    _
  $region3: #{tpu_custom_call.1} parent=0 // loop_header
    %s11 = sphi 0, %s15
    %p12 = scmp.ge.s32.totalorder %s11, 6
    %s18 = sphi 0, %s30
    %s19 = sphi 0, %s26
    %s20 = sphi 0, %s18
    %s21 = sphi 0, %s19
    %s22 = sphi 0, %s20
    %s23 = sphi 0, %s21
    %s33 = sphi 0, %s35
    %s36 = sphi 0, %s33
    %s37 = sphi 0, %s36
    %s53 = sphi 0, %s37
    %s57 = sphi 0, %s57
    %s59 = sphi 0, %s57
    %s60 = sphi 0, %s59
    %s74 = sphi 0, %s60
    %s78 = sphi 0, %s78
    %s80 = sphi 0, %s78
    %s81 = sphi 0, %s80
    %s95 = sphi 0, %s81
    %s99 = sphi 0, %s99
    %s101 = sphi 0, %s99
    %s102 = sphi 0, %s101
    %s116 = sphi 0, %s102
    %s120 = sphi 0, %s120
    %s122 = sphi 0, %s120
    %s123 = sphi 0, %s122
    %s137 = sphi 0, %s123
    %s145 = sphi 0, %s147
    %s148 = sphi 0, %s145
    %s149 = sphi 0, %s148
    %s165 = sphi 0, %s149
  $region4: #{tpu_custom_call.1} parent=0 // loop_header_branch
    %14 = sbr.rel (%p12) target = $region8
  $region5: #{tpu_custom_call.1} parent=0 // loop_body
    %s16 = ssub.s32 %s11, 1
    %s17 = ssub.s32 %s11, 2
    %s24 = sadd.s32 1, %s19
    %p25 = scmp.ge.s32.totalorder %s24, 2
    %s26 = scalar_select %p25, 0, %s24
    %s27 = sadd.s32 1, %s18
    %s28 = scalar_select %p25, %s27, %s18
    %p29 = scmp.ge.s32.totalorder %s28, 2
    %s30 = scalar_select %p29, 0, %s28
    %s31 = ssub.s32 %s18, %s30
    %p32 = scmp.eq.s32.totalorder %s31, 0
    %s34 = sadd.s32 %s33, 1
    %s35 = scalar_select %p32, %s33, %s34
    %p38 = pneg %p32
    %p39 = scmp.eq.s32.totalorder %s11, 3
    %p40 = por %p38, %p39
    %p41 = scmp.ne.s32.totalorder %s33, %s36
    %p42 = scmp.eq.s32.totalorder %s11, 0
    %p43 = por %p41, %p42
    %p44 = scmp.ne.s32.totalorder %s33, %s36
    %p45 = scmp.eq.s32.totalorder %s16, 3
    %p46 = por %p44, %p45
    %p47 = scmp.ne.s32.totalorder %s36, %s37
    %p48 = scmp.eq.s32.totalorder %s16, 0
    %p49 = por %p47, %p48
    %p50 = scmp.ne.s32.totalorder %s36, %s37
    %p51 = scmp.eq.s32.totalorder %s17, 3
    %p52 = por %p50, %p51
    %p54 = scmp.ne.s32.totalorder %s37, %s53
    %p55 = scmp.eq.s32.totalorder %s17, 0
    %p56 = por %p54, %p55
    %s58 = sadd.s32 %s57, 1
    %p61 = scmp.eq.s32.totalorder %s11, 3
    %p62 = scmp.ne.s32.totalorder %s57, %s59
    %p63 = scmp.eq.s32.totalorder %s11, 0
    %p64 = por %p62, %p63
    %p65 = scmp.ne.s32.totalorder %s57, %s59
    %p66 = scmp.eq.s32.totalorder %s16, 3
    %p67 = por %p65, %p66
    %p68 = scmp.ne.s32.totalorder %s59, %s60
    %p69 = scmp.eq.s32.totalorder %s16, 0
    %p70 = por %p68, %p69
    %p71 = scmp.ne.s32.totalorder %s59, %s60
    %p72 = scmp.eq.s32.totalorder %s17, 3
    %p73 = por %p71, %p72
    %p75 = scmp.ne.s32.totalorder %s60, %s74
    %p76 = scmp.eq.s32.totalorder %s17, 0
    %p77 = por %p75, %p76
    %s79 = sadd.s32 %s78, 1
    %p82 = scmp.eq.s32.totalorder %s11, 3
    %p83 = scmp.ne.s32.totalorder %s78, %s80
    %p84 = scmp.eq.s32.totalorder %s11, 0
    %p85 = por %p83, %p84
    %p86 = scmp.ne.s32.totalorder %s78, %s80
    %p87 = scmp.eq.s32.totalorder %s16, 3
    %p88 = por %p86, %p87
    %p89 = scmp.ne.s32.totalorder %s80, %s81
    %p90 = scmp.eq.s32.totalorder %s16, 0
    %p91 = por %p89, %p90
    %p92 = scmp.ne.s32.totalorder %s80, %s81
    %p93 = scmp.eq.s32.totalorder %s17, 3
    %p94 = por %p92, %p93
    %p96 = scmp.ne.s32.totalorder %s81, %s95
    %p97 = scmp.eq.s32.totalorder %s17, 0
    %p98 = por %p96, %p97
    %s100 = sadd.s32 %s99, 1
    %p103 = scmp.eq.s32.totalorder %s11, 3
    %p104 = scmp.ne.s32.totalorder %s99, %s101
    %p105 = scmp.eq.s32.totalorder %s11, 0
    %p106 = por %p104, %p105
    %p107 = scmp.ne.s32.totalorder %s99, %s101
    %p108 = scmp.eq.s32.totalorder %s16, 3
    %p109 = por %p107, %p108
    %p110 = scmp.ne.s32.totalorder %s101, %s102
    %p111 = scmp.eq.s32.totalorder %s16, 0
    %p112 = por %p110, %p111
    %p113 = scmp.ne.s32.totalorder %s101, %s102
    %p114 = scmp.eq.s32.totalorder %s17, 3
    %p115 = por %p113, %p114
    %p117 = scmp.ne.s32.totalorder %s102, %s116
    %p118 = scmp.eq.s32.totalorder %s17, 0
    %p119 = por %p117, %p118
    %s121 = sadd.s32 %s120, 1
    %p124 = scmp.eq.s32.totalorder %s11, 3
    %p125 = scmp.ne.s32.totalorder %s120, %s122
    %p126 = scmp.eq.s32.totalorder %s11, 0
    %p127 = por %p125, %p126
    %p128 = scmp.ne.s32.totalorder %s120, %s122
    %p129 = scmp.eq.s32.totalorder %s16, 3
    %p130 = por %p128, %p129
    %p131 = scmp.ne.s32.totalorder %s122, %s123
    %p132 = scmp.eq.s32.totalorder %s16, 0
    %p133 = por %p131, %p132
    %p134 = scmp.ne.s32.totalorder %s122, %s123
    %p135 = scmp.eq.s32.totalorder %s17, 3
    %p136 = por %p134, %p135
    %p138 = scmp.ne.s32.totalorder %s123, %s137
    %p139 = scmp.eq.s32.totalorder %s17, 0
    %p140 = por %p138, %p139
    %s141 = ssub.s32 %s18, %s30
    %s142 = ssub.s32 %s19, %s26
    %s143 = sor.u32 %s141, %s142
    %p144 = scmp.eq.s32.totalorder %s143, 0
    %s146 = sadd.s32 %s145, 1
    %s147 = scalar_select %p144, %s145, %s146
    %p150 = pneg %p144
    %p151 = scmp.eq.s32.totalorder %s11, 3
    %p152 = por %p150, %p151
    %p153 = scmp.ne.s32.totalorder %s145, %s148
    %p154 = scmp.eq.s32.totalorder %s11, 0
    %p155 = por %p153, %p154
    %p156 = scmp.ne.s32.totalorder %s145, %s148
    %p157 = scmp.eq.s32.totalorder %s16, 3
    %p158 = por %p156, %p157
    %p159 = scmp.ne.s32.totalorder %s148, %s149
    %p160 = scmp.eq.s32.totalorder %s16, 0
    %p161 = por %p159, %p160
    %p162 = scmp.ne.s32.totalorder %s148, %s149
    %p163 = scmp.eq.s32.totalorder %s17, 3
    %p164 = por %p162, %p163
    %p166 = scmp.ne.s32.totalorder %s149, %s165
    %p167 = scmp.eq.s32.totalorder %s17, 0
    %p168 = por %p166, %p167
    %p169 = scmp.le.s32.totalorder 1, %s11
    %p170 = scmp.lt.s32.totalorder %s11, 5
    %p171 = pnand %p169, %p170
    %p172 = pneg %p171
    // Predicated region
    $region9: #{tpu_custom_call.1} parent=5 // pred_check
      _
    $region10: #{tpu_custom_call.1} parent=5 // pred_check_branch
      %174 = sbr.rel (%p171) target = $region12
    $region11: #{tpu_custom_call.1} parent=5 // pred_region
      %s175 = ssub.s32 %s11, 1
      // Predicated region
      $region13: #{tpu_custom_call.1} parent=11 // pred_check
        %p176 = pneg %p70
      $region14: #{tpu_custom_call.1} parent=11 // pred_check_branch
        %178 = sbr.rel (%p176) target = $region16
      $region15: #{tpu_custom_call.1} parent=11 // pred_region
        _
      $region16: #{tpu_custom_call.1} parent=11 // pred_fallthru
        _
      // Predicated region
      $region17: #{tpu_custom_call.1} parent=11 // pred_check
        %p179 = pneg %p91
      $region18: #{tpu_custom_call.1} parent=11 // pred_check_branch
        %181 = sbr.rel (%p179) target = $region20
      $region19: #{tpu_custom_call.1} parent=11 // pred_region
        _
      $region20: #{tpu_custom_call.1} parent=11 // pred_fallthru
        _
      // Predicated region
      $region21: #{tpu_custom_call.1} parent=11 // pred_check
        %p182 = pneg %p112
      $region22: #{tpu_custom_call.1} parent=11 // pred_check_branch
        %184 = sbr.rel (%p182) target = $region24
      $region23: #{tpu_custom_call.1} parent=11 // pred_region
        _
      $region24: #{tpu_custom_call.1} parent=11 // pred_fallthru
        _
      // Predicated region
      $region25: #{tpu_custom_call.1} parent=11 // pred_check
        %p185 = pneg %p133
      $region26: #{tpu_custom_call.1} parent=11 // pred_check_branch
        %187 = sbr.rel (%p185) target = $region28
      $region27: #{tpu_custom_call.1} parent=11 // pred_region
        _
      $region28: #{tpu_custom_call.1} parent=11 // pred_fallthru
        _
    $region12: #{tpu_custom_call.1} parent=5 // pred_fallthru
      _
    %p188 = scmp.lt.s32.totalorder %s11, 4
    // Predicated region
    $region29: #{tpu_custom_call.1} parent=5 // pred_check
      %p189 = pneg %p188
    $region30: #{tpu_custom_call.1} parent=5 // pred_check_branch
      %191 = sbr.rel (%p189) target = $region32
    $region31: #{tpu_custom_call.1} parent=5 // pred_region
      // Predicated region
      $region33: #{tpu_custom_call.1} parent=31 // pred_check
        %p192 = pneg %p43
      $region34: #{tpu_custom_call.1} parent=31 // pred_check_branch
        %194 = sbr.rel (%p192) target = $region36
      $region35: #{tpu_custom_call.1} parent=31 // pred_region
        %p195 = scmp.lt.s32.totalorder %s18, 1
        %s196 = scalar_select %p195, %s18, 1
        %s197 = smul.addr %s196, 128
        %s198 = smul.addr %s197, 4
        %s199 = scalar_lea.vmem %s0, %s198
      $region36: #{tpu_custom_call.1} parent=31 // pred_fallthru
        _
    $region32: #{tpu_custom_call.1} parent=5 // pred_fallthru
      _
    %p200 = scmp.le.s32.totalorder 1, %s11
    %p201 = scmp.lt.s32.totalorder %s11, 5
    %p202 = pnand %p200, %p201
    %p203 = pneg %p202
    // Predicated region
    $region37: #{tpu_custom_call.1} parent=5 // pred_check
      _
    $region38: #{tpu_custom_call.1} parent=5 // pred_check_branch
      %205 = sbr.rel (%p202) target = $region40
    $region39: #{tpu_custom_call.1} parent=5 // pred_region
      %s206 = ssub.s32 %s11, 1
      %p207 = scmp.lt.s32.totalorder %s20, 1
      %s208 = scalar_select %p207, %s20, 1
      %s209 = smul.addr %s208, 128
      %s210 = smul.addr %s209, 4
      %s211 = scalar_lea.vmem %s0, %s210
      %p212 = pneg %p49
      %p213 = pneg %p46
      %p214 = pneg %p70
      %p215 = pneg %p67
      %p216 = pneg %p91
      %p217 = pneg %p88
      %p218 = pneg %p112
      %p219 = pneg %p109
      %p220 = pneg %p133
      %p221 = pneg %p130
      %p222 = pneg %p161
      %p223 = pneg %p158
      %s224 = smul.u32 64, %s21
      %p225 = scmp.lt.s32.totalorder %s20, 1
      %s226 = scalar_select %p225, %s20, 1
      %p227 = scmp.lt.s32.totalorder %s224, 127
      %s228 = scalar_select %p227, %s224, 127
      %s229 = smul.addr %s226, 128
      %s230 = sadd.s32 %s228, %s229
      %s231 = smul.addr %s230, 4
      %s232 = scalar_lea.vmem %s5, %s231
      %p233 = scmp.lt.s32.totalorder %s20, 1
      %s234 = scalar_select %p233, %s20, 1
      %s235 = smul.addr %s234, 128
      %s236 = smul.addr %s235, 4
      %s237 = scalar_lea.vmem %s0, %s236
      %s238 = smul.u32 64, %s21
      %p239 = scmp.lt.s32.totalorder %s20, 1
      %s240 = scalar_select %p239, %s20, 1
      %p241 = scmp.lt.s32.totalorder %s238, 127
      %s242 = scalar_select %p241, %s238, 127
      %s243 = smul.addr %s240, 128
      %s244 = sadd.s32 %s242, %s243
      %s245 = smul.addr %s244, 4
      %s246 = scalar_lea.vmem %s5, %s245
      %s247 = smul.u32 64, %s21
      %p249 = scmp.eq.s32.totalorder %s21, 0
      // Predicated region
      $region41: #{tpu_custom_call.1} parent=39 // pred_check
        %p250 = pneg %p249
      $region42: #{tpu_custom_call.1} parent=39 // pred_check_branch
        %252 = sbr.rel (%p250) target = $region44
      $region43: #{tpu_custom_call.1} parent=39 // pred_region
        %vm253 = vcmask 19456
        %254 = vst.msk [vmem:[#allocation2] sm:$0xf] %vm253, 0
        %255 = vst.msk [vmem:[#allocation2 + $0x4] sm:$0xf] %vm253, 0
        %256 = vst.msk [vmem:[#allocation2 + $0x8] sm:$0xf] %vm253, 0
        %257 = vst.msk [vmem:[#allocation2 + $0xc] sm:$0xf] %vm253, 0
        %vm258 = vcmask 17408
        %259 = vst.msk [vmem:[#allocation2 + $0x10] sm:$0x3] %vm258, 0
        %260 = vst.msk [vmem:[#allocation2 + $0x14] sm:$0xf] %vm253, 0
        %261 = vst.msk [vmem:[#allocation2 + $0x18] sm:$0xf] %vm253, 0
        %262 = vst.msk [vmem:[#allocation2 + $0x1c] sm:$0xf] %vm253, 0
        %263 = vst.msk [vmem:[#allocation2 + $0x20] sm:$0xf] %vm253, 0
        %264 = vst.msk [vmem:[#allocation2 + $0x24] sm:$0x3] %vm258, 0
        %265 = vst.msk [vmem:[#allocation2 + $0x28] sm:$0xf] %vm253, 0
        %266 = vst.msk [vmem:[#allocation2 + $0x2c] sm:$0xf] %vm253, 0
        %267 = vst.msk [vmem:[#allocation2 + $0x30] sm:$0xf] %vm253, 0
        %268 = vst.msk [vmem:[#allocation2 + $0x34] sm:$0xf] %vm253, 0
        %269 = vst.msk [vmem:[#allocation2 + $0x38] sm:$0x3] %vm258, 0
        %270 = vst.msk [vmem:[#allocation2 + $0x3c] sm:$0xf] %vm253, 0
        %271 = vst.msk [vmem:[#allocation2 + $0x40] sm:$0xf] %vm253, 0
        %272 = vst.msk [vmem:[#allocation2 + $0x44] sm:$0xf] %vm253, 0
        %273 = vst.msk [vmem:[#allocation2 + $0x48] sm:$0xf] %vm253, 0
        %274 = vst.msk [vmem:[#allocation2 + $0x4c] sm:$0x3] %vm258, 0
        %275 = vst.msk [vmem:[#allocation2 + $0x50] sm:$0xf] %vm253, 0
        %276 = vst.msk [vmem:[#allocation2 + $0x54] sm:$0xf] %vm253, 0
        %277 = vst.msk [vmem:[#allocation2 + $0x58] sm:$0xf] %vm253, 0
        %278 = vst.msk [vmem:[#allocation2 + $0x5c] sm:$0xf] %vm253, 0
        %279 = vst.msk [vmem:[#allocation2 + $0x60] sm:$0x3] %vm258, 0
        %280 = vst.msk [vmem:[#allocation2 + $0x64] sm:$0xf] %vm253, 0
        %281 = vst.msk [vmem:[#allocation2 + $0x68] sm:$0xf] %vm253, 0
        %282 = vst.msk [vmem:[#allocation2 + $0x6c] sm:$0xf] %vm253, 0
        %283 = vst.msk [vmem:[#allocation2 + $0x70] sm:$0xf] %vm253, 0
        %284 = vst.msk [vmem:[#allocation2 + $0x74] sm:$0x3] %vm258, 0
        %285 = vst.msk [vmem:[#allocation2 + $0x78] sm:$0xf] %vm253, 0
        %286 = vst.msk [vmem:[#allocation2 + $0x7c] sm:$0xf] %vm253, 0
        %287 = vst.msk [vmem:[#allocation2 + $0x80] sm:$0xf] %vm253, 0
        %288 = vst.msk [vmem:[#allocation2 + $0x84] sm:$0xf] %vm253, 0
        %289 = vst.msk [vmem:[#allocation2 + $0x88] sm:$0x3] %vm258, 0
        %290 = vst.msk [vmem:[#allocation2 + $0x8c] sm:$0xf] %vm253, 0
        %291 = vst.msk [vmem:[#allocation2 + $0x90] sm:$0xf] %vm253, 0
        %292 = vst.msk [vmem:[#allocation2 + $0x94] sm:$0xf] %vm253, 0
        %293 = vst.msk [vmem:[#allocation2 + $0x98] sm:$0xf] %vm253, 0
        %294 = vst.msk [vmem:[#allocation2 + $0x9c] sm:$0x3] %vm258, 0
        %295 = vst.msk [vmem:[#allocation2 + $0xa0] sm:$0xf] %vm253, 0
        %296 = vst.msk [vmem:[#allocation2 + $0xa4] sm:$0xf] %vm253, 0
        %297 = vst.msk [vmem:[#allocation2 + $0xa8] sm:$0xf] %vm253, 0
        %298 = vst.msk [vmem:[#allocation2 + $0xac] sm:$0xf] %vm253, 0
        %299 = vst.msk [vmem:[#allocation2 + $0xb0] sm:$0x3] %vm258, 0
        %300 = vst.msk [vmem:[#allocation2 + $0xb4] sm:$0xf] %vm253, 0
        %301 = vst.msk [vmem:[#allocation2 + $0xb8] sm:$0xf] %vm253, 0
        %302 = vst.msk [vmem:[#allocation2 + $0xbc] sm:$0xf] %vm253, 0
        %303 = vst.msk [vmem:[#allocation2 + $0xc0] sm:$0xf] %vm253, 0
        %304 = vst.msk [vmem:[#allocation2 + $0xc4] sm:$0x3] %vm258, 0
        %305 = vst.msk [vmem:[#allocation2 + $0xc8] sm:$0xf] %vm253, 0
        %306 = vst.msk [vmem:[#allocation2 + $0xcc] sm:$0xf] %vm253, 0
        %307 = vst.msk [vmem:[#allocation2 + $0xd0] sm:$0xf] %vm253, 0
        %308 = vst.msk [vmem:[#allocation2 + $0xd4] sm:$0xf] %vm253, 0
        %309 = vst.msk [vmem:[#allocation2 + $0xd8] sm:$0x3] %vm258, 0
        %310 = vst.msk [vmem:[#allocation2 + $0xdc] sm:$0xf] %vm253, 0
        %311 = vst.msk [vmem:[#allocation2 + $0xe0] sm:$0xf] %vm253, 0
        %312 = vst.msk [vmem:[#allocation2 + $0xe4] sm:$0xf] %vm253, 0
        %313 = vst.msk [vmem:[#allocation2 + $0xe8] sm:$0xf] %vm253, 0
        %314 = vst.msk [vmem:[#allocation2 + $0xec] sm:$0x3] %vm258, 0
        %315 = vst.msk [vmem:[#allocation2 + $0xf0] sm:$0xf] %vm253, 0
        %316 = vst.msk [vmem:[#allocation2 + $0xf4] sm:$0xf] %vm253, 0
        %317 = vst.msk [vmem:[#allocation2 + $0xf8] sm:$0xf] %vm253, 0
        %318 = vst.msk [vmem:[#allocation2 + $0xfc] sm:$0xf] %vm253, 0
        %319 = vst.msk [vmem:[#allocation2 + $0x100] sm:$0x3] %vm258, 0
        %320 = vst.msk [vmem:[#allocation2 + $0x104] sm:$0xf] %vm253, 0
        %321 = vst.msk [vmem:[#allocation2 + $0x108] sm:$0xf] %vm253, 0
        %322 = vst.msk [vmem:[#allocation2 + $0x10c] sm:$0xf] %vm253, 0
        %323 = vst.msk [vmem:[#allocation2 + $0x110] sm:$0xf] %vm253, 0
        %324 = vst.msk [vmem:[#allocation2 + $0x114] sm:$0x3] %vm258, 0
        %325 = vst.msk [vmem:[#allocation2 + $0x118] sm:$0xf] %vm253, 0
        %326 = vst.msk [vmem:[#allocation2 + $0x11c] sm:$0xf] %vm253, 0
        %327 = vst.msk [vmem:[#allocation2 + $0x120] sm:$0xf] %vm253, 0
        %328 = vst.msk [vmem:[#allocation2 + $0x124] sm:$0xf] %vm253, 0
        %329 = vst.msk [vmem:[#allocation2 + $0x128] sm:$0x3] %vm258, 0
        %330 = vst.msk [vmem:[#allocation2 + $0x12c] sm:$0xf] %vm253, 0
        %331 = vst.msk [vmem:[#allocation2 + $0x130] sm:$0xf] %vm253, 0
        %332 = vst.msk [vmem:[#allocation2 + $0x134] sm:$0xf] %vm253, 0
        %333 = vst.msk [vmem:[#allocation2 + $0x138] sm:$0xf] %vm253, 0
        %334 = vst.msk [vmem:[#allocation2 + $0x13c] sm:$0x3] %vm258, 0
        %335 = vst.msk [vmem:[#allocation2 + $0x140] sm:$0xf] %vm253, 0
        %336 = vst.msk [vmem:[#allocation2 + $0x144] sm:$0xf] %vm253, 0
        %337 = vst.msk [vmem:[#allocation2 + $0x148] sm:$0xf] %vm253, 0
        %338 = vst.msk [vmem:[#allocation2 + $0x14c] sm:$0xf] %vm253, 0
        %339 = vst.msk [vmem:[#allocation2 + $0x150] sm:$0x3] %vm258, 0
        %340 = vst.msk [vmem:[#allocation2 + $0x154] sm:$0xf] %vm253, 0
        %341 = vst.msk [vmem:[#allocation2 + $0x158] sm:$0xf] %vm253, 0
        %342 = vst.msk [vmem:[#allocation2 + $0x15c] sm:$0xf] %vm253, 0
        %343 = vst.msk [vmem:[#allocation2 + $0x160] sm:$0xf] %vm253, 0
        %344 = vst.msk [vmem:[#allocation2 + $0x164] sm:$0x3] %vm258, 0
        %345 = vst.msk [vmem:[#allocation2 + $0x168] sm:$0xf] %vm253, 0
        %346 = vst.msk [vmem:[#allocation2 + $0x16c] sm:$0xf] %vm253, 0
        %347 = vst.msk [vmem:[#allocation2 + $0x170] sm:$0xf] %vm253, 0
        %348 = vst.msk [vmem:[#allocation2 + $0x174] sm:$0xf] %vm253, 0
        %349 = vst.msk [vmem:[#allocation2 + $0x178] sm:$0x3] %vm258, 0
        %350 = vst.msk [vmem:[#allocation2 + $0x17c] sm:$0xf] %vm253, 0
        %351 = vst.msk [vmem:[#allocation2 + $0x180] sm:$0xf] %vm253, 0
        %352 = vst.msk [vmem:[#allocation2 + $0x184] sm:$0xf] %vm253, 0
        %353 = vst.msk [vmem:[#allocation2 + $0x188] sm:$0xf] %vm253, 0
        %354 = vst.msk [vmem:[#allocation2 + $0x18c] sm:$0x3] %vm258, 0
        %355 = vst.msk [vmem:[#allocation2 + $0x190] sm:$0xf] %vm253, 0
        %356 = vst.msk [vmem:[#allocation2 + $0x194] sm:$0xf] %vm253, 0
        %357 = vst.msk [vmem:[#allocation2 + $0x198] sm:$0xf] %vm253, 0
        %358 = vst.msk [vmem:[#allocation2 + $0x19c] sm:$0xf] %vm253, 0
        %359 = vst.msk [vmem:[#allocation2 + $0x1a0] sm:$0x3] %vm258, 0
        %360 = vst.msk [vmem:[#allocation2 + $0x1a4] sm:$0xf] %vm253, 0
        %361 = vst.msk [vmem:[#allocation2 + $0x1a8] sm:$0xf] %vm253, 0
        %362 = vst.msk [vmem:[#allocation2 + $0x1ac] sm:$0xf] %vm253, 0
        %363 = vst.msk [vmem:[#allocation2 + $0x1b0] sm:$0xf] %vm253, 0
        %364 = vst.msk [vmem:[#allocation2 + $0x1b4] sm:$0x3] %vm258, 0
        %365 = vst.msk [vmem:[#allocation2 + $0x1b8] sm:$0xf] %vm253, 0
        %366 = vst.msk [vmem:[#allocation2 + $0x1bc] sm:$0xf] %vm253, 0
        %367 = vst.msk [vmem:[#allocation2 + $0x1c0] sm:$0xf] %vm253, 0
        %368 = vst.msk [vmem:[#allocation2 + $0x1c4] sm:$0xf] %vm253, 0
        %369 = vst.msk [vmem:[#allocation2 + $0x1c8] sm:$0x3] %vm258, 0
        %370 = vst.msk [vmem:[#allocation2 + $0x1cc] sm:$0xf] %vm253, 0
        %371 = vst.msk [vmem:[#allocation2 + $0x1d0] sm:$0xf] %vm253, 0
        %372 = vst.msk [vmem:[#allocation2 + $0x1d4] sm:$0xf] %vm253, 0
        %373 = vst.msk [vmem:[#allocation2 + $0x1d8] sm:$0xf] %vm253, 0
        %374 = vst.msk [vmem:[#allocation2 + $0x1dc] sm:$0x3] %vm258, 0
        %375 = vst.msk [vmem:[#allocation2 + $0x1e0] sm:$0xf] %vm253, 0
        %376 = vst.msk [vmem:[#allocation2 + $0x1e4] sm:$0xf] %vm253, 0
        %377 = vst.msk [vmem:[#allocation2 + $0x1e8] sm:$0xf] %vm253, 0
        %378 = vst.msk [vmem:[#allocation2 + $0x1ec] sm:$0xf] %vm253, 0
        %379 = vst.msk [vmem:[#allocation2 + $0x1f0] sm:$0x3] %vm258, 0
        %380 = vst.msk [vmem:[#allocation2 + $0x1f4] sm:$0xf] %vm253, 0
        %381 = vst.msk [vmem:[#allocation2 + $0x1f8] sm:$0xf] %vm253, 0
        %382 = vst.msk [vmem:[#allocation2 + $0x1fc] sm:$0xf] %vm253, 0
        %383 = vst.msk [vmem:[#allocation2 + $0x200] sm:$0xf] %vm253, 0
        %384 = vst.msk [vmem:[#allocation2 + $0x204] sm:$0x3] %vm258, 0
        %385 = vst.msk [vmem:[#allocation2 + $0x208] sm:$0xf] %vm253, 0
        %386 = vst.msk [vmem:[#allocation2 + $0x20c] sm:$0xf] %vm253, 0
        %387 = vst.msk [vmem:[#allocation2 + $0x210] sm:$0xf] %vm253, 0
        %388 = vst.msk [vmem:[#allocation2 + $0x214] sm:$0xf] %vm253, 0
        %389 = vst.msk [vmem:[#allocation2 + $0x218] sm:$0x3] %vm258, 0
        %390 = vst.msk [vmem:[#allocation2 + $0x21c] sm:$0xf] %vm253, 0
        %391 = vst.msk [vmem:[#allocation2 + $0x220] sm:$0xf] %vm253, 0
        %392 = vst.msk [vmem:[#allocation2 + $0x224] sm:$0xf] %vm253, 0
        %393 = vst.msk [vmem:[#allocation2 + $0x228] sm:$0xf] %vm253, 0
        %394 = vst.msk [vmem:[#allocation2 + $0x22c] sm:$0x3] %vm258, 0
        %395 = vst.msk [vmem:[#allocation2 + $0x230] sm:$0xf] %vm253, 0
        %396 = vst.msk [vmem:[#allocation2 + $0x234] sm:$0xf] %vm253, 0
        %397 = vst.msk [vmem:[#allocation2 + $0x238] sm:$0xf] %vm253, 0
        %398 = vst.msk [vmem:[#allocation2 + $0x23c] sm:$0xf] %vm253, 0
        %399 = vst.msk [vmem:[#allocation2 + $0x240] sm:$0x3] %vm258, 0
        %400 = vst.msk [vmem:[#allocation2 + $0x244] sm:$0xf] %vm253, 0
        %401 = vst.msk [vmem:[#allocation2 + $0x248] sm:$0xf] %vm253, 0
        %402 = vst.msk [vmem:[#allocation2 + $0x24c] sm:$0xf] %vm253, 0
        %403 = vst.msk [vmem:[#allocation2 + $0x250] sm:$0xf] %vm253, 0
        %404 = vst.msk [vmem:[#allocation2 + $0x254] sm:$0x3] %vm258, 0
        %405 = vst.msk [vmem:[#allocation2 + $0x258] sm:$0xf] %vm253, 0
        %406 = vst.msk [vmem:[#allocation2 + $0x25c] sm:$0xf] %vm253, 0
        %407 = vst.msk [vmem:[#allocation2 + $0x260] sm:$0xf] %vm253, 0
        %408 = vst.msk [vmem:[#allocation2 + $0x264] sm:$0xf] %vm253, 0
        %409 = vst.msk [vmem:[#allocation2 + $0x268] sm:$0x3] %vm258, 0
        %410 = vst.msk [vmem:[#allocation2 + $0x26c] sm:$0xf] %vm253, 0
        %411 = vst.msk [vmem:[#allocation2 + $0x270] sm:$0xf] %vm253, 0
        %412 = vst.msk [vmem:[#allocation2 + $0x274] sm:$0xf] %vm253, 0
        %413 = vst.msk [vmem:[#allocation2 + $0x278] sm:$0xf] %vm253, 0
        %414 = vst.msk [vmem:[#allocation2 + $0x27c] sm:$0x3] %vm258, 0
        %415 = vst.msk [vmem:[#allocation2 + $0x280] sm:$0xf] %vm253, 0
        %416 = vst.msk [vmem:[#allocation2 + $0x284] sm:$0xf] %vm253, 0
        %417 = vst.msk [vmem:[#allocation2 + $0x288] sm:$0xf] %vm253, 0
        %418 = vst.msk [vmem:[#allocation2 + $0x28c] sm:$0xf] %vm253, 0
        %419 = vst.msk [vmem:[#allocation2 + $0x290] sm:$0x3] %vm258, 0
        %420 = vst.msk [vmem:[#allocation2 + $0x294] sm:$0xf] %vm253, 0
        %421 = vst.msk [vmem:[#allocation2 + $0x298] sm:$0xf] %vm253, 0
        %422 = vst.msk [vmem:[#allocation2 + $0x29c] sm:$0xf] %vm253, 0
        %423 = vst.msk [vmem:[#allocation2 + $0x2a0] sm:$0xf] %vm253, 0
        %424 = vst.msk [vmem:[#allocation2 + $0x2a4] sm:$0x3] %vm258, 0
        %425 = vst.msk [vmem:[#allocation2 + $0x2a8] sm:$0xf] %vm253, 0
        %426 = vst.msk [vmem:[#allocation2 + $0x2ac] sm:$0xf] %vm253, 0
        %427 = vst.msk [vmem:[#allocation2 + $0x2b0] sm:$0xf] %vm253, 0
        %428 = vst.msk [vmem:[#allocation2 + $0x2b4] sm:$0xf] %vm253, 0
        %429 = vst.msk [vmem:[#allocation2 + $0x2b8] sm:$0x3] %vm258, 0
        %430 = vst.msk [vmem:[#allocation2 + $0x2bc] sm:$0xf] %vm253, 0
        %431 = vst.msk [vmem:[#allocation2 + $0x2c0] sm:$0xf] %vm253, 0
        %432 = vst.msk [vmem:[#allocation2 + $0x2c4] sm:$0xf] %vm253, 0
        %433 = vst.msk [vmem:[#allocation2 + $0x2c8] sm:$0xf] %vm253, 0
        %434 = vst.msk [vmem:[#allocation2 + $0x2cc] sm:$0x3] %vm258, 0
        %v435 = vld [vmem:[%s237] sm:$0xf]
        %v436 = vld [vmem:[%s237 + $0x4] sm:$0xf]
        %v437 = vld [vmem:[%s237 + $0x8] sm:$0xf]
        %v438 = vld [vmem:[%s237 + $0xc] sm:$0xf]
        %v439 = vld [vmem:[%s237 + $0x10] sm:$0xf]
        %v440 = vld [vmem:[%s237 + $0x14] sm:$0xf]
        %v441 = vld [vmem:[%s237 + $0x18] sm:$0xf]
        %v442 = vld [vmem:[%s237 + $0x1c] sm:$0xf]
        %v443 = vld [vmem:[%s237 + $0x20] sm:$0xf]
        %v444 = vld [vmem:[%s237 + $0x24] sm:$0xf]
        %v445 = vld [vmem:[%s237 + $0x28] sm:$0xf]
        %v446 = vld [vmem:[%s237 + $0x2c] sm:$0xf]
        %v447 = vld [vmem:[%s237 + $0x30] sm:$0xf]
        %v448 = vld [vmem:[%s237 + $0x34] sm:$0xf]
        %v449 = vld [vmem:[%s237 + $0x38] sm:$0xf]
        %v450 = vld [vmem:[%s237 + $0x3c] sm:$0xf]
        %v451 = vld [vmem:[%s237 + $0x40] sm:$0xf]
        %v452 = vld [vmem:[%s237 + $0x44] sm:$0xf]
        %v453 = vld [vmem:[%s237 + $0x48] sm:$0xf]
        %v454 = vld [vmem:[%s237 + $0x4c] sm:$0xf]
        %v455 = vld [vmem:[%s237 + $0x50] sm:$0xf]
        %v456 = vld [vmem:[%s237 + $0x54] sm:$0xf]
        %v457 = vld [vmem:[%s237 + $0x58] sm:$0xf]
        %v458 = vld [vmem:[%s237 + $0x5c] sm:$0xf]
        %v459 = vld [vmem:[%s237 + $0x60] sm:$0xf]
        %v460 = vld [vmem:[%s237 + $0x64] sm:$0xf]
        %v461 = vld [vmem:[%s237 + $0x68] sm:$0xf]
        %v462 = vld [vmem:[%s237 + $0x6c] sm:$0xf]
        %v463 = vld [vmem:[%s237 + $0x70] sm:$0xf]
        %v464 = vld [vmem:[%s237 + $0x74] sm:$0xf]
        %v465 = vld [vmem:[%s237 + $0x78] sm:$0xf]
        %v466 = vld [vmem:[%s237 + $0x7c] sm:$0xf]
        %v467 = vld [vmem:[%s237 + $0x80] sm:$0xf]
        %v468 = vld [vmem:[%s237 + $0x84] sm:$0xf]
        %v469 = vld [vmem:[%s237 + $0x88] sm:$0xf]
        %v470 = vld [vmem:[%s237 + $0x8c] sm:$0xf]
        %v471 = vld [vmem:[%s237 + $0x90] sm:$0xf]
        %v472 = vld [vmem:[%s237 + $0x94] sm:$0xf]
        %v473 = vld [vmem:[%s237 + $0x98] sm:$0xf]
        %v474 = vld [vmem:[%s237 + $0x9c] sm:$0xf]
        %v475 = vld [vmem:[%s237 + $0xa0] sm:$0xf]
        %v476 = vld [vmem:[%s237 + $0xa4] sm:$0xf]
        %v477 = vld [vmem:[%s237 + $0xa8] sm:$0xf]
        %v478 = vld [vmem:[%s237 + $0xac] sm:$0xf]
        %v479 = vld [vmem:[%s237 + $0xb0] sm:$0xf]
        %v480 = vld [vmem:[%s237 + $0xb4] sm:$0xf]
        %v481 = vld [vmem:[%s237 + $0xb8] sm:$0xf]
        %v482 = vld [vmem:[%s237 + $0xbc] sm:$0xf]
        %v483 = vld [vmem:[%s237 + $0xc0] sm:$0xf]
        %v484 = vld [vmem:[%s237 + $0xc4] sm:$0xf]
        %v485 = vld [vmem:[%s237 + $0xc8] sm:$0xf]
        %v486 = vld [vmem:[%s237 + $0xcc] sm:$0xf]
        %v487 = vld [vmem:[%s237 + $0xd0] sm:$0xf]
        %v488 = vld [vmem:[%s237 + $0xd4] sm:$0xf]
        %v489 = vld [vmem:[%s237 + $0xd8] sm:$0xf]
        %v490 = vld [vmem:[%s237 + $0xdc] sm:$0xf]
        %v491 = vld [vmem:[%s237 + $0xe0] sm:$0xf]
        %v492 = vld [vmem:[%s237 + $0xe4] sm:$0xf]
        %v493 = vld [vmem:[%s237 + $0xe8] sm:$0xf]
        %v494 = vld [vmem:[%s237 + $0xec] sm:$0xf]
        %v495 = vld [vmem:[%s237 + $0xf0] sm:$0xf]
        %v496 = vld [vmem:[%s237 + $0xf4] sm:$0xf]
        %v497 = vld [vmem:[%s237 + $0xf8] sm:$0xf]
        %v498 = vld [vmem:[%s237 + $0xfc] sm:$0xf]
        %vm563 = vcmask 1040384
        %vm564 = vcmask 1044484
        %vm565 = vmor %vm563, %vm564
        %v566 = vrot.slane %v435, 7
        %v567 = vrot.slane %v566, 4
        %v568 = vrot.slane %v436, 7
        %v569 = vsel %vm565, %v567, %v568
        %v570 = vrot.slane %v568, 4
        %v571 = vrot.slane %v437, 7
        %v572 = vsel %vm565, %v570, %v571
        %v573 = vrot.slane %v571, 4
        %v574 = vrot.slane %v438, 7
        %v575 = vsel %vm565, %v573, %v574
        %v576 = vrot.slane %v574, 4
        %v577 = vrot.slane %v439, 7
        %v578 = vrot.slane %v577, 4
        %v579 = vrot.slane %v440, 7
        %v580 = vsel %vm565, %v578, %v579
        %v581 = vrot.slane %v579, 4
        %v582 = vrot.slane %v441, 7
        %v583 = vsel %vm565, %v581, %v582
        %v584 = vrot.slane %v582, 4
        %v585 = vrot.slane %v442, 7
        %v586 = vsel %vm565, %v584, %v585
        %v587 = vrot.slane %v585, 4
        %v588 = vrot.slane %v443, 7
        %v589 = vrot.slane %v588, 4
        %v590 = vrot.slane %v444, 7
        %v591 = vsel %vm565, %v589, %v590
        %v592 = vrot.slane %v590, 4
        %v593 = vrot.slane %v445, 7
        %v594 = vsel %vm565, %v592, %v593
        %v595 = vrot.slane %v593, 4
        %v596 = vrot.slane %v446, 7
        %v597 = vsel %vm565, %v595, %v596
        %v598 = vrot.slane %v596, 4
        %v599 = vrot.slane %v447, 7
        %v600 = vrot.slane %v599, 4
        %v601 = vrot.slane %v448, 7
        %v602 = vsel %vm565, %v600, %v601
        %v603 = vrot.slane %v601, 4
        %v604 = vrot.slane %v449, 7
        %v605 = vsel %vm565, %v603, %v604
        %v606 = vrot.slane %v604, 4
        %v607 = vrot.slane %v450, 7
        %v608 = vsel %vm565, %v606, %v607
        %v609 = vrot.slane %v607, 4
        %v610 = vrot.slane %v451, 7
        %v611 = vrot.slane %v610, 4
        %v612 = vrot.slane %v452, 7
        %v613 = vsel %vm565, %v611, %v612
        %v614 = vrot.slane %v612, 4
        %v615 = vrot.slane %v453, 7
        %v616 = vsel %vm565, %v614, %v615
        %v617 = vrot.slane %v615, 4
        %v618 = vrot.slane %v454, 7
        %v619 = vsel %vm565, %v617, %v618
        %v620 = vrot.slane %v618, 4
        %v621 = vrot.slane %v455, 7
        %v622 = vrot.slane %v621, 4
        %v623 = vrot.slane %v456, 7
        %v624 = vsel %vm565, %v622, %v623
        %v625 = vrot.slane %v623, 4
        %v626 = vrot.slane %v457, 7
        %v627 = vsel %vm565, %v625, %v626
        %v628 = vrot.slane %v626, 4
        %v629 = vrot.slane %v458, 7
        %v630 = vsel %vm565, %v628, %v629
        %v631 = vrot.slane %v629, 4
        %v632 = vrot.slane %v459, 7
        %v633 = vrot.slane %v632, 4
        %v634 = vrot.slane %v460, 7
        %v635 = vsel %vm565, %v633, %v634
        %v636 = vrot.slane %v634, 4
        %v637 = vrot.slane %v461, 7
        %v638 = vsel %vm565, %v636, %v637
        %v639 = vrot.slane %v637, 4
        %v640 = vrot.slane %v462, 7
        %v641 = vsel %vm565, %v639, %v640
        %v642 = vrot.slane %v640, 4
        %v643 = vrot.slane %v463, 7
        %v644 = vrot.slane %v643, 4
        %v645 = vrot.slane %v464, 7
        %v646 = vsel %vm565, %v644, %v645
        %v647 = vrot.slane %v645, 4
        %v648 = vrot.slane %v465, 7
        %v649 = vsel %vm565, %v647, %v648
        %v650 = vrot.slane %v648, 4
        %v651 = vrot.slane %v466, 7
        %v652 = vsel %vm565, %v650, %v651
        %v653 = vrot.slane %v651, 4
        %v654 = vrot.slane %v467, 7
        %v655 = vrot.slane %v654, 4
        %v656 = vrot.slane %v468, 7
        %v657 = vsel %vm565, %v655, %v656
        %v658 = vrot.slane %v656, 4
        %v659 = vrot.slane %v469, 7
        %v660 = vsel %vm565, %v658, %v659
        %v661 = vrot.slane %v659, 4
        %v662 = vrot.slane %v470, 7
        %v663 = vsel %vm565, %v661, %v662
        %v664 = vrot.slane %v662, 4
        %v665 = vrot.slane %v471, 7
        %v666 = vrot.slane %v665, 4
        %v667 = vrot.slane %v472, 7
        %v668 = vsel %vm565, %v666, %v667
        %v669 = vrot.slane %v667, 4
        %v670 = vrot.slane %v473, 7
        %v671 = vsel %vm565, %v669, %v670
        %v672 = vrot.slane %v670, 4
        %v673 = vrot.slane %v474, 7
        %v674 = vsel %vm565, %v672, %v673
        %v675 = vrot.slane %v673, 4
        %v676 = vrot.slane %v475, 7
        %v677 = vrot.slane %v676, 4
        %v678 = vrot.slane %v476, 7
        %v679 = vsel %vm565, %v677, %v678
        %v680 = vrot.slane %v678, 4
        %v681 = vrot.slane %v477, 7
        %v682 = vsel %vm565, %v680, %v681
        %v683 = vrot.slane %v681, 4
        %v684 = vrot.slane %v478, 7
        %v685 = vsel %vm565, %v683, %v684
        %v686 = vrot.slane %v684, 4
        %v687 = vrot.slane %v479, 7
        %v688 = vrot.slane %v687, 4
        %v689 = vrot.slane %v480, 7
        %v690 = vsel %vm565, %v688, %v689
        %v691 = vrot.slane %v689, 4
        %v692 = vrot.slane %v481, 7
        %v693 = vsel %vm565, %v691, %v692
        %v694 = vrot.slane %v692, 4
        %v695 = vrot.slane %v482, 7
        %v696 = vsel %vm565, %v694, %v695
        %v697 = vrot.slane %v695, 4
        %v698 = vrot.slane %v483, 7
        %v699 = vrot.slane %v698, 4
        %v700 = vrot.slane %v484, 7
        %v701 = vsel %vm565, %v699, %v700
        %v702 = vrot.slane %v700, 4
        %v703 = vrot.slane %v485, 7
        %v704 = vsel %vm565, %v702, %v703
        %v705 = vrot.slane %v703, 4
        %v706 = vrot.slane %v486, 7
        %v707 = vsel %vm565, %v705, %v706
        %v708 = vrot.slane %v706, 4
        %v709 = vrot.slane %v487, 7
        %v710 = vrot.slane %v709, 4
        %v711 = vrot.slane %v488, 7
        %v712 = vsel %vm565, %v710, %v711
        %v713 = vrot.slane %v711, 4
        %v714 = vrot.slane %v489, 7
        %v715 = vsel %vm565, %v713, %v714
        %v716 = vrot.slane %v714, 4
        %v717 = vrot.slane %v490, 7
        %v718 = vsel %vm565, %v716, %v717
        %v719 = vrot.slane %v717, 4
        %v720 = vrot.slane %v491, 7
        %v721 = vrot.slane %v720, 4
        %v722 = vrot.slane %v492, 7
        %v723 = vsel %vm565, %v721, %v722
        %v724 = vrot.slane %v722, 4
        %v725 = vrot.slane %v493, 7
        %v726 = vsel %vm565, %v724, %v725
        %v727 = vrot.slane %v725, 4
        %v728 = vrot.slane %v494, 7
        %v729 = vsel %vm565, %v727, %v728
        %v730 = vrot.slane %v728, 4
        %v731 = vrot.slane %v495, 7
        %v732 = vrot.slane %v731, 4
        %v733 = vrot.slane %v496, 7
        %v734 = vsel %vm565, %v732, %v733
        %v735 = vrot.slane %v733, 4
        %v736 = vrot.slane %v497, 7
        %v737 = vsel %vm565, %v735, %v736
        %v738 = vrot.slane %v736, 4
        %v739 = vrot.slane %v498, 7
        %v740 = vsel %vm565, %v738, %v739
        %v741 = vrot.slane %v739, 4
        %s822 = scalar_lea.vmem [#allocation2], 40
        %vm823 = vcmask 19457
        %824 = vst.msk [vmem:[%s822] sm:$0xe] %vm823, %v566
        %825 = vst.msk [vmem:[%s822 + $0x4] sm:$0xf] %vm253, %v569
        %826 = vst.msk [vmem:[%s822 + $0x8] sm:$0xf] %vm253, %v572
        %827 = vst.msk [vmem:[%s822 + $0xc] sm:$0xf] %vm253, %v575
        %vm828 = vcmask 16384
        %829 = vst.msk [vmem:[%s822 + $0x10] sm:$0x1] %vm828, %v576
        %830 = vst.msk [vmem:[%s822 + $0x14] sm:$0xe] %vm823, %v577
        %831 = vst.msk [vmem:[%s822 + $0x18] sm:$0xf] %vm253, %v580
        %832 = vst.msk [vmem:[%s822 + $0x1c] sm:$0xf] %vm253, %v583
        %833 = vst.msk [vmem:[%s822 + $0x20] sm:$0xf] %vm253, %v586
        %834 = vst.msk [vmem:[%s822 + $0x24] sm:$0x1] %vm828, %v587
        %835 = vst.msk [vmem:[%s822 + $0x28] sm:$0xe] %vm823, %v588
        %836 = vst.msk [vmem:[%s822 + $0x2c] sm:$0xf] %vm253, %v591
        %837 = vst.msk [vmem:[%s822 + $0x30] sm:$0xf] %vm253, %v594
        %838 = vst.msk [vmem:[%s822 + $0x34] sm:$0xf] %vm253, %v597
        %839 = vst.msk [vmem:[%s822 + $0x38] sm:$0x1] %vm828, %v598
        %840 = vst.msk [vmem:[%s822 + $0x3c] sm:$0xe] %vm823, %v599
        %841 = vst.msk [vmem:[%s822 + $0x40] sm:$0xf] %vm253, %v602
        %842 = vst.msk [vmem:[%s822 + $0x44] sm:$0xf] %vm253, %v605
        %843 = vst.msk [vmem:[%s822 + $0x48] sm:$0xf] %vm253, %v608
        %844 = vst.msk [vmem:[%s822 + $0x4c] sm:$0x1] %vm828, %v609
        %845 = vst.msk [vmem:[%s822 + $0x50] sm:$0xe] %vm823, %v610
        %846 = vst.msk [vmem:[%s822 + $0x54] sm:$0xf] %vm253, %v613
        %847 = vst.msk [vmem:[%s822 + $0x58] sm:$0xf] %vm253, %v616
        %848 = vst.msk [vmem:[%s822 + $0x5c] sm:$0xf] %vm253, %v619
        %849 = vst.msk [vmem:[%s822 + $0x60] sm:$0x1] %vm828, %v620
        %850 = vst.msk [vmem:[%s822 + $0x64] sm:$0xe] %vm823, %v621
        %851 = vst.msk [vmem:[%s822 + $0x68] sm:$0xf] %vm253, %v624
        %852 = vst.msk [vmem:[%s822 + $0x6c] sm:$0xf] %vm253, %v627
        %853 = vst.msk [vmem:[%s822 + $0x70] sm:$0xf] %vm253, %v630
        %854 = vst.msk [vmem:[%s822 + $0x74] sm:$0x1] %vm828, %v631
        %855 = vst.msk [vmem:[%s822 + $0x78] sm:$0xe] %vm823, %v632
        %856 = vst.msk [vmem:[%s822 + $0x7c] sm:$0xf] %vm253, %v635
        %857 = vst.msk [vmem:[%s822 + $0x80] sm:$0xf] %vm253, %v638
        %858 = vst.msk [vmem:[%s822 + $0x84] sm:$0xf] %vm253, %v641
        %859 = vst.msk [vmem:[%s822 + $0x88] sm:$0x1] %vm828, %v642
        %860 = vst.msk [vmem:[%s822 + $0x8c] sm:$0xe] %vm823, %v643
        %861 = vst.msk [vmem:[%s822 + $0x90] sm:$0xf] %vm253, %v646
        %862 = vst.msk [vmem:[%s822 + $0x94] sm:$0xf] %vm253, %v649
        %863 = vst.msk [vmem:[%s822 + $0x98] sm:$0xf] %vm253, %v652
        %864 = vst.msk [vmem:[%s822 + $0x9c] sm:$0x1] %vm828, %v653
        %865 = vst.msk [vmem:[%s822 + $0xa0] sm:$0xe] %vm823, %v654
        %866 = vst.msk [vmem:[%s822 + $0xa4] sm:$0xf] %vm253, %v657
        %867 = vst.msk [vmem:[%s822 + $0xa8] sm:$0xf] %vm253, %v660
        %868 = vst.msk [vmem:[%s822 + $0xac] sm:$0xf] %vm253, %v663
        %869 = vst.msk [vmem:[%s822 + $0xb0] sm:$0x1] %vm828, %v664
        %870 = vst.msk [vmem:[%s822 + $0xb4] sm:$0xe] %vm823, %v665
        %871 = vst.msk [vmem:[%s822 + $0xb8] sm:$0xf] %vm253, %v668
        %872 = vst.msk [vmem:[%s822 + $0xbc] sm:$0xf] %vm253, %v671
        %873 = vst.msk [vmem:[%s822 + $0xc0] sm:$0xf] %vm253, %v674
        %874 = vst.msk [vmem:[%s822 + $0xc4] sm:$0x1] %vm828, %v675
        %875 = vst.msk [vmem:[%s822 + $0xc8] sm:$0xe] %vm823, %v676
        %876 = vst.msk [vmem:[%s822 + $0xcc] sm:$0xf] %vm253, %v679
        %877 = vst.msk [vmem:[%s822 + $0xd0] sm:$0xf] %vm253, %v682
        %878 = vst.msk [vmem:[%s822 + $0xd4] sm:$0xf] %vm253, %v685
        %879 = vst.msk [vmem:[%s822 + $0xd8] sm:$0x1] %vm828, %v686
        %880 = vst.msk [vmem:[%s822 + $0xdc] sm:$0xe] %vm823, %v687
        %881 = vst.msk [vmem:[%s822 + $0xe0] sm:$0xf] %vm253, %v690
        %882 = vst.msk [vmem:[%s822 + $0xe4] sm:$0xf] %vm253, %v693
        %883 = vst.msk [vmem:[%s822 + $0xe8] sm:$0xf] %vm253, %v696
        %884 = vst.msk [vmem:[%s822 + $0xec] sm:$0x1] %vm828, %v697
        %885 = vst.msk [vmem:[%s822 + $0xf0] sm:$0xe] %vm823, %v698
        %886 = vst.msk [vmem:[%s822 + $0xf4] sm:$0xf] %vm253, %v701
        %887 = vst.msk [vmem:[%s822 + $0xf8] sm:$0xf] %vm253, %v704
        %888 = vst.msk [vmem:[%s822 + $0xfc] sm:$0xf] %vm253, %v707
        %889 = vst.msk [vmem:[%s822 + $0x100] sm:$0x1] %vm828, %v708
        %890 = vst.msk [vmem:[%s822 + $0x104] sm:$0xe] %vm823, %v709
        %891 = vst.msk [vmem:[%s822 + $0x108] sm:$0xf] %vm253, %v712
        %892 = vst.msk [vmem:[%s822 + $0x10c] sm:$0xf] %vm253, %v715
        %893 = vst.msk [vmem:[%s822 + $0x110] sm:$0xf] %vm253, %v718
        %894 = vst.msk [vmem:[%s822 + $0x114] sm:$0x1] %vm828, %v719
        %895 = vst.msk [vmem:[%s822 + $0x118] sm:$0xe] %vm823, %v720
        %896 = vst.msk [vmem:[%s822 + $0x11c] sm:$0xf] %vm253, %v723
        %897 = vst.msk [vmem:[%s822 + $0x120] sm:$0xf] %vm253, %v726
        %898 = vst.msk [vmem:[%s822 + $0x124] sm:$0xf] %vm253, %v729
        %899 = vst.msk [vmem:[%s822 + $0x128] sm:$0x1] %vm828, %v730
        %900 = vst.msk [vmem:[%s822 + $0x12c] sm:$0xe] %vm823, %v731
        %901 = vst.msk [vmem:[%s822 + $0x130] sm:$0xf] %vm253, %v734
        %902 = vst.msk [vmem:[%s822 + $0x134] sm:$0xf] %vm253, %v737
        %903 = vst.msk [vmem:[%s822 + $0x138] sm:$0xf] %vm253, %v740
        %904 = vst.msk [vmem:[%s822 + $0x13c] sm:$0x1] %vm828, %v741
        %s905 = scalar_lea.vmem %s237, 256
        %v906 = vld [vmem:[%s905] sm:$0xf]
        %v907 = vld [vmem:[%s905 + $0x4] sm:$0xf]
        %v908 = vld [vmem:[%s905 + $0x8] sm:$0xf]
        %v909 = vld [vmem:[%s905 + $0xc] sm:$0xf]
        %v910 = vld [vmem:[%s905 + $0x10] sm:$0xf]
        %v911 = vld [vmem:[%s905 + $0x14] sm:$0xf]
        %v912 = vld [vmem:[%s905 + $0x18] sm:$0xf]
        %v913 = vld [vmem:[%s905 + $0x1c] sm:$0xf]
        %v914 = vld [vmem:[%s905 + $0x20] sm:$0xf]
        %v915 = vld [vmem:[%s905 + $0x24] sm:$0xf]
        %v916 = vld [vmem:[%s905 + $0x28] sm:$0xf]
        %v917 = vld [vmem:[%s905 + $0x2c] sm:$0xf]
        %v918 = vld [vmem:[%s905 + $0x30] sm:$0xf]
        %v919 = vld [vmem:[%s905 + $0x34] sm:$0xf]
        %v920 = vld [vmem:[%s905 + $0x38] sm:$0xf]
        %v921 = vld [vmem:[%s905 + $0x3c] sm:$0xf]
        %v922 = vld [vmem:[%s905 + $0x40] sm:$0xf]
        %v923 = vld [vmem:[%s905 + $0x44] sm:$0xf]
        %v924 = vld [vmem:[%s905 + $0x48] sm:$0xf]
        %v925 = vld [vmem:[%s905 + $0x4c] sm:$0xf]
        %v926 = vld [vmem:[%s905 + $0x50] sm:$0xf]
        %v927 = vld [vmem:[%s905 + $0x54] sm:$0xf]
        %v928 = vld [vmem:[%s905 + $0x58] sm:$0xf]
        %v929 = vld [vmem:[%s905 + $0x5c] sm:$0xf]
        %v930 = vld [vmem:[%s905 + $0x60] sm:$0xf]
        %v931 = vld [vmem:[%s905 + $0x64] sm:$0xf]
        %v932 = vld [vmem:[%s905 + $0x68] sm:$0xf]
        %v933 = vld [vmem:[%s905 + $0x6c] sm:$0xf]
        %v934 = vld [vmem:[%s905 + $0x70] sm:$0xf]
        %v935 = vld [vmem:[%s905 + $0x74] sm:$0xf]
        %v936 = vld [vmem:[%s905 + $0x78] sm:$0xf]
        %v937 = vld [vmem:[%s905 + $0x7c] sm:$0xf]
        %v938 = vld [vmem:[%s905 + $0x80] sm:$0xf]
        %v939 = vld [vmem:[%s905 + $0x84] sm:$0xf]
        %v940 = vld [vmem:[%s905 + $0x88] sm:$0xf]
        %v941 = vld [vmem:[%s905 + $0x8c] sm:$0xf]
        %v942 = vld [vmem:[%s905 + $0x90] sm:$0xf]
        %v943 = vld [vmem:[%s905 + $0x94] sm:$0xf]
        %v944 = vld [vmem:[%s905 + $0x98] sm:$0xf]
        %v945 = vld [vmem:[%s905 + $0x9c] sm:$0xf]
        %v946 = vld [vmem:[%s905 + $0xa0] sm:$0xf]
        %v947 = vld [vmem:[%s905 + $0xa4] sm:$0xf]
        %v948 = vld [vmem:[%s905 + $0xa8] sm:$0xf]
        %v949 = vld [vmem:[%s905 + $0xac] sm:$0xf]
        %v950 = vld [vmem:[%s905 + $0xb0] sm:$0xf]
        %v951 = vld [vmem:[%s905 + $0xb4] sm:$0xf]
        %v952 = vld [vmem:[%s905 + $0xb8] sm:$0xf]
        %v953 = vld [vmem:[%s905 + $0xbc] sm:$0xf]
        %v954 = vld [vmem:[%s905 + $0xc0] sm:$0xf]
        %v955 = vld [vmem:[%s905 + $0xc4] sm:$0xf]
        %v956 = vld [vmem:[%s905 + $0xc8] sm:$0xf]
        %v957 = vld [vmem:[%s905 + $0xcc] sm:$0xf]
        %v958 = vld [vmem:[%s905 + $0xd0] sm:$0xf]
        %v959 = vld [vmem:[%s905 + $0xd4] sm:$0xf]
        %v960 = vld [vmem:[%s905 + $0xd8] sm:$0xf]
        %v961 = vld [vmem:[%s905 + $0xdc] sm:$0xf]
        %v962 = vld [vmem:[%s905 + $0xe0] sm:$0xf]
        %v963 = vld [vmem:[%s905 + $0xe4] sm:$0xf]
        %v964 = vld [vmem:[%s905 + $0xe8] sm:$0xf]
        %v965 = vld [vmem:[%s905 + $0xec] sm:$0xf]
        %v966 = vld [vmem:[%s905 + $0xf0] sm:$0xf]
        %v967 = vld [vmem:[%s905 + $0xf4] sm:$0xf]
        %v968 = vld [vmem:[%s905 + $0xf8] sm:$0xf]
        %v969 = vld [vmem:[%s905 + $0xfc] sm:$0xf]
        %v1034 = vrot.slane %v906, 7
        %v1035 = vrot.slane %v1034, 4
        %v1036 = vrot.slane %v907, 7
        %v1037 = vsel %vm565, %v1035, %v1036
        %v1038 = vrot.slane %v1036, 4
        %v1039 = vrot.slane %v908, 7
        %v1040 = vsel %vm565, %v1038, %v1039
        %v1041 = vrot.slane %v1039, 4
        %v1042 = vrot.slane %v909, 7
        %v1043 = vsel %vm565, %v1041, %v1042
        %v1044 = vrot.slane %v1042, 4
        %v1045 = vrot.slane %v910, 7
        %v1046 = vrot.slane %v1045, 4
        %v1047 = vrot.slane %v911, 7
        %v1048 = vsel %vm565, %v1046, %v1047
        %v1049 = vrot.slane %v1047, 4
        %v1050 = vrot.slane %v912, 7
        %v1051 = vsel %vm565, %v1049, %v1050
        %v1052 = vrot.slane %v1050, 4
        %v1053 = vrot.slane %v913, 7
        %v1054 = vsel %vm565, %v1052, %v1053
        %v1055 = vrot.slane %v1053, 4
        %v1056 = vrot.slane %v914, 7
        %v1057 = vrot.slane %v1056, 4
        %v1058 = vrot.slane %v915, 7
        %v1059 = vsel %vm565, %v1057, %v1058
        %v1060 = vrot.slane %v1058, 4
        %v1061 = vrot.slane %v916, 7
        %v1062 = vsel %vm565, %v1060, %v1061
        %v1063 = vrot.slane %v1061, 4
        %v1064 = vrot.slane %v917, 7
        %v1065 = vsel %vm565, %v1063, %v1064
        %v1066 = vrot.slane %v1064, 4
        %v1067 = vrot.slane %v918, 7
        %v1068 = vrot.slane %v1067, 4
        %v1069 = vrot.slane %v919, 7
        %v1070 = vsel %vm565, %v1068, %v1069
        %v1071 = vrot.slane %v1069, 4
        %v1072 = vrot.slane %v920, 7
        %v1073 = vsel %vm565, %v1071, %v1072
        %v1074 = vrot.slane %v1072, 4
        %v1075 = vrot.slane %v921, 7
        %v1076 = vsel %vm565, %v1074, %v1075
        %v1077 = vrot.slane %v1075, 4
        %v1078 = vrot.slane %v922, 7
        %v1079 = vrot.slane %v1078, 4
        %v1080 = vrot.slane %v923, 7
        %v1081 = vsel %vm565, %v1079, %v1080
        %v1082 = vrot.slane %v1080, 4
        %v1083 = vrot.slane %v924, 7
        %v1084 = vsel %vm565, %v1082, %v1083
        %v1085 = vrot.slane %v1083, 4
        %v1086 = vrot.slane %v925, 7
        %v1087 = vsel %vm565, %v1085, %v1086
        %v1088 = vrot.slane %v1086, 4
        %v1089 = vrot.slane %v926, 7
        %v1090 = vrot.slane %v1089, 4
        %v1091 = vrot.slane %v927, 7
        %v1092 = vsel %vm565, %v1090, %v1091
        %v1093 = vrot.slane %v1091, 4
        %v1094 = vrot.slane %v928, 7
        %v1095 = vsel %vm565, %v1093, %v1094
        %v1096 = vrot.slane %v1094, 4
        %v1097 = vrot.slane %v929, 7
        %v1098 = vsel %vm565, %v1096, %v1097
        %v1099 = vrot.slane %v1097, 4
        %v1100 = vrot.slane %v930, 7
        %v1101 = vrot.slane %v1100, 4
        %v1102 = vrot.slane %v931, 7
        %v1103 = vsel %vm565, %v1101, %v1102
        %v1104 = vrot.slane %v1102, 4
        %v1105 = vrot.slane %v932, 7
        %v1106 = vsel %vm565, %v1104, %v1105
        %v1107 = vrot.slane %v1105, 4
        %v1108 = vrot.slane %v933, 7
        %v1109 = vsel %vm565, %v1107, %v1108
        %v1110 = vrot.slane %v1108, 4
        %v1111 = vrot.slane %v934, 7
        %v1112 = vrot.slane %v1111, 4
        %v1113 = vrot.slane %v935, 7
        %v1114 = vsel %vm565, %v1112, %v1113
        %v1115 = vrot.slane %v1113, 4
        %v1116 = vrot.slane %v936, 7
        %v1117 = vsel %vm565, %v1115, %v1116
        %v1118 = vrot.slane %v1116, 4
        %v1119 = vrot.slane %v937, 7
        %v1120 = vsel %vm565, %v1118, %v1119
        %v1121 = vrot.slane %v1119, 4
        %v1122 = vrot.slane %v938, 7
        %v1123 = vrot.slane %v1122, 4
        %v1124 = vrot.slane %v939, 7
        %v1125 = vsel %vm565, %v1123, %v1124
        %v1126 = vrot.slane %v1124, 4
        %v1127 = vrot.slane %v940, 7
        %v1128 = vsel %vm565, %v1126, %v1127
        %v1129 = vrot.slane %v1127, 4
        %v1130 = vrot.slane %v941, 7
        %v1131 = vsel %vm565, %v1129, %v1130
        %v1132 = vrot.slane %v1130, 4
        %v1133 = vrot.slane %v942, 7
        %v1134 = vrot.slane %v1133, 4
        %v1135 = vrot.slane %v943, 7
        %v1136 = vsel %vm565, %v1134, %v1135
        %v1137 = vrot.slane %v1135, 4
        %v1138 = vrot.slane %v944, 7
        %v1139 = vsel %vm565, %v1137, %v1138
        %v1140 = vrot.slane %v1138, 4
        %v1141 = vrot.slane %v945, 7
        %v1142 = vsel %vm565, %v1140, %v1141
        %v1143 = vrot.slane %v1141, 4
        %v1144 = vrot.slane %v946, 7
        %v1145 = vrot.slane %v1144, 4
        %v1146 = vrot.slane %v947, 7
        %v1147 = vsel %vm565, %v1145, %v1146
        %v1148 = vrot.slane %v1146, 4
        %v1149 = vrot.slane %v948, 7
        %v1150 = vsel %vm565, %v1148, %v1149
        %v1151 = vrot.slane %v1149, 4
        %v1152 = vrot.slane %v949, 7
        %v1153 = vsel %vm565, %v1151, %v1152
        %v1154 = vrot.slane %v1152, 4
        %v1155 = vrot.slane %v950, 7
        %v1156 = vrot.slane %v1155, 4
        %v1157 = vrot.slane %v951, 7
        %v1158 = vsel %vm565, %v1156, %v1157
        %v1159 = vrot.slane %v1157, 4
        %v1160 = vrot.slane %v952, 7
        %v1161 = vsel %vm565, %v1159, %v1160
        %v1162 = vrot.slane %v1160, 4
        %v1163 = vrot.slane %v953, 7
        %v1164 = vsel %vm565, %v1162, %v1163
        %v1165 = vrot.slane %v1163, 4
        %v1166 = vrot.slane %v954, 7
        %v1167 = vrot.slane %v1166, 4
        %v1168 = vrot.slane %v955, 7
        %v1169 = vsel %vm565, %v1167, %v1168
        %v1170 = vrot.slane %v1168, 4
        %v1171 = vrot.slane %v956, 7
        %v1172 = vsel %vm565, %v1170, %v1171
        %v1173 = vrot.slane %v1171, 4
        %v1174 = vrot.slane %v957, 7
        %v1175 = vsel %vm565, %v1173, %v1174
        %v1176 = vrot.slane %v1174, 4
        %v1177 = vrot.slane %v958, 7
        %v1178 = vrot.slane %v1177, 4
        %v1179 = vrot.slane %v959, 7
        %v1180 = vsel %vm565, %v1178, %v1179
        %v1181 = vrot.slane %v1179, 4
        %v1182 = vrot.slane %v960, 7
        %v1183 = vsel %vm565, %v1181, %v1182
        %v1184 = vrot.slane %v1182, 4
        %v1185 = vrot.slane %v961, 7
        %v1186 = vsel %vm565, %v1184, %v1185
        %v1187 = vrot.slane %v1185, 4
        %v1188 = vrot.slane %v962, 7
        %v1189 = vrot.slane %v1188, 4
        %v1190 = vrot.slane %v963, 7
        %v1191 = vsel %vm565, %v1189, %v1190
        %v1192 = vrot.slane %v1190, 4
        %v1193 = vrot.slane %v964, 7
        %v1194 = vsel %vm565, %v1192, %v1193
        %v1195 = vrot.slane %v1193, 4
        %v1196 = vrot.slane %v965, 7
        %v1197 = vsel %vm565, %v1195, %v1196
        %v1198 = vrot.slane %v1196, 4
        %v1199 = vrot.slane %v966, 7
        %v1200 = vrot.slane %v1199, 4
        %v1201 = vrot.slane %v967, 7
        %v1202 = vsel %vm565, %v1200, %v1201
        %v1203 = vrot.slane %v1201, 4
        %v1204 = vrot.slane %v968, 7
        %v1205 = vsel %vm565, %v1203, %v1204
        %v1206 = vrot.slane %v1204, 4
        %v1207 = vrot.slane %v969, 7
        %v1208 = vsel %vm565, %v1206, %v1207
        %v1209 = vrot.slane %v1207, 4
        %s1290 = scalar_lea.vmem [#allocation2], 360
        %1291 = vst.msk [vmem:[%s1290] sm:$0xe] %vm823, %v1034
        %1292 = vst.msk [vmem:[%s1290 + $0x4] sm:$0xf] %vm253, %v1037
        %1293 = vst.msk [vmem:[%s1290 + $0x8] sm:$0xf] %vm253, %v1040
        %1294 = vst.msk [vmem:[%s1290 + $0xc] sm:$0xf] %vm253, %v1043
        %1295 = vst.msk [vmem:[%s1290 + $0x10] sm:$0x1] %vm828, %v1044
        %1296 = vst.msk [vmem:[%s1290 + $0x14] sm:$0xe] %vm823, %v1045
        %1297 = vst.msk [vmem:[%s1290 + $0x18] sm:$0xf] %vm253, %v1048
        %1298 = vst.msk [vmem:[%s1290 + $0x1c] sm:$0xf] %vm253, %v1051
        %1299 = vst.msk [vmem:[%s1290 + $0x20] sm:$0xf] %vm253, %v1054
        %1300 = vst.msk [vmem:[%s1290 + $0x24] sm:$0x1] %vm828, %v1055
        %1301 = vst.msk [vmem:[%s1290 + $0x28] sm:$0xe] %vm823, %v1056
        %1302 = vst.msk [vmem:[%s1290 + $0x2c] sm:$0xf] %vm253, %v1059
        %1303 = vst.msk [vmem:[%s1290 + $0x30] sm:$0xf] %vm253, %v1062
        %1304 = vst.msk [vmem:[%s1290 + $0x34] sm:$0xf] %vm253, %v1065
        %1305 = vst.msk [vmem:[%s1290 + $0x38] sm:$0x1] %vm828, %v1066
        %1306 = vst.msk [vmem:[%s1290 + $0x3c] sm:$0xe] %vm823, %v1067
        %1307 = vst.msk [vmem:[%s1290 + $0x40] sm:$0xf] %vm253, %v1070
        %1308 = vst.msk [vmem:[%s1290 + $0x44] sm:$0xf] %vm253, %v1073
        %1309 = vst.msk [vmem:[%s1290 + $0x48] sm:$0xf] %vm253, %v1076
        %1310 = vst.msk [vmem:[%s1290 + $0x4c] sm:$0x1] %vm828, %v1077
        %1311 = vst.msk [vmem:[%s1290 + $0x50] sm:$0xe] %vm823, %v1078
        %1312 = vst.msk [vmem:[%s1290 + $0x54] sm:$0xf] %vm253, %v1081
        %1313 = vst.msk [vmem:[%s1290 + $0x58] sm:$0xf] %vm253, %v1084
        %1314 = vst.msk [vmem:[%s1290 + $0x5c] sm:$0xf] %vm253, %v1087
        %1315 = vst.msk [vmem:[%s1290 + $0x60] sm:$0x1] %vm828, %v1088
        %1316 = vst.msk [vmem:[%s1290 + $0x64] sm:$0xe] %vm823, %v1089
        %1317 = vst.msk [vmem:[%s1290 + $0x68] sm:$0xf] %vm253, %v1092
        %1318 = vst.msk [vmem:[%s1290 + $0x6c] sm:$0xf] %vm253, %v1095
        %1319 = vst.msk [vmem:[%s1290 + $0x70] sm:$0xf] %vm253, %v1098
        %1320 = vst.msk [vmem:[%s1290 + $0x74] sm:$0x1] %vm828, %v1099
        %1321 = vst.msk [vmem:[%s1290 + $0x78] sm:$0xe] %vm823, %v1100
        %1322 = vst.msk [vmem:[%s1290 + $0x7c] sm:$0xf] %vm253, %v1103
        %1323 = vst.msk [vmem:[%s1290 + $0x80] sm:$0xf] %vm253, %v1106
        %1324 = vst.msk [vmem:[%s1290 + $0x84] sm:$0xf] %vm253, %v1109
        %1325 = vst.msk [vmem:[%s1290 + $0x88] sm:$0x1] %vm828, %v1110
        %1326 = vst.msk [vmem:[%s1290 + $0x8c] sm:$0xe] %vm823, %v1111
        %1327 = vst.msk [vmem:[%s1290 + $0x90] sm:$0xf] %vm253, %v1114
        %1328 = vst.msk [vmem:[%s1290 + $0x94] sm:$0xf] %vm253, %v1117
        %1329 = vst.msk [vmem:[%s1290 + $0x98] sm:$0xf] %vm253, %v1120
        %1330 = vst.msk [vmem:[%s1290 + $0x9c] sm:$0x1] %vm828, %v1121
        %1331 = vst.msk [vmem:[%s1290 + $0xa0] sm:$0xe] %vm823, %v1122
        %1332 = vst.msk [vmem:[%s1290 + $0xa4] sm:$0xf] %vm253, %v1125
        %1333 = vst.msk [vmem:[%s1290 + $0xa8] sm:$0xf] %vm253, %v1128
        %1334 = vst.msk [vmem:[%s1290 + $0xac] sm:$0xf] %vm253, %v1131
        %1335 = vst.msk [vmem:[%s1290 + $0xb0] sm:$0x1] %vm828, %v1132
        %1336 = vst.msk [vmem:[%s1290 + $0xb4] sm:$0xe] %vm823, %v1133
        %1337 = vst.msk [vmem:[%s1290 + $0xb8] sm:$0xf] %vm253, %v1136
        %1338 = vst.msk [vmem:[%s1290 + $0xbc] sm:$0xf] %vm253, %v1139
        %1339 = vst.msk [vmem:[%s1290 + $0xc0] sm:$0xf] %vm253, %v1142
        %1340 = vst.msk [vmem:[%s1290 + $0xc4] sm:$0x1] %vm828, %v1143
        %1341 = vst.msk [vmem:[%s1290 + $0xc8] sm:$0xe] %vm823, %v1144
        %1342 = vst.msk [vmem:[%s1290 + $0xcc] sm:$0xf] %vm253, %v1147
        %1343 = vst.msk [vmem:[%s1290 + $0xd0] sm:$0xf] %vm253, %v1150
        %1344 = vst.msk [vmem:[%s1290 + $0xd4] sm:$0xf] %vm253, %v1153
        %1345 = vst.msk [vmem:[%s1290 + $0xd8] sm:$0x1] %vm828, %v1154
        %1346 = vst.msk [vmem:[%s1290 + $0xdc] sm:$0xe] %vm823, %v1155
        %1347 = vst.msk [vmem:[%s1290 + $0xe0] sm:$0xf] %vm253, %v1158
        %1348 = vst.msk [vmem:[%s1290 + $0xe4] sm:$0xf] %vm253, %v1161
        %1349 = vst.msk [vmem:[%s1290 + $0xe8] sm:$0xf] %vm253, %v1164
        %1350 = vst.msk [vmem:[%s1290 + $0xec] sm:$0x1] %vm828, %v1165
        %1351 = vst.msk [vmem:[%s1290 + $0xf0] sm:$0xe] %vm823, %v1166
        %1352 = vst.msk [vmem:[%s1290 + $0xf4] sm:$0xf] %vm253, %v1169
        %1353 = vst.msk [vmem:[%s1290 + $0xf8] sm:$0xf] %vm253, %v1172
        %1354 = vst.msk [vmem:[%s1290 + $0xfc] sm:$0xf] %vm253, %v1175
        %1355 = vst.msk [vmem:[%s1290 + $0x100] sm:$0x1] %vm828, %v1176
        %1356 = vst.msk [vmem:[%s1290 + $0x104] sm:$0xe] %vm823, %v1177
        %1357 = vst.msk [vmem:[%s1290 + $0x108] sm:$0xf] %vm253, %v1180
        %1358 = vst.msk [vmem:[%s1290 + $0x10c] sm:$0xf] %vm253, %v1183
        %1359 = vst.msk [vmem:[%s1290 + $0x110] sm:$0xf] %vm253, %v1186
        %1360 = vst.msk [vmem:[%s1290 + $0x114] sm:$0x1] %vm828, %v1187
        %1361 = vst.msk [vmem:[%s1290 + $0x118] sm:$0xe] %vm823, %v1188
        %1362 = vst.msk [vmem:[%s1290 + $0x11c] sm:$0xf] %vm253, %v1191
        %1363 = vst.msk [vmem:[%s1290 + $0x120] sm:$0xf] %vm253, %v1194
        %1364 = vst.msk [vmem:[%s1290 + $0x124] sm:$0xf] %vm253, %v1197
        %1365 = vst.msk [vmem:[%s1290 + $0x128] sm:$0x1] %vm828, %v1198
        %1366 = vst.msk [vmem:[%s1290 + $0x12c] sm:$0xe] %vm823, %v1199
        %1367 = vst.msk [vmem:[%s1290 + $0x130] sm:$0xf] %vm253, %v1202
        %1368 = vst.msk [vmem:[%s1290 + $0x134] sm:$0xf] %vm253, %v1205
        %1369 = vst.msk [vmem:[%s1290 + $0x138] sm:$0xf] %vm253, %v1208
        %1370 = vst.msk [vmem:[%s1290 + $0x13c] sm:$0x1] %vm828, %v1209
      $region44: #{tpu_custom_call.1} parent=39 // pred_fallthru
        _
      %s1371 = smul.u32 %s21, 16
      %s1372 = smul.u32 %s1371, 5
      %s1373 = smul.addr %s1372, 4
      %s1374 = scalar_lea.vmem [#allocation2], %s1373
      %v1375 = vld [vmem:[%s1374] sm:$0xf]
      %v1376 = vld [vmem:[%s1374 + $0x4] sm:$0xf]
      %v1377 = vld [vmem:[%s1374 + $0x8] sm:$0xf]
      %v1378 = vld [vmem:[%s1374 + $0xc] sm:$0xf]
      %v1379 = vld [vmem:[%s1374 + $0x10] sm:$0x3]
      %v1380 = vld [vmem:[%s1374 + $0x14] sm:$0xf]
      %v1381 = vld [vmem:[%s1374 + $0x18] sm:$0xf]
      %v1382 = vld [vmem:[%s1374 + $0x1c] sm:$0xf]
      %v1383 = vld [vmem:[%s1374 + $0x20] sm:$0xf]
      %v1384 = vld [vmem:[%s1374 + $0x24] sm:$0x3]
      %v1385 = vld [vmem:[%s1374 + $0x28] sm:$0xf]
      %v1386 = vld [vmem:[%s1374 + $0x2c] sm:$0xf]
      %v1387 = vld [vmem:[%s1374 + $0x30] sm:$0xf]
      %v1388 = vld [vmem:[%s1374 + $0x34] sm:$0xf]
      %v1389 = vld [vmem:[%s1374 + $0x38] sm:$0x3]
      %v1390 = vld [vmem:[%s1374 + $0x3c] sm:$0xf]
      %v1391 = vld [vmem:[%s1374 + $0x40] sm:$0xf]
      %v1392 = vld [vmem:[%s1374 + $0x44] sm:$0xf]
      %v1393 = vld [vmem:[%s1374 + $0x48] sm:$0xf]
      %v1394 = vld [vmem:[%s1374 + $0x4c] sm:$0x3]
      %v1395 = vld [vmem:[%s1374 + $0x50] sm:$0xf]
      %v1396 = vld [vmem:[%s1374 + $0x54] sm:$0xf]
      %v1397 = vld [vmem:[%s1374 + $0x58] sm:$0xf]
      %v1398 = vld [vmem:[%s1374 + $0x5c] sm:$0xf]
      %v1399 = vld [vmem:[%s1374 + $0x60] sm:$0x3]
      %v1400 = vld [vmem:[%s1374 + $0x64] sm:$0xf]
      %v1401 = vld [vmem:[%s1374 + $0x68] sm:$0xf]
      %v1402 = vld [vmem:[%s1374 + $0x6c] sm:$0xf]
      %v1403 = vld [vmem:[%s1374 + $0x70] sm:$0xf]
      %v1404 = vld [vmem:[%s1374 + $0x74] sm:$0x3]
      %v1405 = vld [vmem:[%s1374 + $0x78] sm:$0xf]
      %v1406 = vld [vmem:[%s1374 + $0x7c] sm:$0xf]
      %v1407 = vld [vmem:[%s1374 + $0x80] sm:$0xf]
      %v1408 = vld [vmem:[%s1374 + $0x84] sm:$0xf]
      %v1409 = vld [vmem:[%s1374 + $0x88] sm:$0x3]
      %v1410 = vld [vmem:[%s1374 + $0x8c] sm:$0xf]
      %v1411 = vld [vmem:[%s1374 + $0x90] sm:$0xf]
      %v1412 = vld [vmem:[%s1374 + $0x94] sm:$0xf]
      %v1413 = vld [vmem:[%s1374 + $0x98] sm:$0xf]
      %v1414 = vld [vmem:[%s1374 + $0x9c] sm:$0x3]
      %v1415 = vld [vmem:[%s1374 + $0xa0] sm:$0xf]
      %v1416 = vld [vmem:[%s1374 + $0xa4] sm:$0xf]
      %v1417 = vld [vmem:[%s1374 + $0xa8] sm:$0xf]
      %v1418 = vld [vmem:[%s1374 + $0xac] sm:$0xf]
      %v1419 = vld [vmem:[%s1374 + $0xb0] sm:$0x3]
      %v1420 = vld [vmem:[%s1374 + $0xb4] sm:$0xf]
      %v1421 = vld [vmem:[%s1374 + $0xb8] sm:$0xf]
      %v1422 = vld [vmem:[%s1374 + $0xbc] sm:$0xf]
      %v1423 = vld [vmem:[%s1374 + $0xc0] sm:$0xf]
      %v1424 = vld [vmem:[%s1374 + $0xc4] sm:$0x3]
      %v1425 = vld [vmem:[%s1374 + $0xc8] sm:$0xf]
      %v1426 = vld [vmem:[%s1374 + $0xcc] sm:$0xf]
      %v1427 = vld [vmem:[%s1374 + $0xd0] sm:$0xf]
      %v1428 = vld [vmem:[%s1374 + $0xd4] sm:$0xf]
      %v1429 = vld [vmem:[%s1374 + $0xd8] sm:$0x3]
      %v1430 = vld [vmem:[%s1374 + $0xdc] sm:$0xf]
      %v1431 = vld [vmem:[%s1374 + $0xe0] sm:$0xf]
      %v1432 = vld [vmem:[%s1374 + $0xe4] sm:$0xf]
      %v1433 = vld [vmem:[%s1374 + $0xe8] sm:$0xf]
      %v1434 = vld [vmem:[%s1374 + $0xec] sm:$0x3]
      %v1435 = vld [vmem:[%s1374 + $0xf0] sm:$0xf]
      %v1436 = vld [vmem:[%s1374 + $0xf4] sm:$0xf]
      %v1437 = vld [vmem:[%s1374 + $0xf8] sm:$0xf]
      %v1438 = vld [vmem:[%s1374 + $0xfc] sm:$0xf]
      %v1439 = vld [vmem:[%s1374 + $0x100] sm:$0x3]
      %v1440 = vld [vmem:[%s1374 + $0x104] sm:$0xf]
      %v1441 = vld [vmem:[%s1374 + $0x108] sm:$0xf]
      %v1442 = vld [vmem:[%s1374 + $0x10c] sm:$0xf]
      %v1443 = vld [vmem:[%s1374 + $0x110] sm:$0xf]
      %v1444 = vld [vmem:[%s1374 + $0x114] sm:$0x3]
      %v1445 = vld [vmem:[%s1374 + $0x118] sm:$0xf]
      %v1446 = vld [vmem:[%s1374 + $0x11c] sm:$0xf]
      %v1447 = vld [vmem:[%s1374 + $0x120] sm:$0xf]
      %v1448 = vld [vmem:[%s1374 + $0x124] sm:$0xf]
      %v1449 = vld [vmem:[%s1374 + $0x128] sm:$0x3]
      %v1450 = vld [vmem:[%s1374 + $0x12c] sm:$0xf]
      %v1451 = vld [vmem:[%s1374 + $0x130] sm:$0xf]
      %v1452 = vld [vmem:[%s1374 + $0x134] sm:$0xf]
      %v1453 = vld [vmem:[%s1374 + $0x138] sm:$0xf]
      %v1454 = vld [vmem:[%s1374 + $0x13c] sm:$0x3]
      %v1455 = vld [vmem:[%s1374 + $0x140] sm:$0xf]
      %v1456 = vld [vmem:[%s1374 + $0x144] sm:$0xf]
      %v1457 = vld [vmem:[%s1374 + $0x148] sm:$0xf]
      %v1458 = vld [vmem:[%s1374 + $0x14c] sm:$0xf]
      %v1459 = vld [vmem:[%s1374 + $0x150] sm:$0x3]
      %v1460 = vld [vmem:[%s1374 + $0x154] sm:$0xf]
      %v1461 = vld [vmem:[%s1374 + $0x158] sm:$0xf]
      %v1462 = vld [vmem:[%s1374 + $0x15c] sm:$0xf]
      %v1463 = vld [vmem:[%s1374 + $0x160] sm:$0xf]
      %v1464 = vld [vmem:[%s1374 + $0x164] sm:$0x3]
      %v1465 = vld [vmem:[%s1374 + $0x168] sm:$0xf]
      %v1466 = vld [vmem:[%s1374 + $0x16c] sm:$0xf]
      %v1467 = vld [vmem:[%s1374 + $0x170] sm:$0xf]
      %v1468 = vld [vmem:[%s1374 + $0x174] sm:$0xf]
      %v1469 = vld [vmem:[%s1374 + $0x178] sm:$0x3]
      %v1470 = vld [vmem:[%s1374 + $0x17c] sm:$0xf]
      %v1471 = vld [vmem:[%s1374 + $0x180] sm:$0xf]
      %v1472 = vld [vmem:[%s1374 + $0x184] sm:$0xf]
      %v1473 = vld [vmem:[%s1374 + $0x188] sm:$0xf]
      %v1474 = vld [vmem:[%s1374 + $0x18c] sm:$0x3]
      %v1539 = vunpack.c.l.b16 %v1375
      %v1540 = vunpack.c.l.b16 %v1376
      %v1541 = vunpack.c.l.b16 %v1377
      %v1542 = vunpack.c.l.b16 %v1378
      %v1543 = vunpack.c.l.b16 %v1380
      %v1544 = vunpack.c.l.b16 %v1381
      %v1545 = vunpack.c.l.b16 %v1382
      %v1546 = vunpack.c.l.b16 %v1383
      %v1547 = vunpack.c.l.b16 %v1385
      %v1548 = vunpack.c.l.b16 %v1386
      %v1549 = vunpack.c.l.b16 %v1387
      %v1550 = vunpack.c.l.b16 %v1388
      %v1551 = vunpack.c.l.b16 %v1390
      %v1552 = vunpack.c.l.b16 %v1391
      %v1553 = vunpack.c.l.b16 %v1392
      %v1554 = vunpack.c.l.b16 %v1393
      %v1555 = vunpack.c.l.b16 %v1395
      %v1556 = vunpack.c.l.b16 %v1396
      %v1557 = vunpack.c.l.b16 %v1397
      %v1558 = vunpack.c.l.b16 %v1398
      %v1559 = vunpack.c.l.b16 %v1400
      %v1560 = vunpack.c.l.b16 %v1401
      %v1561 = vunpack.c.l.b16 %v1402
      %v1562 = vunpack.c.l.b16 %v1403
      %v1563 = vunpack.c.l.b16 %v1405
      %v1564 = vunpack.c.l.b16 %v1406
      %v1565 = vunpack.c.l.b16 %v1407
      %v1566 = vunpack.c.l.b16 %v1408
      %v1567 = vunpack.c.l.b16 %v1410
      %v1568 = vunpack.c.l.b16 %v1411
      %v1569 = vunpack.c.l.b16 %v1412
      %v1570 = vunpack.c.l.b16 %v1413
      %v1571 = vunpack.c.l.b16 %v1415
      %v1572 = vunpack.c.l.b16 %v1416
      %v1573 = vunpack.c.l.b16 %v1417
      %v1574 = vunpack.c.l.b16 %v1418
      %v1575 = vunpack.c.l.b16 %v1420
      %v1576 = vunpack.c.l.b16 %v1421
      %v1577 = vunpack.c.l.b16 %v1422
      %v1578 = vunpack.c.l.b16 %v1423
      %v1579 = vunpack.c.l.b16 %v1425
      %v1580 = vunpack.c.l.b16 %v1426
      %v1581 = vunpack.c.l.b16 %v1427
      %v1582 = vunpack.c.l.b16 %v1428
      %v1583 = vunpack.c.l.b16 %v1430
      %v1584 = vunpack.c.l.b16 %v1431
      %v1585 = vunpack.c.l.b16 %v1432
      %v1586 = vunpack.c.l.b16 %v1433
      %v1587 = vunpack.c.l.b16 %v1435
      %v1588 = vunpack.c.l.b16 %v1436
      %v1589 = vunpack.c.l.b16 %v1437
      %v1590 = vunpack.c.l.b16 %v1438
      %v1591 = vunpack.c.l.b16 %v1440
      %v1592 = vunpack.c.l.b16 %v1441
      %v1593 = vunpack.c.l.b16 %v1442
      %v1594 = vunpack.c.l.b16 %v1443
      %v1595 = vunpack.c.l.b16 %v1445
      %v1596 = vunpack.c.l.b16 %v1446
      %v1597 = vunpack.c.l.b16 %v1447
      %v1598 = vunpack.c.l.b16 %v1448
      %v1599 = vunpack.c.l.b16 %v1450
      %v1600 = vunpack.c.l.b16 %v1451
      %v1601 = vunpack.c.l.b16 %v1452
      %v1602 = vunpack.c.l.b16 %v1453
      %v1603 = vpack.c.b16 %v1540, %v1539
      %v1604 = vpack.c.b16 %v1542, %v1541
      %v1605 = vpack.c.b16 %v1544, %v1543
      %v1606 = vpack.c.b16 %v1546, %v1545
      %v1607 = vpack.c.b16 %v1548, %v1547
      %v1608 = vpack.c.b16 %v1550, %v1549
      %v1609 = vpack.c.b16 %v1552, %v1551
      %v1610 = vpack.c.b16 %v1554, %v1553
      %v1611 = vpack.c.b16 %v1556, %v1555
      %v1612 = vpack.c.b16 %v1558, %v1557
      %v1613 = vpack.c.b16 %v1560, %v1559
      %v1614 = vpack.c.b16 %v1562, %v1561
      %v1615 = vpack.c.b16 %v1564, %v1563
      %v1616 = vpack.c.b16 %v1566, %v1565
      %v1617 = vpack.c.b16 %v1568, %v1567
      %v1618 = vpack.c.b16 %v1570, %v1569
      %v1619 = vpack.c.b16 %v1572, %v1571
      %v1620 = vpack.c.b16 %v1574, %v1573
      %v1621 = vpack.c.b16 %v1576, %v1575
      %v1622 = vpack.c.b16 %v1578, %v1577
      %v1623 = vpack.c.b16 %v1580, %v1579
      %v1624 = vpack.c.b16 %v1582, %v1581
      %v1625 = vpack.c.b16 %v1584, %v1583
      %v1626 = vpack.c.b16 %v1586, %v1585
      %v1627 = vpack.c.b16 %v1588, %v1587
      %v1628 = vpack.c.b16 %v1590, %v1589
      %v1629 = vpack.c.b16 %v1592, %v1591
      %v1630 = vpack.c.b16 %v1594, %v1593
      %v1631 = vpack.c.b16 %v1596, %v1595
      %v1632 = vpack.c.b16 %v1598, %v1597
      %v1633 = vpack.c.b16 %v1600, %v1599
      %v1634 = vpack.c.b16 %v1602, %v1601
      %v1651 = vunpack.c.l.b16 %v1379
      %v1652 = vunpack.c.l.b16 %v1384
      %v1653 = vunpack.c.l.b16 %v1389
      %v1654 = vunpack.c.l.b16 %v1394
      %v1655 = vunpack.c.l.b16 %v1399
      %v1656 = vunpack.c.l.b16 %v1404
      %v1657 = vunpack.c.l.b16 %v1409
      %v1658 = vunpack.c.l.b16 %v1414
      %v1659 = vunpack.c.l.b16 %v1419
      %v1660 = vunpack.c.l.b16 %v1424
      %v1661 = vunpack.c.l.b16 %v1429
      %v1662 = vunpack.c.l.b16 %v1434
      %v1663 = vunpack.c.l.b16 %v1439
      %v1664 = vunpack.c.l.b16 %v1444
      %v1665 = vunpack.c.l.b16 %v1449
      %v1666 = vunpack.c.l.b16 %v1454
      %v1667 = vpack.c.b16 %v1651, %v1651
      %v1668 = vpack.c.b16 %v1652, %v1652
      %v1669 = vpack.c.b16 %v1653, %v1653
      %v1670 = vpack.c.b16 %v1654, %v1654
      %v1671 = vpack.c.b16 %v1655, %v1655
      %v1672 = vpack.c.b16 %v1656, %v1656
      %v1673 = vpack.c.b16 %v1657, %v1657
      %v1674 = vpack.c.b16 %v1658, %v1658
      %v1675 = vpack.c.b16 %v1659, %v1659
      %v1676 = vpack.c.b16 %v1660, %v1660
      %v1677 = vpack.c.b16 %v1661, %v1661
      %v1678 = vpack.c.b16 %v1662, %v1662
      %v1679 = vpack.c.b16 %v1663, %v1663
      %v1680 = vpack.c.b16 %v1664, %v1664
      %v1681 = vpack.c.b16 %v1665, %v1665
      %v1682 = vpack.c.b16 %v1666, %v1666
      %vm1683 = vsmask.f32 7424
      %v1685 = vshrl.u32 %v1603, 16
      %v1687 = vshll.u32 %v1603, 16
      %v1689 = vrot.slane %v1687, 1
      %v1690 = vor.u32 %v1685, %v1689
      %v1692 = vshll.u32 %v1604, 16
      %v1694 = vrot.slane %v1692, 1
      %v1695 = vsel %vm1683, %v1690, %v1694
      %v1696 = vshrl.u32 %v1604, 16
      %v1698 = vor.u32 %v1696, %v1694
      %v1700 = vshll.u32 %v1667, 16
      %v1702 = vrot.slane %v1700, 1
      %v1703 = vsel %vm1683, %v1698, %v1702
      %v1705 = vshrl.u32 %v1605, 16
      %v1707 = vshll.u32 %v1605, 16
      %v1709 = vrot.slane %v1707, 1
      %v1710 = vor.u32 %v1705, %v1709
      %v1712 = vshll.u32 %v1606, 16
      %v1714 = vrot.slane %v1712, 1
      %v1715 = vsel %vm1683, %v1710, %v1714
      %v1716 = vshrl.u32 %v1606, 16
      %v1718 = vor.u32 %v1716, %v1714
      %v1720 = vshll.u32 %v1668, 16
      %v1722 = vrot.slane %v1720, 1
      %v1723 = vsel %vm1683, %v1718, %v1722
      %v1725 = vshrl.u32 %v1607, 16
      %v1727 = vshll.u32 %v1607, 16
      %v1729 = vrot.slane %v1727, 1
      %v1730 = vor.u32 %v1725, %v1729
      %v1732 = vshll.u32 %v1608, 16
      %v1734 = vrot.slane %v1732, 1
      %v1735 = vsel %vm1683, %v1730, %v1734
      %v1736 = vshrl.u32 %v1608, 16
      %v1738 = vor.u32 %v1736, %v1734
      %v1740 = vshll.u32 %v1669, 16
      %v1742 = vrot.slane %v1740, 1
      %v1743 = vsel %vm1683, %v1738, %v1742
      %v1745 = vshrl.u32 %v1609, 16
      %v1747 = vshll.u32 %v1609, 16
      %v1749 = vrot.slane %v1747, 1
      %v1750 = vor.u32 %v1745, %v1749
      %v1752 = vshll.u32 %v1610, 16
      %v1754 = vrot.slane %v1752, 1
      %v1755 = vsel %vm1683, %v1750, %v1754
      %v1756 = vshrl.u32 %v1610, 16
      %v1758 = vor.u32 %v1756, %v1754
      %v1760 = vshll.u32 %v1670, 16
      %v1762 = vrot.slane %v1760, 1
      %v1763 = vsel %vm1683, %v1758, %v1762
      %v1765 = vshrl.u32 %v1611, 16
      %v1767 = vshll.u32 %v1611, 16
      %v1769 = vrot.slane %v1767, 1
      %v1770 = vor.u32 %v1765, %v1769
      %v1772 = vshll.u32 %v1612, 16
      %v1774 = vrot.slane %v1772, 1
      %v1775 = vsel %vm1683, %v1770, %v1774
      %v1776 = vshrl.u32 %v1612, 16
      %v1778 = vor.u32 %v1776, %v1774
      %v1780 = vshll.u32 %v1671, 16
      %v1782 = vrot.slane %v1780, 1
      %v1783 = vsel %vm1683, %v1778, %v1782
      %v1785 = vshrl.u32 %v1613, 16
      %v1787 = vshll.u32 %v1613, 16
      %v1789 = vrot.slane %v1787, 1
      %v1790 = vor.u32 %v1785, %v1789
      %v1792 = vshll.u32 %v1614, 16
      %v1794 = vrot.slane %v1792, 1
      %v1795 = vsel %vm1683, %v1790, %v1794
      %v1796 = vshrl.u32 %v1614, 16
      %v1798 = vor.u32 %v1796, %v1794
      %v1800 = vshll.u32 %v1672, 16
      %v1802 = vrot.slane %v1800, 1
      %v1803 = vsel %vm1683, %v1798, %v1802
      %v1805 = vshrl.u32 %v1615, 16
      %v1807 = vshll.u32 %v1615, 16
      %v1809 = vrot.slane %v1807, 1
      %v1810 = vor.u32 %v1805, %v1809
      %v1812 = vshll.u32 %v1616, 16
      %v1814 = vrot.slane %v1812, 1
      %v1815 = vsel %vm1683, %v1810, %v1814
      %v1816 = vshrl.u32 %v1616, 16
      %v1818 = vor.u32 %v1816, %v1814
      %v1820 = vshll.u32 %v1673, 16
      %v1822 = vrot.slane %v1820, 1
      %v1823 = vsel %vm1683, %v1818, %v1822
      %v1825 = vshrl.u32 %v1617, 16
      %v1827 = vshll.u32 %v1617, 16
      %v1829 = vrot.slane %v1827, 1
      %v1830 = vor.u32 %v1825, %v1829
      %v1832 = vshll.u32 %v1618, 16
      %v1834 = vrot.slane %v1832, 1
      %v1835 = vsel %vm1683, %v1830, %v1834
      %v1836 = vshrl.u32 %v1618, 16
      %v1838 = vor.u32 %v1836, %v1834
      %v1840 = vshll.u32 %v1674, 16
      %v1842 = vrot.slane %v1840, 1
      %v1843 = vsel %vm1683, %v1838, %v1842
      %v1845 = vshrl.u32 %v1619, 16
      %v1847 = vshll.u32 %v1619, 16
      %v1849 = vrot.slane %v1847, 1
      %v1850 = vor.u32 %v1845, %v1849
      %v1852 = vshll.u32 %v1620, 16
      %v1854 = vrot.slane %v1852, 1
      %v1855 = vsel %vm1683, %v1850, %v1854
      %v1856 = vshrl.u32 %v1620, 16
      %v1858 = vor.u32 %v1856, %v1854
      %v1860 = vshll.u32 %v1675, 16
      %v1862 = vrot.slane %v1860, 1
      %v1863 = vsel %vm1683, %v1858, %v1862
      %v1865 = vshrl.u32 %v1621, 16
      %v1867 = vshll.u32 %v1621, 16
      %v1869 = vrot.slane %v1867, 1
      %v1870 = vor.u32 %v1865, %v1869
      %v1872 = vshll.u32 %v1622, 16
      %v1874 = vrot.slane %v1872, 1
      %v1875 = vsel %vm1683, %v1870, %v1874
      %v1876 = vshrl.u32 %v1622, 16
      %v1878 = vor.u32 %v1876, %v1874
      %v1880 = vshll.u32 %v1676, 16
      %v1882 = vrot.slane %v1880, 1
      %v1883 = vsel %vm1683, %v1878, %v1882
      %v1885 = vshrl.u32 %v1623, 16
      %v1887 = vshll.u32 %v1623, 16
      %v1889 = vrot.slane %v1887, 1
      %v1890 = vor.u32 %v1885, %v1889
      %v1892 = vshll.u32 %v1624, 16
      %v1894 = vrot.slane %v1892, 1
      %v1895 = vsel %vm1683, %v1890, %v1894
      %v1896 = vshrl.u32 %v1624, 16
      %v1898 = vor.u32 %v1896, %v1894
      %v1900 = vshll.u32 %v1677, 16
      %v1902 = vrot.slane %v1900, 1
      %v1903 = vsel %vm1683, %v1898, %v1902
      %v1905 = vshrl.u32 %v1625, 16
      %v1907 = vshll.u32 %v1625, 16
      %v1909 = vrot.slane %v1907, 1
      %v1910 = vor.u32 %v1905, %v1909
      %v1912 = vshll.u32 %v1626, 16
      %v1914 = vrot.slane %v1912, 1
      %v1915 = vsel %vm1683, %v1910, %v1914
      %v1916 = vshrl.u32 %v1626, 16
      %v1918 = vor.u32 %v1916, %v1914
      %v1920 = vshll.u32 %v1678, 16
      %v1922 = vrot.slane %v1920, 1
      %v1923 = vsel %vm1683, %v1918, %v1922
      %v1925 = vshrl.u32 %v1627, 16
      %v1927 = vshll.u32 %v1627, 16
      %v1929 = vrot.slane %v1927, 1
      %v1930 = vor.u32 %v1925, %v1929
      %v1932 = vshll.u32 %v1628, 16
      %v1934 = vrot.slane %v1932, 1
      %v1935 = vsel %vm1683, %v1930, %v1934
      %v1936 = vshrl.u32 %v1628, 16
      %v1938 = vor.u32 %v1936, %v1934
      %v1940 = vshll.u32 %v1679, 16
      %v1942 = vrot.slane %v1940, 1
      %v1943 = vsel %vm1683, %v1938, %v1942
      %v1945 = vshrl.u32 %v1629, 16
      %v1947 = vshll.u32 %v1629, 16
      %v1949 = vrot.slane %v1947, 1
      %v1950 = vor.u32 %v1945, %v1949
      %v1952 = vshll.u32 %v1630, 16
      %v1954 = vrot.slane %v1952, 1
      %v1955 = vsel %vm1683, %v1950, %v1954
      %v1956 = vshrl.u32 %v1630, 16
      %v1958 = vor.u32 %v1956, %v1954
      %v1960 = vshll.u32 %v1680, 16
      %v1962 = vrot.slane %v1960, 1
      %v1963 = vsel %vm1683, %v1958, %v1962
      %v1965 = vshrl.u32 %v1631, 16
      %v1967 = vshll.u32 %v1631, 16
      %v1969 = vrot.slane %v1967, 1
      %v1970 = vor.u32 %v1965, %v1969
      %v1972 = vshll.u32 %v1632, 16
      %v1974 = vrot.slane %v1972, 1
      %v1975 = vsel %vm1683, %v1970, %v1974
      %v1976 = vshrl.u32 %v1632, 16
      %v1978 = vor.u32 %v1976, %v1974
      %v1980 = vshll.u32 %v1681, 16
      %v1982 = vrot.slane %v1980, 1
      %v1983 = vsel %vm1683, %v1978, %v1982
      %v1985 = vshrl.u32 %v1633, 16
      %v1987 = vshll.u32 %v1633, 16
      %v1989 = vrot.slane %v1987, 1
      %v1990 = vor.u32 %v1985, %v1989
      %v1992 = vshll.u32 %v1634, 16
      %v1994 = vrot.slane %v1992, 1
      %v1995 = vsel %vm1683, %v1990, %v1994
      %v1996 = vshrl.u32 %v1634, 16
      %v1998 = vor.u32 %v1996, %v1994
      %v2000 = vshll.u32 %v1682, 16
      %v2002 = vrot.slane %v2000, 1
      %v2003 = vsel %vm1683, %v1998, %v2002
      %2004 = vrot.lane.b32.xlu0 %v1695, 3
      %v2005 = vpop.permute.xlu0 %2004
      %2006 = vrot.lane.b32.xlu0 %v1703, 3
      %v2007 = vpop.permute.xlu0 %2006
      %2008 = vrot.lane.b32.xlu0 %v1715, 3
      %v2009 = vpop.permute.xlu0 %2008
      %2010 = vrot.lane.b32.xlu0 %v1723, 3
      %v2011 = vpop.permute.xlu0 %2010
      %2012 = vrot.lane.b32.xlu0 %v1735, 3
      %v2013 = vpop.permute.xlu0 %2012
      %2014 = vrot.lane.b32.xlu0 %v1743, 3
      %v2015 = vpop.permute.xlu0 %2014
      %2016 = vrot.lane.b32.xlu0 %v1755, 3
      %v2017 = vpop.permute.xlu0 %2016
      %2018 = vrot.lane.b32.xlu0 %v1763, 3
      %v2019 = vpop.permute.xlu0 %2018
      %2020 = vrot.lane.b32.xlu0 %v1775, 3
      %v2021 = vpop.permute.xlu0 %2020
      %2022 = vrot.lane.b32.xlu0 %v1783, 3
      %v2023 = vpop.permute.xlu0 %2022
      %2024 = vrot.lane.b32.xlu0 %v1795, 3
      %v2025 = vpop.permute.xlu0 %2024
      %2026 = vrot.lane.b32.xlu0 %v1803, 3
      %v2027 = vpop.permute.xlu0 %2026
      %2028 = vrot.lane.b32.xlu0 %v1815, 3
      %v2029 = vpop.permute.xlu0 %2028
      %2030 = vrot.lane.b32.xlu0 %v1823, 3
      %v2031 = vpop.permute.xlu0 %2030
      %2032 = vrot.lane.b32.xlu0 %v1835, 3
      %v2033 = vpop.permute.xlu0 %2032
      %2034 = vrot.lane.b32.xlu0 %v1843, 3
      %v2035 = vpop.permute.xlu0 %2034
      %2036 = vrot.lane.b32.xlu0 %v1855, 3
      %v2037 = vpop.permute.xlu0 %2036
      %2038 = vrot.lane.b32.xlu0 %v1863, 3
      %v2039 = vpop.permute.xlu0 %2038
      %2040 = vrot.lane.b32.xlu0 %v1875, 3
      %v2041 = vpop.permute.xlu0 %2040
      %2042 = vrot.lane.b32.xlu0 %v1883, 3
      %v2043 = vpop.permute.xlu0 %2042
      %2044 = vrot.lane.b32.xlu0 %v1895, 3
      %v2045 = vpop.permute.xlu0 %2044
      %2046 = vrot.lane.b32.xlu0 %v1903, 3
      %v2047 = vpop.permute.xlu0 %2046
      %2048 = vrot.lane.b32.xlu0 %v1915, 3
      %v2049 = vpop.permute.xlu0 %2048
      %2050 = vrot.lane.b32.xlu0 %v1923, 3
      %v2051 = vpop.permute.xlu0 %2050
      %2052 = vrot.lane.b32.xlu0 %v1935, 3
      %v2053 = vpop.permute.xlu0 %2052
      %2054 = vrot.lane.b32.xlu0 %v1943, 3
      %v2055 = vpop.permute.xlu0 %2054
      %2056 = vrot.lane.b32.xlu0 %v1955, 3
      %v2057 = vpop.permute.xlu0 %2056
      %2058 = vrot.lane.b32.xlu0 %v1963, 3
      %v2059 = vpop.permute.xlu0 %2058
      %2060 = vrot.lane.b32.xlu0 %v1975, 3
      %v2061 = vpop.permute.xlu0 %2060
      %2062 = vrot.lane.b32.xlu0 %v1983, 3
      %v2063 = vpop.permute.xlu0 %2062
      %2064 = vrot.lane.b32.xlu0 %v1995, 3
      %v2065 = vpop.permute.xlu0 %2064
      %2066 = vrot.lane.b32.xlu0 %v2003, 3
      %v2067 = vpop.permute.xlu0 %2066
      %vm2068 = vcmask 1046528
      %v2069 = vrot.slane %v1603, 1
      %v2070 = vrot.slane %v1604, 1
      %v2071 = vsel %vm2068, %v2069, %v2070
      %v2072 = vrot.slane %v1667, 1
      %v2073 = vsel %vm2068, %v2070, %v2072
      %v2074 = vrot.slane %v1605, 1
      %v2075 = vrot.slane %v1606, 1
      %v2076 = vsel %vm2068, %v2074, %v2075
      %v2077 = vrot.slane %v1668, 1
      %v2078 = vsel %vm2068, %v2075, %v2077
      %v2079 = vrot.slane %v1607, 1
      %v2080 = vrot.slane %v1608, 1
      %v2081 = vsel %vm2068, %v2079, %v2080
      %v2082 = vrot.slane %v1669, 1
      %v2083 = vsel %vm2068, %v2080, %v2082
      %v2084 = vrot.slane %v1609, 1
      %v2085 = vrot.slane %v1610, 1
      %v2086 = vsel %vm2068, %v2084, %v2085
      %v2087 = vrot.slane %v1670, 1
      %v2088 = vsel %vm2068, %v2085, %v2087
      %v2089 = vrot.slane %v1611, 1
      %v2090 = vrot.slane %v1612, 1
      %v2091 = vsel %vm2068, %v2089, %v2090
      %v2092 = vrot.slane %v1671, 1
      %v2093 = vsel %vm2068, %v2090, %v2092
      %v2094 = vrot.slane %v1613, 1
      %v2095 = vrot.slane %v1614, 1
      %v2096 = vsel %vm2068, %v2094, %v2095
      %v2097 = vrot.slane %v1672, 1
      %v2098 = vsel %vm2068, %v2095, %v2097
      %v2099 = vrot.slane %v1615, 1
      %v2100 = vrot.slane %v1616, 1
      %v2101 = vsel %vm2068, %v2099, %v2100
      %v2102 = vrot.slane %v1673, 1
      %v2103 = vsel %vm2068, %v2100, %v2102
      %v2104 = vrot.slane %v1617, 1
      %v2105 = vrot.slane %v1618, 1
      %v2106 = vsel %vm2068, %v2104, %v2105
      %v2107 = vrot.slane %v1674, 1
      %v2108 = vsel %vm2068, %v2105, %v2107
      %v2109 = vrot.slane %v1619, 1
      %v2110 = vrot.slane %v1620, 1
      %v2111 = vsel %vm2068, %v2109, %v2110
      %v2112 = vrot.slane %v1675, 1
      %v2113 = vsel %vm2068, %v2110, %v2112
      %v2114 = vrot.slane %v1621, 1
      %v2115 = vrot.slane %v1622, 1
      %v2116 = vsel %vm2068, %v2114, %v2115
      %v2117 = vrot.slane %v1676, 1
      %v2118 = vsel %vm2068, %v2115, %v2117
      %v2119 = vrot.slane %v1623, 1
      %v2120 = vrot.slane %v1624, 1
      %v2121 = vsel %vm2068, %v2119, %v2120
      %v2122 = vrot.slane %v1677, 1
      %v2123 = vsel %vm2068, %v2120, %v2122
      %v2124 = vrot.slane %v1625, 1
      %v2125 = vrot.slane %v1626, 1
      %v2126 = vsel %vm2068, %v2124, %v2125
      %v2127 = vrot.slane %v1678, 1
      %v2128 = vsel %vm2068, %v2125, %v2127
      %v2129 = vrot.slane %v1627, 1
      %v2130 = vrot.slane %v1628, 1
      %v2131 = vsel %vm2068, %v2129, %v2130
      %v2132 = vrot.slane %v1679, 1
      %v2133 = vsel %vm2068, %v2130, %v2132
      %v2134 = vrot.slane %v1629, 1
      %v2135 = vrot.slane %v1630, 1
      %v2136 = vsel %vm2068, %v2134, %v2135
      %v2137 = vrot.slane %v1680, 1
      %v2138 = vsel %vm2068, %v2135, %v2137
      %v2139 = vrot.slane %v1631, 1
      %v2140 = vrot.slane %v1632, 1
      %v2141 = vsel %vm2068, %v2139, %v2140
      %v2142 = vrot.slane %v1681, 1
      %v2143 = vsel %vm2068, %v2140, %v2142
      %v2144 = vrot.slane %v1633, 1
      %v2145 = vrot.slane %v1634, 1
      %v2146 = vsel %vm2068, %v2144, %v2145
      %v2147 = vrot.slane %v1682, 1
      %v2148 = vsel %vm2068, %v2145, %v2147
      %2149 = vrot.lane.b32.xlu0 %v2071, 6
      %v2150 = vpop.permute.xlu0 %2149
      %2151 = vrot.lane.b32.xlu0 %v2073, 6
      %v2152 = vpop.permute.xlu0 %2151
      %2153 = vrot.lane.b32.xlu0 %v2076, 6
      %v2154 = vpop.permute.xlu0 %2153
      %2155 = vrot.lane.b32.xlu0 %v2078, 6
      %v2156 = vpop.permute.xlu0 %2155
      %2157 = vrot.lane.b32.xlu0 %v2081, 6
      %v2158 = vpop.permute.xlu0 %2157
      %2159 = vrot.lane.b32.xlu0 %v2083, 6
      %v2160 = vpop.permute.xlu0 %2159
      %2161 = vrot.lane.b32.xlu0 %v2086, 6
      %v2162 = vpop.permute.xlu0 %2161
      %2163 = vrot.lane.b32.xlu0 %v2088, 6
      %v2164 = vpop.permute.xlu0 %2163
      %2165 = vrot.lane.b32.xlu0 %v2091, 6
      %v2166 = vpop.permute.xlu0 %2165
      %2167 = vrot.lane.b32.xlu0 %v2093, 6
      %v2168 = vpop.permute.xlu0 %2167
      %2169 = vrot.lane.b32.xlu0 %v2096, 6
      %v2170 = vpop.permute.xlu0 %2169
      %2171 = vrot.lane.b32.xlu0 %v2098, 6
      %v2172 = vpop.permute.xlu0 %2171
      %2173 = vrot.lane.b32.xlu0 %v2101, 6
      %v2174 = vpop.permute.xlu0 %2173
      %2175 = vrot.lane.b32.xlu0 %v2103, 6
      %v2176 = vpop.permute.xlu0 %2175
      %2177 = vrot.lane.b32.xlu0 %v2106, 6
      %v2178 = vpop.permute.xlu0 %2177
      %2179 = vrot.lane.b32.xlu0 %v2108, 6
      %v2180 = vpop.permute.xlu0 %2179
      %2181 = vrot.lane.b32.xlu0 %v2111, 6
      %v2182 = vpop.permute.xlu0 %2181
      %2183 = vrot.lane.b32.xlu0 %v2113, 6
      %v2184 = vpop.permute.xlu0 %2183
      %2185 = vrot.lane.b32.xlu0 %v2116, 6
      %v2186 = vpop.permute.xlu0 %2185
      %2187 = vrot.lane.b32.xlu0 %v2118, 6
      %v2188 = vpop.permute.xlu0 %2187
      %2189 = vrot.lane.b32.xlu0 %v2121, 6
      %v2190 = vpop.permute.xlu0 %2189
      %2191 = vrot.lane.b32.xlu0 %v2123, 6
      %v2192 = vpop.permute.xlu0 %2191
      %2193 = vrot.lane.b32.xlu0 %v2126, 6
      %v2194 = vpop.permute.xlu0 %2193
      %2195 = vrot.lane.b32.xlu0 %v2128, 6
      %v2196 = vpop.permute.xlu0 %2195
      %2197 = vrot.lane.b32.xlu0 %v2131, 6
      %v2198 = vpop.permute.xlu0 %2197
      %2199 = vrot.lane.b32.xlu0 %v2133, 6
      %v2200 = vpop.permute.xlu0 %2199
      %2201 = vrot.lane.b32.xlu0 %v2136, 6
      %v2202 = vpop.permute.xlu0 %2201
      %2203 = vrot.lane.b32.xlu0 %v2138, 6
      %v2204 = vpop.permute.xlu0 %2203
      %2205 = vrot.lane.b32.xlu0 %v2141, 6
      %v2206 = vpop.permute.xlu0 %2205
      %2207 = vrot.lane.b32.xlu0 %v2143, 6
      %v2208 = vpop.permute.xlu0 %2207
      %2209 = vrot.lane.b32.xlu0 %v2146, 6
      %v2210 = vpop.permute.xlu0 %2209
      %2211 = vrot.lane.b32.xlu0 %v2148, 6
      %v2212 = vpop.permute.xlu0 %2211
      %vm2213 = vsmask.f32 6400
      %v2214 = vrot.slane %v1685, 1
      %v2215 = vrot.slane %v1687, 2
      %v2216 = vor.u32 %v2214, %v2215
      %v2217 = vrot.slane %v1696, 1
      %v2218 = vrot.slane %v1692, 2
      %v2219 = vor.u32 %v2217, %v2218
      %v2220 = vsel %vm2213, %v2216, %v2219
      %v2221 = vshrl.u32 %v1667, 16
      %v2223 = vrot.slane %v2221, 1
      %v2224 = vrot.slane %v1700, 2
      %v2225 = vor.u32 %v2223, %v2224
      %v2226 = vsel %vm2213, %v2219, %v2225
      %v2227 = vrot.slane %v1705, 1
      %v2228 = vrot.slane %v1707, 2
      %v2229 = vor.u32 %v2227, %v2228
      %v2230 = vrot.slane %v1716, 1
      %v2231 = vrot.slane %v1712, 2
      %v2232 = vor.u32 %v2230, %v2231
      %v2233 = vsel %vm2213, %v2229, %v2232
      %v2234 = vshrl.u32 %v1668, 16
      %v2236 = vrot.slane %v2234, 1
      %v2237 = vrot.slane %v1720, 2
      %v2238 = vor.u32 %v2236, %v2237
      %v2239 = vsel %vm2213, %v2232, %v2238
      %v2240 = vrot.slane %v1725, 1
      %v2241 = vrot.slane %v1727, 2
      %v2242 = vor.u32 %v2240, %v2241
      %v2243 = vrot.slane %v1736, 1
      %v2244 = vrot.slane %v1732, 2
      %v2245 = vor.u32 %v2243, %v2244
      %v2246 = vsel %vm2213, %v2242, %v2245
      %v2247 = vshrl.u32 %v1669, 16
      %v2249 = vrot.slane %v2247, 1
      %v2250 = vrot.slane %v1740, 2
      %v2251 = vor.u32 %v2249, %v2250
      %v2252 = vsel %vm2213, %v2245, %v2251
      %v2253 = vrot.slane %v1745, 1
      %v2254 = vrot.slane %v1747, 2
      %v2255 = vor.u32 %v2253, %v2254
      %v2256 = vrot.slane %v1756, 1
      %v2257 = vrot.slane %v1752, 2
      %v2258 = vor.u32 %v2256, %v2257
      %v2259 = vsel %vm2213, %v2255, %v2258
      %v2260 = vshrl.u32 %v1670, 16
      %v2262 = vrot.slane %v2260, 1
      %v2263 = vrot.slane %v1760, 2
      %v2264 = vor.u32 %v2262, %v2263
      %v2265 = vsel %vm2213, %v2258, %v2264
      %v2266 = vrot.slane %v1765, 1
      %v2267 = vrot.slane %v1767, 2
      %v2268 = vor.u32 %v2266, %v2267
      %v2269 = vrot.slane %v1776, 1
      %v2270 = vrot.slane %v1772, 2
      %v2271 = vor.u32 %v2269, %v2270
      %v2272 = vsel %vm2213, %v2268, %v2271
      %v2273 = vshrl.u32 %v1671, 16
      %v2275 = vrot.slane %v2273, 1
      %v2276 = vrot.slane %v1780, 2
      %v2277 = vor.u32 %v2275, %v2276
      %v2278 = vsel %vm2213, %v2271, %v2277
      %v2279 = vrot.slane %v1785, 1
      %v2280 = vrot.slane %v1787, 2
      %v2281 = vor.u32 %v2279, %v2280
      %v2282 = vrot.slane %v1796, 1
      %v2283 = vrot.slane %v1792, 2
      %v2284 = vor.u32 %v2282, %v2283
      %v2285 = vsel %vm2213, %v2281, %v2284
      %v2286 = vshrl.u32 %v1672, 16
      %v2288 = vrot.slane %v2286, 1
      %v2289 = vrot.slane %v1800, 2
      %v2290 = vor.u32 %v2288, %v2289
      %v2291 = vsel %vm2213, %v2284, %v2290
      %v2292 = vrot.slane %v1805, 1
      %v2293 = vrot.slane %v1807, 2
      %v2294 = vor.u32 %v2292, %v2293
      %v2295 = vrot.slane %v1816, 1
      %v2296 = vrot.slane %v1812, 2
      %v2297 = vor.u32 %v2295, %v2296
      %v2298 = vsel %vm2213, %v2294, %v2297
      %v2299 = vshrl.u32 %v1673, 16
      %v2301 = vrot.slane %v2299, 1
      %v2302 = vrot.slane %v1820, 2
      %v2303 = vor.u32 %v2301, %v2302
      %v2304 = vsel %vm2213, %v2297, %v2303
      %v2305 = vrot.slane %v1825, 1
      %v2306 = vrot.slane %v1827, 2
      %v2307 = vor.u32 %v2305, %v2306
      %v2308 = vrot.slane %v1836, 1
      %v2309 = vrot.slane %v1832, 2
      %v2310 = vor.u32 %v2308, %v2309
      %v2311 = vsel %vm2213, %v2307, %v2310
      %v2312 = vshrl.u32 %v1674, 16
      %v2314 = vrot.slane %v2312, 1
      %v2315 = vrot.slane %v1840, 2
      %v2316 = vor.u32 %v2314, %v2315
      %v2317 = vsel %vm2213, %v2310, %v2316
      %v2318 = vrot.slane %v1845, 1
      %v2319 = vrot.slane %v1847, 2
      %v2320 = vor.u32 %v2318, %v2319
      %v2321 = vrot.slane %v1856, 1
      %v2322 = vrot.slane %v1852, 2
      %v2323 = vor.u32 %v2321, %v2322
      %v2324 = vsel %vm2213, %v2320, %v2323
      %v2325 = vshrl.u32 %v1675, 16
      %v2327 = vrot.slane %v2325, 1
      %v2328 = vrot.slane %v1860, 2
      %v2329 = vor.u32 %v2327, %v2328
      %v2330 = vsel %vm2213, %v2323, %v2329
      %v2331 = vrot.slane %v1865, 1
      %v2332 = vrot.slane %v1867, 2
      %v2333 = vor.u32 %v2331, %v2332
      %v2334 = vrot.slane %v1876, 1
      %v2335 = vrot.slane %v1872, 2
      %v2336 = vor.u32 %v2334, %v2335
      %v2337 = vsel %vm2213, %v2333, %v2336
      %v2338 = vshrl.u32 %v1676, 16
      %v2340 = vrot.slane %v2338, 1
      %v2341 = vrot.slane %v1880, 2
      %v2342 = vor.u32 %v2340, %v2341
      %v2343 = vsel %vm2213, %v2336, %v2342
      %v2344 = vrot.slane %v1885, 1
      %v2345 = vrot.slane %v1887, 2
      %v2346 = vor.u32 %v2344, %v2345
      %v2347 = vrot.slane %v1896, 1
      %v2348 = vrot.slane %v1892, 2
      %v2349 = vor.u32 %v2347, %v2348
      %v2350 = vsel %vm2213, %v2346, %v2349
      %v2351 = vshrl.u32 %v1677, 16
      %v2353 = vrot.slane %v2351, 1
      %v2354 = vrot.slane %v1900, 2
      %v2355 = vor.u32 %v2353, %v2354
      %v2356 = vsel %vm2213, %v2349, %v2355
      %v2357 = vrot.slane %v1905, 1
      %v2358 = vrot.slane %v1907, 2
      %v2359 = vor.u32 %v2357, %v2358
      %v2360 = vrot.slane %v1916, 1
      %v2361 = vrot.slane %v1912, 2
      %v2362 = vor.u32 %v2360, %v2361
      %v2363 = vsel %vm2213, %v2359, %v2362
      %v2364 = vshrl.u32 %v1678, 16
      %v2366 = vrot.slane %v2364, 1
      %v2367 = vrot.slane %v1920, 2
      %v2368 = vor.u32 %v2366, %v2367
      %v2369 = vsel %vm2213, %v2362, %v2368
      %v2370 = vrot.slane %v1925, 1
      %v2371 = vrot.slane %v1927, 2
      %v2372 = vor.u32 %v2370, %v2371
      %v2373 = vrot.slane %v1936, 1
      %v2374 = vrot.slane %v1932, 2
      %v2375 = vor.u32 %v2373, %v2374
      %v2376 = vsel %vm2213, %v2372, %v2375
      %v2377 = vshrl.u32 %v1679, 16
      %v2379 = vrot.slane %v2377, 1
      %v2380 = vrot.slane %v1940, 2
      %v2381 = vor.u32 %v2379, %v2380
      %v2382 = vsel %vm2213, %v2375, %v2381
      %v2383 = vrot.slane %v1945, 1
      %v2384 = vrot.slane %v1947, 2
      %v2385 = vor.u32 %v2383, %v2384
      %v2386 = vrot.slane %v1956, 1
      %v2387 = vrot.slane %v1952, 2
      %v2388 = vor.u32 %v2386, %v2387
      %v2389 = vsel %vm2213, %v2385, %v2388
      %v2390 = vshrl.u32 %v1680, 16
      %v2392 = vrot.slane %v2390, 1
      %v2393 = vrot.slane %v1960, 2
      %v2394 = vor.u32 %v2392, %v2393
      %v2395 = vsel %vm2213, %v2388, %v2394
      %v2396 = vrot.slane %v1965, 1
      %v2397 = vrot.slane %v1967, 2
      %v2398 = vor.u32 %v2396, %v2397
      %v2399 = vrot.slane %v1976, 1
      %v2400 = vrot.slane %v1972, 2
      %v2401 = vor.u32 %v2399, %v2400
      %v2402 = vsel %vm2213, %v2398, %v2401
      %v2403 = vshrl.u32 %v1681, 16
      %v2405 = vrot.slane %v2403, 1
      %v2406 = vrot.slane %v1980, 2
      %v2407 = vor.u32 %v2405, %v2406
      %v2408 = vsel %vm2213, %v2401, %v2407
      %v2409 = vrot.slane %v1985, 1
      %v2410 = vrot.slane %v1987, 2
      %v2411 = vor.u32 %v2409, %v2410
      %v2412 = vrot.slane %v1996, 1
      %v2413 = vrot.slane %v1992, 2
      %v2414 = vor.u32 %v2412, %v2413
      %v2415 = vsel %vm2213, %v2411, %v2414
      %v2416 = vshrl.u32 %v1682, 16
      %v2418 = vrot.slane %v2416, 1
      %v2419 = vrot.slane %v2000, 2
      %v2420 = vor.u32 %v2418, %v2419
      %v2421 = vsel %vm2213, %v2414, %v2420
      %2422 = vrot.lane.b32.xlu0 %v2220, 9
      %v2423 = vpop.permute.xlu0 %2422
      %2424 = vrot.lane.b32.xlu0 %v2226, 9
      %v2425 = vpop.permute.xlu0 %2424
      %2426 = vrot.lane.b32.xlu0 %v2233, 9
      %v2427 = vpop.permute.xlu0 %2426
      %2428 = vrot.lane.b32.xlu0 %v2239, 9
      %v2429 = vpop.permute.xlu0 %2428
      %2430 = vrot.lane.b32.xlu0 %v2246, 9
      %v2431 = vpop.permute.xlu0 %2430
      %2432 = vrot.lane.b32.xlu0 %v2252, 9
      %v2433 = vpop.permute.xlu0 %2432
      %2434 = vrot.lane.b32.xlu0 %v2259, 9
      %v2435 = vpop.permute.xlu0 %2434
      %2436 = vrot.lane.b32.xlu0 %v2265, 9
      %v2437 = vpop.permute.xlu0 %2436
      %2438 = vrot.lane.b32.xlu0 %v2272, 9
      %v2439 = vpop.permute.xlu0 %2438
      %2440 = vrot.lane.b32.xlu0 %v2278, 9
      %v2441 = vpop.permute.xlu0 %2440
      %2442 = vrot.lane.b32.xlu0 %v2285, 9
      %v2443 = vpop.permute.xlu0 %2442
      %2444 = vrot.lane.b32.xlu0 %v2291, 9
      %v2445 = vpop.permute.xlu0 %2444
      %2446 = vrot.lane.b32.xlu0 %v2298, 9
      %v2447 = vpop.permute.xlu0 %2446
      %2448 = vrot.lane.b32.xlu0 %v2304, 9
      %v2449 = vpop.permute.xlu0 %2448
      %2450 = vrot.lane.b32.xlu0 %v2311, 9
      %v2451 = vpop.permute.xlu0 %2450
      %2452 = vrot.lane.b32.xlu0 %v2317, 9
      %v2453 = vpop.permute.xlu0 %2452
      %2454 = vrot.lane.b32.xlu0 %v2324, 9
      %v2455 = vpop.permute.xlu0 %2454
      %2456 = vrot.lane.b32.xlu0 %v2330, 9
      %v2457 = vpop.permute.xlu0 %2456
      %2458 = vrot.lane.b32.xlu0 %v2337, 9
      %v2459 = vpop.permute.xlu0 %2458
      %2460 = vrot.lane.b32.xlu0 %v2343, 9
      %v2461 = vpop.permute.xlu0 %2460
      %2462 = vrot.lane.b32.xlu0 %v2350, 9
      %v2463 = vpop.permute.xlu0 %2462
      %2464 = vrot.lane.b32.xlu0 %v2356, 9
      %v2465 = vpop.permute.xlu0 %2464
      %2466 = vrot.lane.b32.xlu0 %v2363, 9
      %v2467 = vpop.permute.xlu0 %2466
      %2468 = vrot.lane.b32.xlu0 %v2369, 9
      %v2469 = vpop.permute.xlu0 %2468
      %2470 = vrot.lane.b32.xlu0 %v2376, 9
      %v2471 = vpop.permute.xlu0 %2470
      %2472 = vrot.lane.b32.xlu0 %v2382, 9
      %v2473 = vpop.permute.xlu0 %2472
      %2474 = vrot.lane.b32.xlu0 %v2389, 9
      %v2475 = vpop.permute.xlu0 %2474
      %2476 = vrot.lane.b32.xlu0 %v2395, 9
      %v2477 = vpop.permute.xlu0 %2476
      %2478 = vrot.lane.b32.xlu0 %v2402, 9
      %v2479 = vpop.permute.xlu0 %2478
      %2480 = vrot.lane.b32.xlu0 %v2408, 9
      %v2481 = vpop.permute.xlu0 %2480
      %2482 = vrot.lane.b32.xlu0 %v2415, 9
      %v2483 = vpop.permute.xlu0 %2482
      %2484 = vrot.lane.b32.xlu0 %v2421, 9
      %v2485 = vpop.permute.xlu0 %2484
      %vm2486 = vcmask 1045504
      %v2487 = vrot.slane %v1603, 2
      %v2488 = vrot.slane %v1604, 2
      %v2489 = vsel %vm2486, %v2487, %v2488
      %v2490 = vrot.slane %v1667, 2
      %v2491 = vsel %vm2486, %v2488, %v2490
      %v2492 = vrot.slane %v1605, 2
      %v2493 = vrot.slane %v1606, 2
      %v2494 = vsel %vm2486, %v2492, %v2493
      %v2495 = vrot.slane %v1668, 2
      %v2496 = vsel %vm2486, %v2493, %v2495
      %v2497 = vrot.slane %v1607, 2
      %v2498 = vrot.slane %v1608, 2
      %v2499 = vsel %vm2486, %v2497, %v2498
      %v2500 = vrot.slane %v1669, 2
      %v2501 = vsel %vm2486, %v2498, %v2500
      %v2502 = vrot.slane %v1609, 2
      %v2503 = vrot.slane %v1610, 2
      %v2504 = vsel %vm2486, %v2502, %v2503
      %v2505 = vrot.slane %v1670, 2
      %v2506 = vsel %vm2486, %v2503, %v2505
      %v2507 = vrot.slane %v1611, 2
      %v2508 = vrot.slane %v1612, 2
      %v2509 = vsel %vm2486, %v2507, %v2508
      %v2510 = vrot.slane %v1671, 2
      %v2511 = vsel %vm2486, %v2508, %v2510
      %v2512 = vrot.slane %v1613, 2
      %v2513 = vrot.slane %v1614, 2
      %v2514 = vsel %vm2486, %v2512, %v2513
      %v2515 = vrot.slane %v1672, 2
      %v2516 = vsel %vm2486, %v2513, %v2515
      %v2517 = vrot.slane %v1615, 2
      %v2518 = vrot.slane %v1616, 2
      %v2519 = vsel %vm2486, %v2517, %v2518
      %v2520 = vrot.slane %v1673, 2
      %v2521 = vsel %vm2486, %v2518, %v2520
      %v2522 = vrot.slane %v1617, 2
      %v2523 = vrot.slane %v1618, 2
      %v2524 = vsel %vm2486, %v2522, %v2523
      %v2525 = vrot.slane %v1674, 2
      %v2526 = vsel %vm2486, %v2523, %v2525
      %v2527 = vrot.slane %v1619, 2
      %v2528 = vrot.slane %v1620, 2
      %v2529 = vsel %vm2486, %v2527, %v2528
      %v2530 = vrot.slane %v1675, 2
      %v2531 = vsel %vm2486, %v2528, %v2530
      %v2532 = vrot.slane %v1621, 2
      %v2533 = vrot.slane %v1622, 2
      %v2534 = vsel %vm2486, %v2532, %v2533
      %v2535 = vrot.slane %v1676, 2
      %v2536 = vsel %vm2486, %v2533, %v2535
      %v2537 = vrot.slane %v1623, 2
      %v2538 = vrot.slane %v1624, 2
      %v2539 = vsel %vm2486, %v2537, %v2538
      %v2540 = vrot.slane %v1677, 2
      %v2541 = vsel %vm2486, %v2538, %v2540
      %v2542 = vrot.slane %v1625, 2
      %v2543 = vrot.slane %v1626, 2
      %v2544 = vsel %vm2486, %v2542, %v2543
      %v2545 = vrot.slane %v1678, 2
      %v2546 = vsel %vm2486, %v2543, %v2545
      %v2547 = vrot.slane %v1627, 2
      %v2548 = vrot.slane %v1628, 2
      %v2549 = vsel %vm2486, %v2547, %v2548
      %v2550 = vrot.slane %v1679, 2
      %v2551 = vsel %vm2486, %v2548, %v2550
      %v2552 = vrot.slane %v1629, 2
      %v2553 = vrot.slane %v1630, 2
      %v2554 = vsel %vm2486, %v2552, %v2553
      %v2555 = vrot.slane %v1680, 2
      %v2556 = vsel %vm2486, %v2553, %v2555
      %v2557 = vrot.slane %v1631, 2
      %v2558 = vrot.slane %v1632, 2
      %v2559 = vsel %vm2486, %v2557, %v2558
      %v2560 = vrot.slane %v1681, 2
      %v2561 = vsel %vm2486, %v2558, %v2560
      %v2562 = vrot.slane %v1633, 2
      %v2563 = vrot.slane %v1634, 2
      %v2564 = vsel %vm2486, %v2562, %v2563
      %v2565 = vrot.slane %v1682, 2
      %v2566 = vsel %vm2486, %v2563, %v2565
      %2567 = vrot.lane.b32.xlu0 %v2489, 12
      %v2568 = vpop.permute.xlu0 %2567
      %2569 = vrot.lane.b32.xlu0 %v2491, 12
      %v2570 = vpop.permute.xlu0 %2569
      %2571 = vrot.lane.b32.xlu0 %v2494, 12
      %v2572 = vpop.permute.xlu0 %2571
      %2573 = vrot.lane.b32.xlu0 %v2496, 12
      %v2574 = vpop.permute.xlu0 %2573
      %2575 = vrot.lane.b32.xlu0 %v2499, 12
      %v2576 = vpop.permute.xlu0 %2575
      %2577 = vrot.lane.b32.xlu0 %v2501, 12
      %v2578 = vpop.permute.xlu0 %2577
      %2579 = vrot.lane.b32.xlu0 %v2504, 12
      %v2580 = vpop.permute.xlu0 %2579
      %2581 = vrot.lane.b32.xlu0 %v2506, 12
      %v2582 = vpop.permute.xlu0 %2581
      %2583 = vrot.lane.b32.xlu0 %v2509, 12
      %v2584 = vpop.permute.xlu0 %2583
      %2585 = vrot.lane.b32.xlu0 %v2511, 12
      %v2586 = vpop.permute.xlu0 %2585
      %2587 = vrot.lane.b32.xlu0 %v2514, 12
      %v2588 = vpop.permute.xlu0 %2587
      %2589 = vrot.lane.b32.xlu0 %v2516, 12
      %v2590 = vpop.permute.xlu0 %2589
      %2591 = vrot.lane.b32.xlu0 %v2519, 12
      %v2592 = vpop.permute.xlu0 %2591
      %2593 = vrot.lane.b32.xlu0 %v2521, 12
      %v2594 = vpop.permute.xlu0 %2593
      %2595 = vrot.lane.b32.xlu0 %v2524, 12
      %v2596 = vpop.permute.xlu0 %2595
      %2597 = vrot.lane.b32.xlu0 %v2526, 12
      %v2598 = vpop.permute.xlu0 %2597
      %2599 = vrot.lane.b32.xlu0 %v2529, 12
      %v2600 = vpop.permute.xlu0 %2599
      %2601 = vrot.lane.b32.xlu0 %v2531, 12
      %v2602 = vpop.permute.xlu0 %2601
      %2603 = vrot.lane.b32.xlu0 %v2534, 12
      %v2604 = vpop.permute.xlu0 %2603
      %2605 = vrot.lane.b32.xlu0 %v2536, 12
      %v2606 = vpop.permute.xlu0 %2605
      %2607 = vrot.lane.b32.xlu0 %v2539, 12
      %v2608 = vpop.permute.xlu0 %2607
      %2609 = vrot.lane.b32.xlu0 %v2541, 12
      %v2610 = vpop.permute.xlu0 %2609
      %2611 = vrot.lane.b32.xlu0 %v2544, 12
      %v2612 = vpop.permute.xlu0 %2611
      %2613 = vrot.lane.b32.xlu0 %v2546, 12
      %v2614 = vpop.permute.xlu0 %2613
      %2615 = vrot.lane.b32.xlu0 %v2549, 12
      %v2616 = vpop.permute.xlu0 %2615
      %2617 = vrot.lane.b32.xlu0 %v2551, 12
      %v2618 = vpop.permute.xlu0 %2617
      %2619 = vrot.lane.b32.xlu0 %v2554, 12
      %v2620 = vpop.permute.xlu0 %2619
      %2621 = vrot.lane.b32.xlu0 %v2556, 12
      %v2622 = vpop.permute.xlu0 %2621
      %2623 = vrot.lane.b32.xlu0 %v2559, 12
      %v2624 = vpop.permute.xlu0 %2623
      %2625 = vrot.lane.b32.xlu0 %v2561, 12
      %v2626 = vpop.permute.xlu0 %2625
      %2627 = vrot.lane.b32.xlu0 %v2564, 12
      %v2628 = vpop.permute.xlu0 %2627
      %2629 = vrot.lane.b32.xlu0 %v2566, 12
      %v2630 = vpop.permute.xlu0 %2629
      %v2635 = vunpack.c.l.b16 %v1455
      %v2636 = vunpack.c.l.b16 %v1456
      %v2637 = vunpack.c.l.b16 %v1457
      %v2638 = vunpack.c.l.b16 %v1458
      %v2639 = vpack.c.b16 %v2636, %v2635
      %v2640 = vpack.c.b16 %v2638, %v2637
      %2641 = vrot.lane.b32.xlu0 %v1605, 15
      %v2642 = vpop.permute.xlu0 %2641
      %2643 = vrot.lane.b32.xlu0 %v1606, 15
      %v2644 = vpop.permute.xlu0 %2643
      %2645 = vrot.lane.b32.xlu0 %v1607, 15
      %v2646 = vpop.permute.xlu0 %2645
      %2647 = vrot.lane.b32.xlu0 %v1608, 15
      %v2648 = vpop.permute.xlu0 %2647
      %2649 = vrot.lane.b32.xlu0 %v1609, 15
      %v2650 = vpop.permute.xlu0 %2649
      %2651 = vrot.lane.b32.xlu0 %v1610, 15
      %v2652 = vpop.permute.xlu0 %2651
      %2653 = vrot.lane.b32.xlu0 %v1611, 15
      %v2654 = vpop.permute.xlu0 %2653
      %2655 = vrot.lane.b32.xlu0 %v1612, 15
      %v2656 = vpop.permute.xlu0 %2655
      %2657 = vrot.lane.b32.xlu0 %v1613, 15
      %v2658 = vpop.permute.xlu0 %2657
      %2659 = vrot.lane.b32.xlu0 %v1614, 15
      %v2660 = vpop.permute.xlu0 %2659
      %2661 = vrot.lane.b32.xlu0 %v1615, 15
      %v2662 = vpop.permute.xlu0 %2661
      %2663 = vrot.lane.b32.xlu0 %v1616, 15
      %v2664 = vpop.permute.xlu0 %2663
      %2665 = vrot.lane.b32.xlu0 %v1617, 15
      %v2666 = vpop.permute.xlu0 %2665
      %2667 = vrot.lane.b32.xlu0 %v1618, 15
      %v2668 = vpop.permute.xlu0 %2667
      %2669 = vrot.lane.b32.xlu0 %v1619, 15
      %v2670 = vpop.permute.xlu0 %2669
      %2671 = vrot.lane.b32.xlu0 %v1620, 15
      %v2672 = vpop.permute.xlu0 %2671
      %2673 = vrot.lane.b32.xlu0 %v1621, 15
      %v2674 = vpop.permute.xlu0 %2673
      %2675 = vrot.lane.b32.xlu0 %v1622, 15
      %v2676 = vpop.permute.xlu0 %2675
      %2677 = vrot.lane.b32.xlu0 %v1623, 15
      %v2678 = vpop.permute.xlu0 %2677
      %2679 = vrot.lane.b32.xlu0 %v1624, 15
      %v2680 = vpop.permute.xlu0 %2679
      %2681 = vrot.lane.b32.xlu0 %v1625, 15
      %v2682 = vpop.permute.xlu0 %2681
      %2683 = vrot.lane.b32.xlu0 %v1626, 15
      %v2684 = vpop.permute.xlu0 %2683
      %2685 = vrot.lane.b32.xlu0 %v1627, 15
      %v2686 = vpop.permute.xlu0 %2685
      %2687 = vrot.lane.b32.xlu0 %v1628, 15
      %v2688 = vpop.permute.xlu0 %2687
      %2689 = vrot.lane.b32.xlu0 %v1629, 15
      %v2690 = vpop.permute.xlu0 %2689
      %2691 = vrot.lane.b32.xlu0 %v1630, 15
      %v2692 = vpop.permute.xlu0 %2691
      %2693 = vrot.lane.b32.xlu0 %v1631, 15
      %v2694 = vpop.permute.xlu0 %2693
      %2695 = vrot.lane.b32.xlu0 %v1632, 15
      %v2696 = vpop.permute.xlu0 %2695
      %2697 = vrot.lane.b32.xlu0 %v1633, 15
      %v2698 = vpop.permute.xlu0 %2697
      %2699 = vrot.lane.b32.xlu0 %v1634, 15
      %v2700 = vpop.permute.xlu0 %2699
      %2701 = vrot.lane.b32.xlu0 %v2639, 15
      %v2702 = vpop.permute.xlu0 %2701
      %2703 = vrot.lane.b32.xlu0 %v2640, 15
      %v2704 = vpop.permute.xlu0 %2703
      %v2706 = vunpack.c.l.b16 %v1459
      %v2707 = vpack.c.b16 %v2706, %v2706
      %v2709 = vshrl.u32 %v2639, 16
      %v2711 = vshll.u32 %v2639, 16
      %v2713 = vrot.slane %v2711, 1
      %v2714 = vor.u32 %v2709, %v2713
      %v2716 = vshll.u32 %v2640, 16
      %v2718 = vrot.slane %v2716, 1
      %v2719 = vsel %vm1683, %v2714, %v2718
      %v2720 = vshrl.u32 %v2640, 16
      %v2722 = vor.u32 %v2720, %v2718
      %v2724 = vshll.u32 %v2707, 16
      %v2726 = vrot.slane %v2724, 1
      %v2727 = vsel %vm1683, %v2722, %v2726
      %2728 = vrot.lane.b32.xlu0 %v1715, 18
      %v2729 = vpop.permute.xlu0 %2728
      %2730 = vrot.lane.b32.xlu0 %v1723, 18
      %v2731 = vpop.permute.xlu0 %2730
      %2732 = vrot.lane.b32.xlu0 %v1735, 18
      %v2733 = vpop.permute.xlu0 %2732
      %2734 = vrot.lane.b32.xlu0 %v1743, 18
      %v2735 = vpop.permute.xlu0 %2734
      %2736 = vrot.lane.b32.xlu0 %v1755, 18
      %v2737 = vpop.permute.xlu0 %2736
      %2738 = vrot.lane.b32.xlu0 %v1763, 18
      %v2739 = vpop.permute.xlu0 %2738
      %2740 = vrot.lane.b32.xlu0 %v1775, 18
      %v2741 = vpop.permute.xlu0 %2740
      %2742 = vrot.lane.b32.xlu0 %v1783, 18
      %v2743 = vpop.permute.xlu0 %2742
      %2744 = vrot.lane.b32.xlu0 %v1795, 18
      %v2745 = vpop.permute.xlu0 %2744
      %2746 = vrot.lane.b32.xlu0 %v1803, 18
      %v2747 = vpop.permute.xlu0 %2746
      %2748 = vrot.lane.b32.xlu0 %v1815, 18
      %v2749 = vpop.permute.xlu0 %2748
      %2750 = vrot.lane.b32.xlu0 %v1823, 18
      %v2751 = vpop.permute.xlu0 %2750
      %2752 = vrot.lane.b32.xlu0 %v1835, 18
      %v2753 = vpop.permute.xlu0 %2752
      %2754 = vrot.lane.b32.xlu0 %v1843, 18
      %v2755 = vpop.permute.xlu0 %2754
      %2756 = vrot.lane.b32.xlu0 %v1855, 18
      %v2757 = vpop.permute.xlu0 %2756
      %2758 = vrot.lane.b32.xlu0 %v1863, 18
      %v2759 = vpop.permute.xlu0 %2758
      %2760 = vrot.lane.b32.xlu0 %v1875, 18
      %v2761 = vpop.permute.xlu0 %2760
      %2762 = vrot.lane.b32.xlu0 %v1883, 18
      %v2763 = vpop.permute.xlu0 %2762
      %2764 = vrot.lane.b32.xlu0 %v1895, 18
      %v2765 = vpop.permute.xlu0 %2764
      %2766 = vrot.lane.b32.xlu0 %v1903, 18
      %v2767 = vpop.permute.xlu0 %2766
      %2768 = vrot.lane.b32.xlu0 %v1915, 18
      %v2769 = vpop.permute.xlu0 %2768
      %2770 = vrot.lane.b32.xlu0 %v1923, 18
      %v2771 = vpop.permute.xlu0 %2770
      %2772 = vrot.lane.b32.xlu0 %v1935, 18
      %v2773 = vpop.permute.xlu0 %2772
      %2774 = vrot.lane.b32.xlu0 %v1943, 18
      %v2775 = vpop.permute.xlu0 %2774
      %2776 = vrot.lane.b32.xlu0 %v1955, 18
      %v2777 = vpop.permute.xlu0 %2776
      %2778 = vrot.lane.b32.xlu0 %v1963, 18
      %v2779 = vpop.permute.xlu0 %2778
      %2780 = vrot.lane.b32.xlu0 %v1975, 18
      %v2781 = vpop.permute.xlu0 %2780
      %2782 = vrot.lane.b32.xlu0 %v1983, 18
      %v2783 = vpop.permute.xlu0 %2782
      %2784 = vrot.lane.b32.xlu0 %v1995, 18
      %v2785 = vpop.permute.xlu0 %2784
      %2786 = vrot.lane.b32.xlu0 %v2003, 18
      %v2787 = vpop.permute.xlu0 %2786
      %2788 = vrot.lane.b32.xlu0 %v2719, 18
      %v2789 = vpop.permute.xlu0 %2788
      %2790 = vrot.lane.b32.xlu0 %v2727, 18
      %v2791 = vpop.permute.xlu0 %2790
      %v2792 = vrot.slane %v2639, 1
      %v2793 = vrot.slane %v2640, 1
      %v2794 = vsel %vm2068, %v2792, %v2793
      %v2795 = vrot.slane %v2707, 1
      %v2796 = vsel %vm2068, %v2793, %v2795
      %2797 = vrot.lane.b32.xlu0 %v2076, 21
      %v2798 = vpop.permute.xlu0 %2797
      %2799 = vrot.lane.b32.xlu0 %v2078, 21
      %v2800 = vpop.permute.xlu0 %2799
      %2801 = vrot.lane.b32.xlu0 %v2081, 21
      %v2802 = vpop.permute.xlu0 %2801
      %2803 = vrot.lane.b32.xlu0 %v2083, 21
      %v2804 = vpop.permute.xlu0 %2803
      %2805 = vrot.lane.b32.xlu0 %v2086, 21
      %v2806 = vpop.permute.xlu0 %2805
      %2807 = vrot.lane.b32.xlu0 %v2088, 21
      %v2808 = vpop.permute.xlu0 %2807
      %2809 = vrot.lane.b32.xlu0 %v2091, 21
      %v2810 = vpop.permute.xlu0 %2809
      %2811 = vrot.lane.b32.xlu0 %v2093, 21
      %v2812 = vpop.permute.xlu0 %2811
      %2813 = vrot.lane.b32.xlu0 %v2096, 21
      %v2814 = vpop.permute.xlu0 %2813
      %2815 = vrot.lane.b32.xlu0 %v2098, 21
      %v2816 = vpop.permute.xlu0 %2815
      %2817 = vrot.lane.b32.xlu0 %v2101, 21
      %v2818 = vpop.permute.xlu0 %2817
      %2819 = vrot.lane.b32.xlu0 %v2103, 21
      %v2820 = vpop.permute.xlu0 %2819
      %2821 = vrot.lane.b32.xlu0 %v2106, 21
      %v2822 = vpop.permute.xlu0 %2821
      %2823 = vrot.lane.b32.xlu0 %v2108, 21
      %v2824 = vpop.permute.xlu0 %2823
      %2825 = vrot.lane.b32.xlu0 %v2111, 21
      %v2826 = vpop.permute.xlu0 %2825
      %2827 = vrot.lane.b32.xlu0 %v2113, 21
      %v2828 = vpop.permute.xlu0 %2827
      %2829 = vrot.lane.b32.xlu0 %v2116, 21
      %v2830 = vpop.permute.xlu0 %2829
      %2831 = vrot.lane.b32.xlu0 %v2118, 21
      %v2832 = vpop.permute.xlu0 %2831
      %2833 = vrot.lane.b32.xlu0 %v2121, 21
      %v2834 = vpop.permute.xlu0 %2833
      %2835 = vrot.lane.b32.xlu0 %v2123, 21
      %v2836 = vpop.permute.xlu0 %2835
      %2837 = vrot.lane.b32.xlu0 %v2126, 21
      %v2838 = vpop.permute.xlu0 %2837
      %2839 = vrot.lane.b32.xlu0 %v2128, 21
      %v2840 = vpop.permute.xlu0 %2839
      %2841 = vrot.lane.b32.xlu0 %v2131, 21
      %v2842 = vpop.permute.xlu0 %2841
      %2843 = vrot.lane.b32.xlu0 %v2133, 21
      %v2844 = vpop.permute.xlu0 %2843
      %2845 = vrot.lane.b32.xlu0 %v2136, 21
      %v2846 = vpop.permute.xlu0 %2845
      %2847 = vrot.lane.b32.xlu0 %v2138, 21
      %v2848 = vpop.permute.xlu0 %2847
      %2849 = vrot.lane.b32.xlu0 %v2141, 21
      %v2850 = vpop.permute.xlu0 %2849
      %2851 = vrot.lane.b32.xlu0 %v2143, 21
      %v2852 = vpop.permute.xlu0 %2851
      %2853 = vrot.lane.b32.xlu0 %v2146, 21
      %v2854 = vpop.permute.xlu0 %2853
      %2855 = vrot.lane.b32.xlu0 %v2148, 21
      %v2856 = vpop.permute.xlu0 %2855
      %2857 = vrot.lane.b32.xlu0 %v2794, 21
      %v2858 = vpop.permute.xlu0 %2857
      %2859 = vrot.lane.b32.xlu0 %v2796, 21
      %v2860 = vpop.permute.xlu0 %2859
      %v2861 = vrot.slane %v2709, 1
      %v2862 = vrot.slane %v2711, 2
      %v2863 = vor.u32 %v2861, %v2862
      %v2864 = vrot.slane %v2720, 1
      %v2865 = vrot.slane %v2716, 2
      %v2866 = vor.u32 %v2864, %v2865
      %v2867 = vsel %vm2213, %v2863, %v2866
      %v2868 = vshrl.u32 %v2707, 16
      %v2870 = vrot.slane %v2868, 1
      %v2871 = vrot.slane %v2724, 2
      %v2872 = vor.u32 %v2870, %v2871
      %v2873 = vsel %vm2213, %v2866, %v2872
      %2874 = vrot.lane.b32.xlu0 %v2233, 24
      %v2875 = vpop.permute.xlu0 %2874
      %2876 = vrot.lane.b32.xlu0 %v2239, 24
      %v2877 = vpop.permute.xlu0 %2876
      %2878 = vrot.lane.b32.xlu0 %v2246, 24
      %v2879 = vpop.permute.xlu0 %2878
      %2880 = vrot.lane.b32.xlu0 %v2252, 24
      %v2881 = vpop.permute.xlu0 %2880
      %2882 = vrot.lane.b32.xlu0 %v2259, 24
      %v2883 = vpop.permute.xlu0 %2882
      %2884 = vrot.lane.b32.xlu0 %v2265, 24
      %v2885 = vpop.permute.xlu0 %2884
      %2886 = vrot.lane.b32.xlu0 %v2272, 24
      %v2887 = vpop.permute.xlu0 %2886
      %2888 = vrot.lane.b32.xlu0 %v2278, 24
      %v2889 = vpop.permute.xlu0 %2888
      %2890 = vrot.lane.b32.xlu0 %v2285, 24
      %v2891 = vpop.permute.xlu0 %2890
      %2892 = vrot.lane.b32.xlu0 %v2291, 24
      %v2893 = vpop.permute.xlu0 %2892
      %2894 = vrot.lane.b32.xlu0 %v2298, 24
      %v2895 = vpop.permute.xlu0 %2894
      %2896 = vrot.lane.b32.xlu0 %v2304, 24
      %v2897 = vpop.permute.xlu0 %2896
      %2898 = vrot.lane.b32.xlu0 %v2311, 24
      %v2899 = vpop.permute.xlu0 %2898
      %2900 = vrot.lane.b32.xlu0 %v2317, 24
      %v2901 = vpop.permute.xlu0 %2900
      %2902 = vrot.lane.b32.xlu0 %v2324, 24
      %v2903 = vpop.permute.xlu0 %2902
      %2904 = vrot.lane.b32.xlu0 %v2330, 24
      %v2905 = vpop.permute.xlu0 %2904
      %2906 = vrot.lane.b32.xlu0 %v2337, 24
      %v2907 = vpop.permute.xlu0 %2906
      %2908 = vrot.lane.b32.xlu0 %v2343, 24
      %v2909 = vpop.permute.xlu0 %2908
      %2910 = vrot.lane.b32.xlu0 %v2350, 24
      %v2911 = vpop.permute.xlu0 %2910
      %2912 = vrot.lane.b32.xlu0 %v2356, 24
      %v2913 = vpop.permute.xlu0 %2912
      %2914 = vrot.lane.b32.xlu0 %v2363, 24
      %v2915 = vpop.permute.xlu0 %2914
      %2916 = vrot.lane.b32.xlu0 %v2369, 24
      %v2917 = vpop.permute.xlu0 %2916
      %2918 = vrot.lane.b32.xlu0 %v2376, 24
      %v2919 = vpop.permute.xlu0 %2918
      %2920 = vrot.lane.b32.xlu0 %v2382, 24
      %v2921 = vpop.permute.xlu0 %2920
      %2922 = vrot.lane.b32.xlu0 %v2389, 24
      %v2923 = vpop.permute.xlu0 %2922
      %2924 = vrot.lane.b32.xlu0 %v2395, 24
      %v2925 = vpop.permute.xlu0 %2924
      %2926 = vrot.lane.b32.xlu0 %v2402, 24
      %v2927 = vpop.permute.xlu0 %2926
      %2928 = vrot.lane.b32.xlu0 %v2408, 24
      %v2929 = vpop.permute.xlu0 %2928
      %2930 = vrot.lane.b32.xlu0 %v2415, 24
      %v2931 = vpop.permute.xlu0 %2930
      %2932 = vrot.lane.b32.xlu0 %v2421, 24
      %v2933 = vpop.permute.xlu0 %2932
      %2934 = vrot.lane.b32.xlu0 %v2867, 24
      %v2935 = vpop.permute.xlu0 %2934
      %2936 = vrot.lane.b32.xlu0 %v2873, 24
      %v2937 = vpop.permute.xlu0 %2936
      %v2938 = vrot.slane %v2639, 2
      %v2939 = vrot.slane %v2640, 2
      %v2940 = vsel %vm2486, %v2938, %v2939
      %v2941 = vrot.slane %v2707, 2
      %v2942 = vsel %vm2486, %v2939, %v2941
      %2943 = vrot.lane.b32.xlu0 %v2494, 27
      %v2944 = vpop.permute.xlu0 %2943
      %2945 = vrot.lane.b32.xlu0 %v2496, 27
      %v2946 = vpop.permute.xlu0 %2945
      %2947 = vrot.lane.b32.xlu0 %v2499, 27
      %v2948 = vpop.permute.xlu0 %2947
      %2949 = vrot.lane.b32.xlu0 %v2501, 27
      %v2950 = vpop.permute.xlu0 %2949
      %2951 = vrot.lane.b32.xlu0 %v2504, 27
      %v2952 = vpop.permute.xlu0 %2951
      %2953 = vrot.lane.b32.xlu0 %v2506, 27
      %v2954 = vpop.permute.xlu0 %2953
      %2955 = vrot.lane.b32.xlu0 %v2509, 27
      %v2956 = vpop.permute.xlu0 %2955
      %2957 = vrot.lane.b32.xlu0 %v2511, 27
      %v2958 = vpop.permute.xlu0 %2957
      %2959 = vrot.lane.b32.xlu0 %v2514, 27
      %v2960 = vpop.permute.xlu0 %2959
      %2961 = vrot.lane.b32.xlu0 %v2516, 27
      %v2962 = vpop.permute.xlu0 %2961
      %2963 = vrot.lane.b32.xlu0 %v2519, 27
      %v2964 = vpop.permute.xlu0 %2963
      %2965 = vrot.lane.b32.xlu0 %v2521, 27
      %v2966 = vpop.permute.xlu0 %2965
      %2967 = vrot.lane.b32.xlu0 %v2524, 27
      %v2968 = vpop.permute.xlu0 %2967
      %2969 = vrot.lane.b32.xlu0 %v2526, 27
      %v2970 = vpop.permute.xlu0 %2969
      %2971 = vrot.lane.b32.xlu0 %v2529, 27
      %v2972 = vpop.permute.xlu0 %2971
      %2973 = vrot.lane.b32.xlu0 %v2531, 27
      %v2974 = vpop.permute.xlu0 %2973
      %2975 = vrot.lane.b32.xlu0 %v2534, 27
      %v2976 = vpop.permute.xlu0 %2975
      %2977 = vrot.lane.b32.xlu0 %v2536, 27
      %v2978 = vpop.permute.xlu0 %2977
      %2979 = vrot.lane.b32.xlu0 %v2539, 27
      %v2980 = vpop.permute.xlu0 %2979
      %2981 = vrot.lane.b32.xlu0 %v2541, 27
      %v2982 = vpop.permute.xlu0 %2981
      %2983 = vrot.lane.b32.xlu0 %v2544, 27
      %v2984 = vpop.permute.xlu0 %2983
      %2985 = vrot.lane.b32.xlu0 %v2546, 27
      %v2986 = vpop.permute.xlu0 %2985
      %2987 = vrot.lane.b32.xlu0 %v2549, 27
      %v2988 = vpop.permute.xlu0 %2987
      %2989 = vrot.lane.b32.xlu0 %v2551, 27
      %v2990 = vpop.permute.xlu0 %2989
      %2991 = vrot.lane.b32.xlu0 %v2554, 27
      %v2992 = vpop.permute.xlu0 %2991
      %2993 = vrot.lane.b32.xlu0 %v2556, 27
      %v2994 = vpop.permute.xlu0 %2993
      %2995 = vrot.lane.b32.xlu0 %v2559, 27
      %v2996 = vpop.permute.xlu0 %2995
      %2997 = vrot.lane.b32.xlu0 %v2561, 27
      %v2998 = vpop.permute.xlu0 %2997
      %2999 = vrot.lane.b32.xlu0 %v2564, 27
      %v3000 = vpop.permute.xlu0 %2999
      %3001 = vrot.lane.b32.xlu0 %v2566, 27
      %v3002 = vpop.permute.xlu0 %3001
      %3003 = vrot.lane.b32.xlu0 %v2940, 27
      %v3004 = vpop.permute.xlu0 %3003
      %3005 = vrot.lane.b32.xlu0 %v2942, 27
      %v3006 = vpop.permute.xlu0 %3005
      %v3011 = vunpack.c.l.b16 %v1460
      %v3012 = vunpack.c.l.b16 %v1461
      %v3013 = vunpack.c.l.b16 %v1462
      %v3014 = vunpack.c.l.b16 %v1463
      %v3015 = vpack.c.b16 %v3012, %v3011
      %v3016 = vpack.c.b16 %v3014, %v3013
      %3017 = vrot.lane.b32.xlu0 %v1607, 30
      %v3018 = vpop.permute.xlu0 %3017
      %3019 = vrot.lane.b32.xlu0 %v1608, 30
      %v3020 = vpop.permute.xlu0 %3019
      %3021 = vrot.lane.b32.xlu0 %v1609, 30
      %v3022 = vpop.permute.xlu0 %3021
      %3023 = vrot.lane.b32.xlu0 %v1610, 30
      %v3024 = vpop.permute.xlu0 %3023
      %3025 = vrot.lane.b32.xlu0 %v1611, 30
      %v3026 = vpop.permute.xlu0 %3025
      %3027 = vrot.lane.b32.xlu0 %v1612, 30
      %v3028 = vpop.permute.xlu0 %3027
      %3029 = vrot.lane.b32.xlu0 %v1613, 30
      %v3030 = vpop.permute.xlu0 %3029
      %3031 = vrot.lane.b32.xlu0 %v1614, 30
      %v3032 = vpop.permute.xlu0 %3031
      %3033 = vrot.lane.b32.xlu0 %v1615, 30
      %v3034 = vpop.permute.xlu0 %3033
      %3035 = vrot.lane.b32.xlu0 %v1616, 30
      %v3036 = vpop.permute.xlu0 %3035
      %3037 = vrot.lane.b32.xlu0 %v1617, 30
      %v3038 = vpop.permute.xlu0 %3037
      %3039 = vrot.lane.b32.xlu0 %v1618, 30
      %v3040 = vpop.permute.xlu0 %3039
      %3041 = vrot.lane.b32.xlu0 %v1619, 30
      %v3042 = vpop.permute.xlu0 %3041
      %3043 = vrot.lane.b32.xlu0 %v1620, 30
      %v3044 = vpop.permute.xlu0 %3043
      %3045 = vrot.lane.b32.xlu0 %v1621, 30
      %v3046 = vpop.permute.xlu0 %3045
      %3047 = vrot.lane.b32.xlu0 %v1622, 30
      %v3048 = vpop.permute.xlu0 %3047
      %3049 = vrot.lane.b32.xlu0 %v1623, 30
      %v3050 = vpop.permute.xlu0 %3049
      %3051 = vrot.lane.b32.xlu0 %v1624, 30
      %v3052 = vpop.permute.xlu0 %3051
      %3053 = vrot.lane.b32.xlu0 %v1625, 30
      %v3054 = vpop.permute.xlu0 %3053
      %3055 = vrot.lane.b32.xlu0 %v1626, 30
      %v3056 = vpop.permute.xlu0 %3055
      %3057 = vrot.lane.b32.xlu0 %v1627, 30
      %v3058 = vpop.permute.xlu0 %3057
      %3059 = vrot.lane.b32.xlu0 %v1628, 30
      %v3060 = vpop.permute.xlu0 %3059
      %3061 = vrot.lane.b32.xlu0 %v1629, 30
      %v3062 = vpop.permute.xlu0 %3061
      %3063 = vrot.lane.b32.xlu0 %v1630, 30
      %v3064 = vpop.permute.xlu0 %3063
      %3065 = vrot.lane.b32.xlu0 %v1631, 30
      %v3066 = vpop.permute.xlu0 %3065
      %3067 = vrot.lane.b32.xlu0 %v1632, 30
      %v3068 = vpop.permute.xlu0 %3067
      %3069 = vrot.lane.b32.xlu0 %v1633, 30
      %v3070 = vpop.permute.xlu0 %3069
      %3071 = vrot.lane.b32.xlu0 %v1634, 30
      %v3072 = vpop.permute.xlu0 %3071
      %3073 = vrot.lane.b32.xlu0 %v2639, 30
      %v3074 = vpop.permute.xlu0 %3073
      %3075 = vrot.lane.b32.xlu0 %v2640, 30
      %v3076 = vpop.permute.xlu0 %3075
      %3077 = vrot.lane.b32.xlu0 %v3015, 30
      %v3078 = vpop.permute.xlu0 %3077
      %3079 = vrot.lane.b32.xlu0 %v3016, 30
      %v3080 = vpop.permute.xlu0 %3079
      %v3082 = vunpack.c.l.b16 %v1464
      %v3083 = vpack.c.b16 %v3082, %v3082
      %v3085 = vshrl.u32 %v3015, 16
      %v3087 = vshll.u32 %v3015, 16
      %v3089 = vrot.slane %v3087, 1
      %v3090 = vor.u32 %v3085, %v3089
      %v3092 = vshll.u32 %v3016, 16
      %v3094 = vrot.slane %v3092, 1
      %v3095 = vsel %vm1683, %v3090, %v3094
      %v3096 = vshrl.u32 %v3016, 16
      %v3098 = vor.u32 %v3096, %v3094
      %v3100 = vshll.u32 %v3083, 16
      %v3102 = vrot.slane %v3100, 1
      %v3103 = vsel %vm1683, %v3098, %v3102
      %3104 = vrot.lane.b32.xlu0 %v1735, 33
      %v3105 = vpop.permute.xlu0 %3104
      %3106 = vrot.lane.b32.xlu0 %v1743, 33
      %v3107 = vpop.permute.xlu0 %3106
      %3108 = vrot.lane.b32.xlu0 %v1755, 33
      %v3109 = vpop.permute.xlu0 %3108
      %3110 = vrot.lane.b32.xlu0 %v1763, 33
      %v3111 = vpop.permute.xlu0 %3110
      %3112 = vrot.lane.b32.xlu0 %v1775, 33
      %v3113 = vpop.permute.xlu0 %3112
      %3114 = vrot.lane.b32.xlu0 %v1783, 33
      %v3115 = vpop.permute.xlu0 %3114
      %3116 = vrot.lane.b32.xlu0 %v1795, 33
      %v3117 = vpop.permute.xlu0 %3116
      %3118 = vrot.lane.b32.xlu0 %v1803, 33
      %v3119 = vpop.permute.xlu0 %3118
      %3120 = vrot.lane.b32.xlu0 %v1815, 33
      %v3121 = vpop.permute.xlu0 %3120
      %3122 = vrot.lane.b32.xlu0 %v1823, 33
      %v3123 = vpop.permute.xlu0 %3122
      %3124 = vrot.lane.b32.xlu0 %v1835, 33
      %v3125 = vpop.permute.xlu0 %3124
      %3126 = vrot.lane.b32.xlu0 %v1843, 33
      %v3127 = vpop.permute.xlu0 %3126
      %3128 = vrot.lane.b32.xlu0 %v1855, 33
      %v3129 = vpop.permute.xlu0 %3128
      %3130 = vrot.lane.b32.xlu0 %v1863, 33
      %v3131 = vpop.permute.xlu0 %3130
      %3132 = vrot.lane.b32.xlu0 %v1875, 33
      %v3133 = vpop.permute.xlu0 %3132
      %3134 = vrot.lane.b32.xlu0 %v1883, 33
      %v3135 = vpop.permute.xlu0 %3134
      %3136 = vrot.lane.b32.xlu0 %v1895, 33
      %v3137 = vpop.permute.xlu0 %3136
      %3138 = vrot.lane.b32.xlu0 %v1903, 33
      %v3139 = vpop.permute.xlu0 %3138
      %3140 = vrot.lane.b32.xlu0 %v1915, 33
      %v3141 = vpop.permute.xlu0 %3140
      %3142 = vrot.lane.b32.xlu0 %v1923, 33
      %v3143 = vpop.permute.xlu0 %3142
      %3144 = vrot.lane.b32.xlu0 %v1935, 33
      %v3145 = vpop.permute.xlu0 %3144
      %3146 = vrot.lane.b32.xlu0 %v1943, 33
      %v3147 = vpop.permute.xlu0 %3146
      %3148 = vrot.lane.b32.xlu0 %v1955, 33
      %v3149 = vpop.permute.xlu0 %3148
      %3150 = vrot.lane.b32.xlu0 %v1963, 33
      %v3151 = vpop.permute.xlu0 %3150
      %3152 = vrot.lane.b32.xlu0 %v1975, 33
      %v3153 = vpop.permute.xlu0 %3152
      %3154 = vrot.lane.b32.xlu0 %v1983, 33
      %v3155 = vpop.permute.xlu0 %3154
      %3156 = vrot.lane.b32.xlu0 %v1995, 33
      %v3157 = vpop.permute.xlu0 %3156
      %3158 = vrot.lane.b32.xlu0 %v2003, 33
      %v3159 = vpop.permute.xlu0 %3158
      %3160 = vrot.lane.b32.xlu0 %v2719, 33
      %v3161 = vpop.permute.xlu0 %3160
      %3162 = vrot.lane.b32.xlu0 %v2727, 33
      %v3163 = vpop.permute.xlu0 %3162
      %3164 = vrot.lane.b32.xlu0 %v3095, 33
      %v3165 = vpop.permute.xlu0 %3164
      %3166 = vrot.lane.b32.xlu0 %v3103, 33
      %v3167 = vpop.permute.xlu0 %3166
      %v3168 = vrot.slane %v3015, 1
      %v3169 = vrot.slane %v3016, 1
      %v3170 = vsel %vm2068, %v3168, %v3169
      %v3171 = vrot.slane %v3083, 1
      %v3172 = vsel %vm2068, %v3169, %v3171
      %3173 = vrot.lane.b32.xlu0 %v2081, 36
      %v3174 = vpop.permute.xlu0 %3173
      %3175 = vrot.lane.b32.xlu0 %v2083, 36
      %v3176 = vpop.permute.xlu0 %3175
      %3177 = vrot.lane.b32.xlu0 %v2086, 36
      %v3178 = vpop.permute.xlu0 %3177
      %3179 = vrot.lane.b32.xlu0 %v2088, 36
      %v3180 = vpop.permute.xlu0 %3179
      %3181 = vrot.lane.b32.xlu0 %v2091, 36
      %v3182 = vpop.permute.xlu0 %3181
      %3183 = vrot.lane.b32.xlu0 %v2093, 36
      %v3184 = vpop.permute.xlu0 %3183
      %3185 = vrot.lane.b32.xlu0 %v2096, 36
      %v3186 = vpop.permute.xlu0 %3185
      %3187 = vrot.lane.b32.xlu0 %v2098, 36
      %v3188 = vpop.permute.xlu0 %3187
      %3189 = vrot.lane.b32.xlu0 %v2101, 36
      %v3190 = vpop.permute.xlu0 %3189
      %3191 = vrot.lane.b32.xlu0 %v2103, 36
      %v3192 = vpop.permute.xlu0 %3191
      %3193 = vrot.lane.b32.xlu0 %v2106, 36
      %v3194 = vpop.permute.xlu0 %3193
      %3195 = vrot.lane.b32.xlu0 %v2108, 36
      %v3196 = vpop.permute.xlu0 %3195
      %3197 = vrot.lane.b32.xlu0 %v2111, 36
      %v3198 = vpop.permute.xlu0 %3197
      %3199 = vrot.lane.b32.xlu0 %v2113, 36
      %v3200 = vpop.permute.xlu0 %3199
      %3201 = vrot.lane.b32.xlu0 %v2116, 36
      %v3202 = vpop.permute.xlu0 %3201
      %3203 = vrot.lane.b32.xlu0 %v2118, 36
      %v3204 = vpop.permute.xlu0 %3203
      %3205 = vrot.lane.b32.xlu0 %v2121, 36
      %v3206 = vpop.permute.xlu0 %3205
      %3207 = vrot.lane.b32.xlu0 %v2123, 36
      %v3208 = vpop.permute.xlu0 %3207
      %3209 = vrot.lane.b32.xlu0 %v2126, 36
      %v3210 = vpop.permute.xlu0 %3209
      %3211 = vrot.lane.b32.xlu0 %v2128, 36
      %v3212 = vpop.permute.xlu0 %3211
      %3213 = vrot.lane.b32.xlu0 %v2131, 36
      %v3214 = vpop.permute.xlu0 %3213
      %3215 = vrot.lane.b32.xlu0 %v2133, 36
      %v3216 = vpop.permute.xlu0 %3215
      %3217 = vrot.lane.b32.xlu0 %v2136, 36
      %v3218 = vpop.permute.xlu0 %3217
      %3219 = vrot.lane.b32.xlu0 %v2138, 36
      %v3220 = vpop.permute.xlu0 %3219
      %3221 = vrot.lane.b32.xlu0 %v2141, 36
      %v3222 = vpop.permute.xlu0 %3221
      %3223 = vrot.lane.b32.xlu0 %v2143, 36
      %v3224 = vpop.permute.xlu0 %3223
      %3225 = vrot.lane.b32.xlu0 %v2146, 36
      %v3226 = vpop.permute.xlu0 %3225
      %3227 = vrot.lane.b32.xlu0 %v2148, 36
      %v3228 = vpop.permute.xlu0 %3227
      %3229 = vrot.lane.b32.xlu0 %v2794, 36
      %v3230 = vpop.permute.xlu0 %3229
      %3231 = vrot.lane.b32.xlu0 %v2796, 36
      %v3232 = vpop.permute.xlu0 %3231
      %3233 = vrot.lane.b32.xlu0 %v3170, 36
      %v3234 = vpop.permute.xlu0 %3233
      %3235 = vrot.lane.b32.xlu0 %v3172, 36
      %v3236 = vpop.permute.xlu0 %3235
      %v3237 = vrot.slane %v3085, 1
      %v3238 = vrot.slane %v3087, 2
      %v3239 = vor.u32 %v3237, %v3238
      %v3240 = vrot.slane %v3096, 1
      %v3241 = vrot.slane %v3092, 2
      %v3242 = vor.u32 %v3240, %v3241
      %v3243 = vsel %vm2213, %v3239, %v3242
      %v3244 = vshrl.u32 %v3083, 16
      %v3246 = vrot.slane %v3244, 1
      %v3247 = vrot.slane %v3100, 2
      %v3248 = vor.u32 %v3246, %v3247
      %v3249 = vsel %vm2213, %v3242, %v3248
      %3250 = vrot.lane.b32.xlu0 %v2246, 39
      %v3251 = vpop.permute.xlu0 %3250
      %3252 = vrot.lane.b32.xlu0 %v2252, 39
      %v3253 = vpop.permute.xlu0 %3252
      %3254 = vrot.lane.b32.xlu0 %v2259, 39
      %v3255 = vpop.permute.xlu0 %3254
      %3256 = vrot.lane.b32.xlu0 %v2265, 39
      %v3257 = vpop.permute.xlu0 %3256
      %3258 = vrot.lane.b32.xlu0 %v2272, 39
      %v3259 = vpop.permute.xlu0 %3258
      %3260 = vrot.lane.b32.xlu0 %v2278, 39
      %v3261 = vpop.permute.xlu0 %3260
      %3262 = vrot.lane.b32.xlu0 %v2285, 39
      %v3263 = vpop.permute.xlu0 %3262
      %3264 = vrot.lane.b32.xlu0 %v2291, 39
      %v3265 = vpop.permute.xlu0 %3264
      %3266 = vrot.lane.b32.xlu0 %v2298, 39
      %v3267 = vpop.permute.xlu0 %3266
      %3268 = vrot.lane.b32.xlu0 %v2304, 39
      %v3269 = vpop.permute.xlu0 %3268
      %3270 = vrot.lane.b32.xlu0 %v2311, 39
      %v3271 = vpop.permute.xlu0 %3270
      %3272 = vrot.lane.b32.xlu0 %v2317, 39
      %v3273 = vpop.permute.xlu0 %3272
      %3274 = vrot.lane.b32.xlu0 %v2324, 39
      %v3275 = vpop.permute.xlu0 %3274
      %3276 = vrot.lane.b32.xlu0 %v2330, 39
      %v3277 = vpop.permute.xlu0 %3276
      %3278 = vrot.lane.b32.xlu0 %v2337, 39
      %v3279 = vpop.permute.xlu0 %3278
      %3280 = vrot.lane.b32.xlu0 %v2343, 39
      %v3281 = vpop.permute.xlu0 %3280
      %3282 = vrot.lane.b32.xlu0 %v2350, 39
      %v3283 = vpop.permute.xlu0 %3282
      %3284 = vrot.lane.b32.xlu0 %v2356, 39
      %v3285 = vpop.permute.xlu0 %3284
      %3286 = vrot.lane.b32.xlu0 %v2363, 39
      %v3287 = vpop.permute.xlu0 %3286
      %3288 = vrot.lane.b32.xlu0 %v2369, 39
      %v3289 = vpop.permute.xlu0 %3288
      %3290 = vrot.lane.b32.xlu0 %v2376, 39
      %v3291 = vpop.permute.xlu0 %3290
      %3292 = vrot.lane.b32.xlu0 %v2382, 39
      %v3293 = vpop.permute.xlu0 %3292
      %3294 = vrot.lane.b32.xlu0 %v2389, 39
      %v3295 = vpop.permute.xlu0 %3294
      %3296 = vrot.lane.b32.xlu0 %v2395, 39
      %v3297 = vpop.permute.xlu0 %3296
      %3298 = vrot.lane.b32.xlu0 %v2402, 39
      %v3299 = vpop.permute.xlu0 %3298
      %3300 = vrot.lane.b32.xlu0 %v2408, 39
      %v3301 = vpop.permute.xlu0 %3300
      %3302 = vrot.lane.b32.xlu0 %v2415, 39
      %v3303 = vpop.permute.xlu0 %3302
      %3304 = vrot.lane.b32.xlu0 %v2421, 39
      %v3305 = vpop.permute.xlu0 %3304
      %3306 = vrot.lane.b32.xlu0 %v2867, 39
      %v3307 = vpop.permute.xlu0 %3306
      %3308 = vrot.lane.b32.xlu0 %v2873, 39
      %v3309 = vpop.permute.xlu0 %3308
      %3310 = vrot.lane.b32.xlu0 %v3243, 39
      %v3311 = vpop.permute.xlu0 %3310
      %3312 = vrot.lane.b32.xlu0 %v3249, 39
      %v3313 = vpop.permute.xlu0 %3312
      %v3314 = vrot.slane %v3015, 2
      %v3315 = vrot.slane %v3016, 2
      %v3316 = vsel %vm2486, %v3314, %v3315
      %v3317 = vrot.slane %v3083, 2
      %v3318 = vsel %vm2486, %v3315, %v3317
      %3319 = vrot.lane.b32.xlu0 %v2499, 42
      %v3320 = vpop.permute.xlu0 %3319
      %3321 = vrot.lane.b32.xlu0 %v2501, 42
      %v3322 = vpop.permute.xlu0 %3321
      %3323 = vrot.lane.b32.xlu0 %v2504, 42
      %v3324 = vpop.permute.xlu0 %3323
      %3325 = vrot.lane.b32.xlu0 %v2506, 42
      %v3326 = vpop.permute.xlu0 %3325
      %3327 = vrot.lane.b32.xlu0 %v2509, 42
      %v3328 = vpop.permute.xlu0 %3327
      %3329 = vrot.lane.b32.xlu0 %v2511, 42
      %v3330 = vpop.permute.xlu0 %3329
      %3331 = vrot.lane.b32.xlu0 %v2514, 42
      %v3332 = vpop.permute.xlu0 %3331
      %3333 = vrot.lane.b32.xlu0 %v2516, 42
      %v3334 = vpop.permute.xlu0 %3333
      %3335 = vrot.lane.b32.xlu0 %v2519, 42
      %v3336 = vpop.permute.xlu0 %3335
      %3337 = vrot.lane.b32.xlu0 %v2521, 42
      %v3338 = vpop.permute.xlu0 %3337
      %3339 = vrot.lane.b32.xlu0 %v2524, 42
      %v3340 = vpop.permute.xlu0 %3339
      %3341 = vrot.lane.b32.xlu0 %v2526, 42
      %v3342 = vpop.permute.xlu0 %3341
      %3343 = vrot.lane.b32.xlu0 %v2529, 42
      %v3344 = vpop.permute.xlu0 %3343
      %3345 = vrot.lane.b32.xlu0 %v2531, 42
      %v3346 = vpop.permute.xlu0 %3345
      %3347 = vrot.lane.b32.xlu0 %v2534, 42
      %v3348 = vpop.permute.xlu0 %3347
      %3349 = vrot.lane.b32.xlu0 %v2536, 42
      %v3350 = vpop.permute.xlu0 %3349
      %3351 = vrot.lane.b32.xlu0 %v2539, 42
      %v3352 = vpop.permute.xlu0 %3351
      %3353 = vrot.lane.b32.xlu0 %v2541, 42
      %v3354 = vpop.permute.xlu0 %3353
      %3355 = vrot.lane.b32.xlu0 %v2544, 42
      %v3356 = vpop.permute.xlu0 %3355
      %3357 = vrot.lane.b32.xlu0 %v2546, 42
      %v3358 = vpop.permute.xlu0 %3357
      %3359 = vrot.lane.b32.xlu0 %v2549, 42
      %v3360 = vpop.permute.xlu0 %3359
      %3361 = vrot.lane.b32.xlu0 %v2551, 42
      %v3362 = vpop.permute.xlu0 %3361
      %3363 = vrot.lane.b32.xlu0 %v2554, 42
      %v3364 = vpop.permute.xlu0 %3363
      %3365 = vrot.lane.b32.xlu0 %v2556, 42
      %v3366 = vpop.permute.xlu0 %3365
      %3367 = vrot.lane.b32.xlu0 %v2559, 42
      %v3368 = vpop.permute.xlu0 %3367
      %3369 = vrot.lane.b32.xlu0 %v2561, 42
      %v3370 = vpop.permute.xlu0 %3369
      %3371 = vrot.lane.b32.xlu0 %v2564, 42
      %v3372 = vpop.permute.xlu0 %3371
      %3373 = vrot.lane.b32.xlu0 %v2566, 42
      %v3374 = vpop.permute.xlu0 %3373
      %3375 = vrot.lane.b32.xlu0 %v2940, 42
      %v3376 = vpop.permute.xlu0 %3375
      %3377 = vrot.lane.b32.xlu0 %v2942, 42
      %v3378 = vpop.permute.xlu0 %3377
      %3379 = vrot.lane.b32.xlu0 %v3316, 42
      %v3380 = vpop.permute.xlu0 %3379
      %3381 = vrot.lane.b32.xlu0 %v3318, 42
      %v3382 = vpop.permute.xlu0 %3381
      %v3387 = vunpack.c.l.b16 %v1465
      %v3388 = vunpack.c.l.b16 %v1466
      %v3389 = vunpack.c.l.b16 %v1467
      %v3390 = vunpack.c.l.b16 %v1468
      %v3391 = vpack.c.b16 %v3388, %v3387
      %v3392 = vpack.c.b16 %v3390, %v3389
      %3393 = vrot.lane.b32.xlu0 %v1609, 45
      %v3394 = vpop.permute.xlu0 %3393
      %3395 = vrot.lane.b32.xlu0 %v1610, 45
      %v3396 = vpop.permute.xlu0 %3395
      %3397 = vrot.lane.b32.xlu0 %v1611, 45
      %v3398 = vpop.permute.xlu0 %3397
      %3399 = vrot.lane.b32.xlu0 %v1612, 45
      %v3400 = vpop.permute.xlu0 %3399
      %3401 = vrot.lane.b32.xlu0 %v1613, 45
      %v3402 = vpop.permute.xlu0 %3401
      %3403 = vrot.lane.b32.xlu0 %v1614, 45
      %v3404 = vpop.permute.xlu0 %3403
      %3405 = vrot.lane.b32.xlu0 %v1615, 45
      %v3406 = vpop.permute.xlu0 %3405
      %3407 = vrot.lane.b32.xlu0 %v1616, 45
      %v3408 = vpop.permute.xlu0 %3407
      %3409 = vrot.lane.b32.xlu0 %v1617, 45
      %v3410 = vpop.permute.xlu0 %3409
      %3411 = vrot.lane.b32.xlu0 %v1618, 45
      %v3412 = vpop.permute.xlu0 %3411
      %3413 = vrot.lane.b32.xlu0 %v1619, 45
      %v3414 = vpop.permute.xlu0 %3413
      %3415 = vrot.lane.b32.xlu0 %v1620, 45
      %v3416 = vpop.permute.xlu0 %3415
      %3417 = vrot.lane.b32.xlu0 %v1621, 45
      %v3418 = vpop.permute.xlu0 %3417
      %3419 = vrot.lane.b32.xlu0 %v1622, 45
      %v3420 = vpop.permute.xlu0 %3419
      %3421 = vrot.lane.b32.xlu0 %v1623, 45
      %v3422 = vpop.permute.xlu0 %3421
      %3423 = vrot.lane.b32.xlu0 %v1624, 45
      %v3424 = vpop.permute.xlu0 %3423
      %3425 = vrot.lane.b32.xlu0 %v1625, 45
      %v3426 = vpop.permute.xlu0 %3425
      %3427 = vrot.lane.b32.xlu0 %v1626, 45
      %v3428 = vpop.permute.xlu0 %3427
      %3429 = vrot.lane.b32.xlu0 %v1627, 45
      %v3430 = vpop.permute.xlu0 %3429
      %3431 = vrot.lane.b32.xlu0 %v1628, 45
      %v3432 = vpop.permute.xlu0 %3431
      %3433 = vrot.lane.b32.xlu0 %v1629, 45
      %v3434 = vpop.permute.xlu0 %3433
      %3435 = vrot.lane.b32.xlu0 %v1630, 45
      %v3436 = vpop.permute.xlu0 %3435
      %3437 = vrot.lane.b32.xlu0 %v1631, 45
      %v3438 = vpop.permute.xlu0 %3437
      %3439 = vrot.lane.b32.xlu0 %v1632, 45
      %v3440 = vpop.permute.xlu0 %3439
      %3441 = vrot.lane.b32.xlu0 %v1633, 45
      %v3442 = vpop.permute.xlu0 %3441
      %3443 = vrot.lane.b32.xlu0 %v1634, 45
      %v3444 = vpop.permute.xlu0 %3443
      %3445 = vrot.lane.b32.xlu0 %v2639, 45
      %v3446 = vpop.permute.xlu0 %3445
      %3447 = vrot.lane.b32.xlu0 %v2640, 45
      %v3448 = vpop.permute.xlu0 %3447
      %3449 = vrot.lane.b32.xlu0 %v3015, 45
      %v3450 = vpop.permute.xlu0 %3449
      %3451 = vrot.lane.b32.xlu0 %v3016, 45
      %v3452 = vpop.permute.xlu0 %3451
      %3453 = vrot.lane.b32.xlu0 %v3391, 45
      %v3454 = vpop.permute.xlu0 %3453
      %3455 = vrot.lane.b32.xlu0 %v3392, 45
      %v3456 = vpop.permute.xlu0 %3455
      %vm3457 = vcmask 23552
      %v3459 = vsel %vm3457, %v1603, %v2005
      %v3461 = vsel %vm3457, %v1604, %v2007
      %v3463 = vsel %vm3457, %v1605, %v2009
      %v3465 = vsel %vm3457, %v1606, %v2011
      %v3467 = vsel %vm3457, %v1607, %v2013
      %v3469 = vsel %vm3457, %v1608, %v2015
      %v3471 = vsel %vm3457, %v1609, %v2017
      %v3473 = vsel %vm3457, %v1610, %v2019
      %v3475 = vsel %vm3457, %v1611, %v2021
      %v3477 = vsel %vm3457, %v1612, %v2023
      %v3479 = vsel %vm3457, %v1613, %v2025
      %v3481 = vsel %vm3457, %v1614, %v2027
      %v3483 = vsel %vm3457, %v1615, %v2029
      %v3485 = vsel %vm3457, %v1616, %v2031
      %v3487 = vsel %vm3457, %v1617, %v2033
      %v3489 = vsel %vm3457, %v1618, %v2035
      %v3491 = vsel %vm3457, %v1619, %v2037
      %v3493 = vsel %vm3457, %v1620, %v2039
      %v3495 = vsel %vm3457, %v1621, %v2041
      %v3497 = vsel %vm3457, %v1622, %v2043
      %v3499 = vsel %vm3457, %v1623, %v2045
      %v3501 = vsel %vm3457, %v1624, %v2047
      %v3503 = vsel %vm3457, %v1625, %v2049
      %v3505 = vsel %vm3457, %v1626, %v2051
      %v3507 = vsel %vm3457, %v1627, %v2053
      %v3509 = vsel %vm3457, %v1628, %v2055
      %v3511 = vsel %vm3457, %v1629, %v2057
      %v3513 = vsel %vm3457, %v1630, %v2059
      %v3515 = vsel %vm3457, %v1631, %v2061
      %v3517 = vsel %vm3457, %v1632, %v2063
      %v3519 = vsel %vm3457, %v1633, %v2065
      %v3521 = vsel %vm3457, %v1634, %v2067
      %vm3522 = vcmask 48128
      %v3524 = vsel %vm3522, %v3459, %v2150
      %v3526 = vsel %vm3522, %v3461, %v2152
      %v3528 = vsel %vm3522, %v3463, %v2154
      %v3530 = vsel %vm3522, %v3465, %v2156
      %v3532 = vsel %vm3522, %v3467, %v2158
      %v3534 = vsel %vm3522, %v3469, %v2160
      %v3536 = vsel %vm3522, %v3471, %v2162
      %v3538 = vsel %vm3522, %v3473, %v2164
      %v3540 = vsel %vm3522, %v3475, %v2166
      %v3542 = vsel %vm3522, %v3477, %v2168
      %v3544 = vsel %vm3522, %v3479, %v2170
      %v3546 = vsel %vm3522, %v3481, %v2172
      %v3548 = vsel %vm3522, %v3483, %v2174
      %v3550 = vsel %vm3522, %v3485, %v2176
      %v3552 = vsel %vm3522, %v3487, %v2178
      %v3554 = vsel %vm3522, %v3489, %v2180
      %v3556 = vsel %vm3522, %v3491, %v2182
      %v3558 = vsel %vm3522, %v3493, %v2184
      %v3560 = vsel %vm3522, %v3495, %v2186
      %v3562 = vsel %vm3522, %v3497, %v2188
      %v3564 = vsel %vm3522, %v3499, %v2190
      %v3566 = vsel %vm3522, %v3501, %v2192
      %v3568 = vsel %vm3522, %v3503, %v2194
      %v3570 = vsel %vm3522, %v3505, %v2196
      %v3572 = vsel %vm3522, %v3507, %v2198
      %v3574 = vsel %vm3522, %v3509, %v2200
      %v3576 = vsel %vm3522, %v3511, %v2202
      %v3578 = vsel %vm3522, %v3513, %v2204
      %v3580 = vsel %vm3522, %v3515, %v2206
      %v3582 = vsel %vm3522, %v3517, %v2208
      %v3584 = vsel %vm3522, %v3519, %v2210
      %v3586 = vsel %vm3522, %v3521, %v2212
      %vm3587 = vcmask 72704
      %v3589 = vsel %vm3587, %v3524, %v2423
      %v3591 = vsel %vm3587, %v3526, %v2425
      %v3593 = vsel %vm3587, %v3528, %v2427
      %v3595 = vsel %vm3587, %v3530, %v2429
      %v3597 = vsel %vm3587, %v3532, %v2431
      %v3599 = vsel %vm3587, %v3534, %v2433
      %v3601 = vsel %vm3587, %v3536, %v2435
      %v3603 = vsel %vm3587, %v3538, %v2437
      %v3605 = vsel %vm3587, %v3540, %v2439
      %v3607 = vsel %vm3587, %v3542, %v2441
      %v3609 = vsel %vm3587, %v3544, %v2443
      %v3611 = vsel %vm3587, %v3546, %v2445
      %v3613 = vsel %vm3587, %v3548, %v2447
      %v3615 = vsel %vm3587, %v3550, %v2449
      %v3617 = vsel %vm3587, %v3552, %v2451
      %v3619 = vsel %vm3587, %v3554, %v2453
      %v3621 = vsel %vm3587, %v3556, %v2455
      %v3623 = vsel %vm3587, %v3558, %v2457
      %v3625 = vsel %vm3587, %v3560, %v2459
      %v3627 = vsel %vm3587, %v3562, %v2461
      %v3629 = vsel %vm3587, %v3564, %v2463
      %v3631 = vsel %vm3587, %v3566, %v2465
      %v3633 = vsel %vm3587, %v3568, %v2467
      %v3635 = vsel %vm3587, %v3570, %v2469
      %v3637 = vsel %vm3587, %v3572, %v2471
      %v3639 = vsel %vm3587, %v3574, %v2473
      %v3641 = vsel %vm3587, %v3576, %v2475
      %v3643 = vsel %vm3587, %v3578, %v2477
      %v3645 = vsel %vm3587, %v3580, %v2479
      %v3647 = vsel %vm3587, %v3582, %v2481
      %v3649 = vsel %vm3587, %v3584, %v2483
      %v3651 = vsel %vm3587, %v3586, %v2485
      %vm3652 = vcmask 97280
      %v3654 = vsel %vm3652, %v3589, %v2568
      %v3656 = vsel %vm3652, %v3591, %v2570
      %v3658 = vsel %vm3652, %v3593, %v2572
      %v3660 = vsel %vm3652, %v3595, %v2574
      %v3662 = vsel %vm3652, %v3597, %v2576
      %v3664 = vsel %vm3652, %v3599, %v2578
      %v3666 = vsel %vm3652, %v3601, %v2580
      %v3668 = vsel %vm3652, %v3603, %v2582
      %v3670 = vsel %vm3652, %v3605, %v2584
      %v3672 = vsel %vm3652, %v3607, %v2586
      %v3674 = vsel %vm3652, %v3609, %v2588
      %v3676 = vsel %vm3652, %v3611, %v2590
      %v3678 = vsel %vm3652, %v3613, %v2592
      %v3680 = vsel %vm3652, %v3615, %v2594
      %v3682 = vsel %vm3652, %v3617, %v2596
      %v3684 = vsel %vm3652, %v3619, %v2598
      %v3686 = vsel %vm3652, %v3621, %v2600
      %v3688 = vsel %vm3652, %v3623, %v2602
      %v3690 = vsel %vm3652, %v3625, %v2604
      %v3692 = vsel %vm3652, %v3627, %v2606
      %v3694 = vsel %vm3652, %v3629, %v2608
      %v3696 = vsel %vm3652, %v3631, %v2610
      %v3698 = vsel %vm3652, %v3633, %v2612
      %v3700 = vsel %vm3652, %v3635, %v2614
      %v3702 = vsel %vm3652, %v3637, %v2616
      %v3704 = vsel %vm3652, %v3639, %v2618
      %v3706 = vsel %vm3652, %v3641, %v2620
      %v3708 = vsel %vm3652, %v3643, %v2622
      %v3710 = vsel %vm3652, %v3645, %v2624
      %v3712 = vsel %vm3652, %v3647, %v2626
      %v3714 = vsel %vm3652, %v3649, %v2628
      %v3716 = vsel %vm3652, %v3651, %v2630
      %vm3717 = vcmask 121856
      %v3719 = vsel %vm3717, %v3654, %v2642
      %v3721 = vsel %vm3717, %v3656, %v2644
      %v3723 = vsel %vm3717, %v3658, %v2646
      %v3725 = vsel %vm3717, %v3660, %v2648
      %v3727 = vsel %vm3717, %v3662, %v2650
      %v3729 = vsel %vm3717, %v3664, %v2652
      %v3731 = vsel %vm3717, %v3666, %v2654
      %v3733 = vsel %vm3717, %v3668, %v2656
      %v3735 = vsel %vm3717, %v3670, %v2658
      %v3737 = vsel %vm3717, %v3672, %v2660
      %v3739 = vsel %vm3717, %v3674, %v2662
      %v3741 = vsel %vm3717, %v3676, %v2664
      %v3743 = vsel %vm3717, %v3678, %v2666
      %v3745 = vsel %vm3717, %v3680, %v2668
      %v3747 = vsel %vm3717, %v3682, %v2670
      %v3749 = vsel %vm3717, %v3684, %v2672
      %v3751 = vsel %vm3717, %v3686, %v2674
      %v3753 = vsel %vm3717, %v3688, %v2676
      %v3755 = vsel %vm3717, %v3690, %v2678
      %v3757 = vsel %vm3717, %v3692, %v2680
      %v3759 = vsel %vm3717, %v3694, %v2682
      %v3761 = vsel %vm3717, %v3696, %v2684
      %v3763 = vsel %vm3717, %v3698, %v2686
      %v3765 = vsel %vm3717, %v3700, %v2688
      %v3767 = vsel %vm3717, %v3702, %v2690
      %v3769 = vsel %vm3717, %v3704, %v2692
      %v3771 = vsel %vm3717, %v3706, %v2694
      %v3773 = vsel %vm3717, %v3708, %v2696
      %v3775 = vsel %vm3717, %v3710, %v2698
      %v3777 = vsel %vm3717, %v3712, %v2700
      %v3779 = vsel %vm3717, %v3714, %v2702
      %v3781 = vsel %vm3717, %v3716, %v2704
      %vm3782 = vcmask 146432
      %v3784 = vsel %vm3782, %v3719, %v2729
      %v3786 = vsel %vm3782, %v3721, %v2731
      %v3788 = vsel %vm3782, %v3723, %v2733
      %v3790 = vsel %vm3782, %v3725, %v2735
      %v3792 = vsel %vm3782, %v3727, %v2737
      %v3794 = vsel %vm3782, %v3729, %v2739
      %v3796 = vsel %vm3782, %v3731, %v2741
      %v3798 = vsel %vm3782, %v3733, %v2743
      %v3800 = vsel %vm3782, %v3735, %v2745
      %v3802 = vsel %vm3782, %v3737, %v2747
      %v3804 = vsel %vm3782, %v3739, %v2749
      %v3806 = vsel %vm3782, %v3741, %v2751
      %v3808 = vsel %vm3782, %v3743, %v2753
      %v3810 = vsel %vm3782, %v3745, %v2755
      %v3812 = vsel %vm3782, %v3747, %v2757
      %v3814 = vsel %vm3782, %v3749, %v2759
      %v3816 = vsel %vm3782, %v3751, %v2761
      %v3818 = vsel %vm3782, %v3753, %v2763
      %v3820 = vsel %vm3782, %v3755, %v2765
      %v3822 = vsel %vm3782, %v3757, %v2767
      %v3824 = vsel %vm3782, %v3759, %v2769
      %v3826 = vsel %vm3782, %v3761, %v2771
      %v3828 = vsel %vm3782, %v3763, %v2773
      %v3830 = vsel %vm3782, %v3765, %v2775
      %v3832 = vsel %vm3782, %v3767, %v2777
      %v3834 = vsel %vm3782, %v3769, %v2779
      %v3836 = vsel %vm3782, %v3771, %v2781
      %v3838 = vsel %vm3782, %v3773, %v2783
      %v3840 = vsel %vm3782, %v3775, %v2785
      %v3842 = vsel %vm3782, %v3777, %v2787
      %v3844 = vsel %vm3782, %v3779, %v2789
      %v3846 = vsel %vm3782, %v3781, %v2791
      %vm3847 = vcmask 171008
      %v3849 = vsel %vm3847, %v3784, %v2798
      %v3851 = vsel %vm3847, %v3786, %v2800
      %v3853 = vsel %vm3847, %v3788, %v2802
      %v3855 = vsel %vm3847, %v3790, %v2804
      %v3857 = vsel %vm3847, %v3792, %v2806
      %v3859 = vsel %vm3847, %v3794, %v2808
      %v3861 = vsel %vm3847, %v3796, %v2810
      %v3863 = vsel %vm3847, %v3798, %v2812
      %v3865 = vsel %vm3847, %v3800, %v2814
      %v3867 = vsel %vm3847, %v3802, %v2816
      %v3869 = vsel %vm3847, %v3804, %v2818
      %v3871 = vsel %vm3847, %v3806, %v2820
      %v3873 = vsel %vm3847, %v3808, %v2822
      %v3875 = vsel %vm3847, %v3810, %v2824
      %v3877 = vsel %vm3847, %v3812, %v2826
      %v3879 = vsel %vm3847, %v3814, %v2828
      %v3881 = vsel %vm3847, %v3816, %v2830
      %v3883 = vsel %vm3847, %v3818, %v2832
      %v3885 = vsel %vm3847, %v3820, %v2834
      %v3887 = vsel %vm3847, %v3822, %v2836
      %v3889 = vsel %vm3847, %v3824, %v2838
      %v3891 = vsel %vm3847, %v3826, %v2840
      %v3893 = vsel %vm3847, %v3828, %v2842
      %v3895 = vsel %vm3847, %v3830, %v2844
      %v3897 = vsel %vm3847, %v3832, %v2846
      %v3899 = vsel %vm3847, %v3834, %v2848
      %v3901 = vsel %vm3847, %v3836, %v2850
      %v3903 = vsel %vm3847, %v3838, %v2852
      %v3905 = vsel %vm3847, %v3840, %v2854
      %v3907 = vsel %vm3847, %v3842, %v2856
      %v3909 = vsel %vm3847, %v3844, %v2858
      %v3911 = vsel %vm3847, %v3846, %v2860
      %vm3912 = vcmask 195584
      %v3914 = vsel %vm3912, %v3849, %v2875
      %v3916 = vsel %vm3912, %v3851, %v2877
      %v3918 = vsel %vm3912, %v3853, %v2879
      %v3920 = vsel %vm3912, %v3855, %v2881
      %v3922 = vsel %vm3912, %v3857, %v2883
      %v3924 = vsel %vm3912, %v3859, %v2885
      %v3926 = vsel %vm3912, %v3861, %v2887
      %v3928 = vsel %vm3912, %v3863, %v2889
      %v3930 = vsel %vm3912, %v3865, %v2891
      %v3932 = vsel %vm3912, %v3867, %v2893
      %v3934 = vsel %vm3912, %v3869, %v2895
      %v3936 = vsel %vm3912, %v3871, %v2897
      %v3938 = vsel %vm3912, %v3873, %v2899
      %v3940 = vsel %vm3912, %v3875, %v2901
      %v3942 = vsel %vm3912, %v3877, %v2903
      %v3944 = vsel %vm3912, %v3879, %v2905
      %v3946 = vsel %vm3912, %v3881, %v2907
      %v3948 = vsel %vm3912, %v3883, %v2909
      %v3950 = vsel %vm3912, %v3885, %v2911
      %v3952 = vsel %vm3912, %v3887, %v2913
      %v3954 = vsel %vm3912, %v3889, %v2915
      %v3956 = vsel %vm3912, %v3891, %v2917
      %v3958 = vsel %vm3912, %v3893, %v2919
      %v3960 = vsel %vm3912, %v3895, %v2921
      %v3962 = vsel %vm3912, %v3897, %v2923
      %v3964 = vsel %vm3912, %v3899, %v2925
      %v3966 = vsel %vm3912, %v3901, %v2927
      %v3968 = vsel %vm3912, %v3903, %v2929
      %v3970 = vsel %vm3912, %v3905, %v2931
      %v3972 = vsel %vm3912, %v3907, %v2933
      %v3974 = vsel %vm3912, %v3909, %v2935
      %v3976 = vsel %vm3912, %v3911, %v2937
      %vm3977 = vcmask 220160
      %v3979 = vsel %vm3977, %v3914, %v2944
      %v3981 = vsel %vm3977, %v3916, %v2946
      %v3983 = vsel %vm3977, %v3918, %v2948
      %v3985 = vsel %vm3977, %v3920, %v2950
      %v3987 = vsel %vm3977, %v3922, %v2952
      %v3989 = vsel %vm3977, %v3924, %v2954
      %v3991 = vsel %vm3977, %v3926, %v2956
      %v3993 = vsel %vm3977, %v3928, %v2958
      %v3995 = vsel %vm3977, %v3930, %v2960
      %v3997 = vsel %vm3977, %v3932, %v2962
      %v3999 = vsel %vm3977, %v3934, %v2964
      %v4001 = vsel %vm3977, %v3936, %v2966
      %v4003 = vsel %vm3977, %v3938, %v2968
      %v4005 = vsel %vm3977, %v3940, %v2970
      %v4007 = vsel %vm3977, %v3942, %v2972
      %v4009 = vsel %vm3977, %v3944, %v2974
      %v4011 = vsel %vm3977, %v3946, %v2976
      %v4013 = vsel %vm3977, %v3948, %v2978
      %v4015 = vsel %vm3977, %v3950, %v2980
      %v4017 = vsel %vm3977, %v3952, %v2982
      %v4019 = vsel %vm3977, %v3954, %v2984
      %v4021 = vsel %vm3977, %v3956, %v2986
      %v4023 = vsel %vm3977, %v3958, %v2988
      %v4025 = vsel %vm3977, %v3960, %v2990
      %v4027 = vsel %vm3977, %v3962, %v2992
      %v4029 = vsel %vm3977, %v3964, %v2994
      %v4031 = vsel %vm3977, %v3966, %v2996
      %v4033 = vsel %vm3977, %v3968, %v2998
      %v4035 = vsel %vm3977, %v3970, %v3000
      %v4037 = vsel %vm3977, %v3972, %v3002
      %v4039 = vsel %vm3977, %v3974, %v3004
      %v4041 = vsel %vm3977, %v3976, %v3006
      %vm4042 = vcmask 244736
      %v4044 = vsel %vm4042, %v3979, %v3018
      %v4046 = vsel %vm4042, %v3981, %v3020
      %v4048 = vsel %vm4042, %v3983, %v3022
      %v4050 = vsel %vm4042, %v3985, %v3024
      %v4052 = vsel %vm4042, %v3987, %v3026
      %v4054 = vsel %vm4042, %v3989, %v3028
      %v4056 = vsel %vm4042, %v3991, %v3030
      %v4058 = vsel %vm4042, %v3993, %v3032
      %v4060 = vsel %vm4042, %v3995, %v3034
      %v4062 = vsel %vm4042, %v3997, %v3036
      %v4064 = vsel %vm4042, %v3999, %v3038
      %v4066 = vsel %vm4042, %v4001, %v3040
      %v4068 = vsel %vm4042, %v4003, %v3042
      %v4070 = vsel %vm4042, %v4005, %v3044
      %v4072 = vsel %vm4042, %v4007, %v3046
      %v4074 = vsel %vm4042, %v4009, %v3048
      %v4076 = vsel %vm4042, %v4011, %v3050
      %v4078 = vsel %vm4042, %v4013, %v3052
      %v4080 = vsel %vm4042, %v4015, %v3054
      %v4082 = vsel %vm4042, %v4017, %v3056
      %v4084 = vsel %vm4042, %v4019, %v3058
      %v4086 = vsel %vm4042, %v4021, %v3060
      %v4088 = vsel %vm4042, %v4023, %v3062
      %v4090 = vsel %vm4042, %v4025, %v3064
      %v4092 = vsel %vm4042, %v4027, %v3066
      %v4094 = vsel %vm4042, %v4029, %v3068
      %v4096 = vsel %vm4042, %v4031, %v3070
      %v4098 = vsel %vm4042, %v4033, %v3072
      %v4100 = vsel %vm4042, %v4035, %v3074
      %v4102 = vsel %vm4042, %v4037, %v3076
      %v4104 = vsel %vm4042, %v4039, %v3078
      %v4106 = vsel %vm4042, %v4041, %v3080
      %vm4107 = vcmask 269312
      %v4109 = vsel %vm4107, %v4044, %v3105
      %v4111 = vsel %vm4107, %v4046, %v3107
      %v4113 = vsel %vm4107, %v4048, %v3109
      %v4115 = vsel %vm4107, %v4050, %v3111
      %v4117 = vsel %vm4107, %v4052, %v3113
      %v4119 = vsel %vm4107, %v4054, %v3115
      %v4121 = vsel %vm4107, %v4056, %v3117
      %v4123 = vsel %vm4107, %v4058, %v3119
      %v4125 = vsel %vm4107, %v4060, %v3121
      %v4127 = vsel %vm4107, %v4062, %v3123
      %v4129 = vsel %vm4107, %v4064, %v3125
      %v4131 = vsel %vm4107, %v4066, %v3127
      %v4133 = vsel %vm4107, %v4068, %v3129
      %v4135 = vsel %vm4107, %v4070, %v3131
      %v4137 = vsel %vm4107, %v4072, %v3133
      %v4139 = vsel %vm4107, %v4074, %v3135
      %v4141 = vsel %vm4107, %v4076, %v3137
      %v4143 = vsel %vm4107, %v4078, %v3139
      %v4145 = vsel %vm4107, %v4080, %v3141
      %v4147 = vsel %vm4107, %v4082, %v3143
      %v4149 = vsel %vm4107, %v4084, %v3145
      %v4151 = vsel %vm4107, %v4086, %v3147
      %v4153 = vsel %vm4107, %v4088, %v3149
      %v4155 = vsel %vm4107, %v4090, %v3151
      %v4157 = vsel %vm4107, %v4092, %v3153
      %v4159 = vsel %vm4107, %v4094, %v3155
      %v4161 = vsel %vm4107, %v4096, %v3157
      %v4163 = vsel %vm4107, %v4098, %v3159
      %v4165 = vsel %vm4107, %v4100, %v3161
      %v4167 = vsel %vm4107, %v4102, %v3163
      %v4169 = vsel %vm4107, %v4104, %v3165
      %v4171 = vsel %vm4107, %v4106, %v3167
      %vm4172 = vcmask 293888
      %v4174 = vsel %vm4172, %v4109, %v3174
      %v4176 = vsel %vm4172, %v4111, %v3176
      %v4178 = vsel %vm4172, %v4113, %v3178
      %v4180 = vsel %vm4172, %v4115, %v3180
      %v4182 = vsel %vm4172, %v4117, %v3182
      %v4184 = vsel %vm4172, %v4119, %v3184
      %v4186 = vsel %vm4172, %v4121, %v3186
      %v4188 = vsel %vm4172, %v4123, %v3188
      %v4190 = vsel %vm4172, %v4125, %v3190
      %v4192 = vsel %vm4172, %v4127, %v3192
      %v4194 = vsel %vm4172, %v4129, %v3194
      %v4196 = vsel %vm4172, %v4131, %v3196
      %v4198 = vsel %vm4172, %v4133, %v3198
      %v4200 = vsel %vm4172, %v4135, %v3200
      %v4202 = vsel %vm4172, %v4137, %v3202
      %v4204 = vsel %vm4172, %v4139, %v3204
      %v4206 = vsel %vm4172, %v4141, %v3206
      %v4208 = vsel %vm4172, %v4143, %v3208
      %v4210 = vsel %vm4172, %v4145, %v3210
      %v4212 = vsel %vm4172, %v4147, %v3212
      %v4214 = vsel %vm4172, %v4149, %v3214
      %v4216 = vsel %vm4172, %v4151, %v3216
      %v4218 = vsel %vm4172, %v4153, %v3218
      %v4220 = vsel %vm4172, %v4155, %v3220
      %v4222 = vsel %vm4172, %v4157, %v3222
      %v4224 = vsel %vm4172, %v4159, %v3224
      %v4226 = vsel %vm4172, %v4161, %v3226
      %v4228 = vsel %vm4172, %v4163, %v3228
      %v4230 = vsel %vm4172, %v4165, %v3230
      %v4232 = vsel %vm4172, %v4167, %v3232
      %v4234 = vsel %vm4172, %v4169, %v3234
      %v4236 = vsel %vm4172, %v4171, %v3236
      %vm4237 = vcmask 318464
      %v4239 = vsel %vm4237, %v4174, %v3251
      %v4241 = vsel %vm4237, %v4176, %v3253
      %v4243 = vsel %vm4237, %v4178, %v3255
      %v4245 = vsel %vm4237, %v4180, %v3257
      %v4247 = vsel %vm4237, %v4182, %v3259
      %v4249 = vsel %vm4237, %v4184, %v3261
      %v4251 = vsel %vm4237, %v4186, %v3263
      %v4253 = vsel %vm4237, %v4188, %v3265
      %v4255 = vsel %vm4237, %v4190, %v3267
      %v4257 = vsel %vm4237, %v4192, %v3269
      %v4259 = vsel %vm4237, %v4194, %v3271
      %v4261 = vsel %vm4237, %v4196, %v3273
      %v4263 = vsel %vm4237, %v4198, %v3275
      %v4265 = vsel %vm4237, %v4200, %v3277
      %v4267 = vsel %vm4237, %v4202, %v3279
      %v4269 = vsel %vm4237, %v4204, %v3281
      %v4271 = vsel %vm4237, %v4206, %v3283
      %v4273 = vsel %vm4237, %v4208, %v3285
      %v4275 = vsel %vm4237, %v4210, %v3287
      %v4277 = vsel %vm4237, %v4212, %v3289
      %v4279 = vsel %vm4237, %v4214, %v3291
      %v4281 = vsel %vm4237, %v4216, %v3293
      %v4283 = vsel %vm4237, %v4218, %v3295
      %v4285 = vsel %vm4237, %v4220, %v3297
      %v4287 = vsel %vm4237, %v4222, %v3299
      %v4289 = vsel %vm4237, %v4224, %v3301
      %v4291 = vsel %vm4237, %v4226, %v3303
      %v4293 = vsel %vm4237, %v4228, %v3305
      %v4295 = vsel %vm4237, %v4230, %v3307
      %v4297 = vsel %vm4237, %v4232, %v3309
      %v4299 = vsel %vm4237, %v4234, %v3311
      %v4301 = vsel %vm4237, %v4236, %v3313
      %vm4302 = vcmask 343040
      %v4304 = vsel %vm4302, %v4239, %v3320
      %v4306 = vsel %vm4302, %v4241, %v3322
      %v4308 = vsel %vm4302, %v4243, %v3324
      %v4310 = vsel %vm4302, %v4245, %v3326
      %v4312 = vsel %vm4302, %v4247, %v3328
      %v4314 = vsel %vm4302, %v4249, %v3330
      %v4316 = vsel %vm4302, %v4251, %v3332
      %v4318 = vsel %vm4302, %v4253, %v3334
      %v4320 = vsel %vm4302, %v4255, %v3336
      %v4322 = vsel %vm4302, %v4257, %v3338
      %v4324 = vsel %vm4302, %v4259, %v3340
      %v4326 = vsel %vm4302, %v4261, %v3342
      %v4328 = vsel %vm4302, %v4263, %v3344
      %v4330 = vsel %vm4302, %v4265, %v3346
      %v4332 = vsel %vm4302, %v4267, %v3348
      %v4334 = vsel %vm4302, %v4269, %v3350
      %v4336 = vsel %vm4302, %v4271, %v3352
      %v4338 = vsel %vm4302, %v4273, %v3354
      %v4340 = vsel %vm4302, %v4275, %v3356
      %v4342 = vsel %vm4302, %v4277, %v3358
      %v4344 = vsel %vm4302, %v4279, %v3360
      %v4346 = vsel %vm4302, %v4281, %v3362
      %v4348 = vsel %vm4302, %v4283, %v3364
      %v4350 = vsel %vm4302, %v4285, %v3366
      %v4352 = vsel %vm4302, %v4287, %v3368
      %v4354 = vsel %vm4302, %v4289, %v3370
      %v4356 = vsel %vm4302, %v4291, %v3372
      %v4358 = vsel %vm4302, %v4293, %v3374
      %v4360 = vsel %vm4302, %v4295, %v3376
      %v4362 = vsel %vm4302, %v4297, %v3378
      %v4364 = vsel %vm4302, %v4299, %v3380
      %v4366 = vsel %vm4302, %v4301, %v3382
      %vm4367 = vcmask 367616
      %v4369 = vsel %vm4367, %v4304, %v3394
      %v4371 = vsel %vm4367, %v4306, %v3396
      %v4373 = vsel %vm4367, %v4308, %v3398
      %v4375 = vsel %vm4367, %v4310, %v3400
      %v4377 = vsel %vm4367, %v4312, %v3402
      %v4379 = vsel %vm4367, %v4314, %v3404
      %v4381 = vsel %vm4367, %v4316, %v3406
      %v4383 = vsel %vm4367, %v4318, %v3408
      %v4385 = vsel %vm4367, %v4320, %v3410
      %v4387 = vsel %vm4367, %v4322, %v3412
      %v4389 = vsel %vm4367, %v4324, %v3414
      %v4391 = vsel %vm4367, %v4326, %v3416
      %v4393 = vsel %vm4367, %v4328, %v3418
      %v4395 = vsel %vm4367, %v4330, %v3420
      %v4397 = vsel %vm4367, %v4332, %v3422
      %v4399 = vsel %vm4367, %v4334, %v3424
      %v4401 = vsel %vm4367, %v4336, %v3426
      %v4403 = vsel %vm4367, %v4338, %v3428
      %v4405 = vsel %vm4367, %v4340, %v3430
      %v4407 = vsel %vm4367, %v4342, %v3432
      %v4409 = vsel %vm4367, %v4344, %v3434
      %v4411 = vsel %vm4367, %v4346, %v3436
      %v4413 = vsel %vm4367, %v4348, %v3438
      %v4415 = vsel %vm4367, %v4350, %v3440
      %v4417 = vsel %vm4367, %v4352, %v3442
      %v4419 = vsel %vm4367, %v4354, %v3444
      %v4421 = vsel %vm4367, %v4356, %v3446
      %v4423 = vsel %vm4367, %v4358, %v3448
      %v4425 = vsel %vm4367, %v4360, %v3450
      %v4427 = vsel %vm4367, %v4362, %v3452
      %v4429 = vsel %vm4367, %v4364, %v3454
      %v4431 = vsel %vm4367, %v4366, %v3456
      %v4433 = vunpack.c.l.b16 %v1469
      %v4434 = vpack.c.b16 %v4433, %v4433
      %v4436 = vshrl.u32 %v3391, 16
      %v4438 = vshll.u32 %v3391, 16
      %v4440 = vrot.slane %v4438, 1
      %v4441 = vor.u32 %v4436, %v4440
      %v4443 = vshll.u32 %v3392, 16
      %v4445 = vrot.slane %v4443, 1
      %v4446 = vsel %vm1683, %v4441, %v4445
      %v4447 = vshrl.u32 %v3392, 16
      %v4449 = vor.u32 %v4447, %v4445
      %v4451 = vshll.u32 %v4434, 16
      %v4453 = vrot.slane %v4451, 1
      %v4454 = vsel %vm1683, %v4449, %v4453
      %v4455 = vshrl.u32 %v4434, 16
      %4457 = vrot.lane.b32.xlu0 %v2260, 3
      %v4458 = vpop.permute.xlu0 %4457
      %4459 = vrot.lane.b32.xlu0 %v2273, 3
      %v4460 = vpop.permute.xlu0 %4459
      %4461 = vrot.lane.b32.xlu0 %v2286, 3
      %v4462 = vpop.permute.xlu0 %4461
      %4463 = vrot.lane.b32.xlu0 %v2299, 3
      %v4464 = vpop.permute.xlu0 %4463
      %4465 = vrot.lane.b32.xlu0 %v2312, 3
      %v4466 = vpop.permute.xlu0 %4465
      %4467 = vrot.lane.b32.xlu0 %v2325, 3
      %v4468 = vpop.permute.xlu0 %4467
      %4469 = vrot.lane.b32.xlu0 %v2338, 3
      %v4470 = vpop.permute.xlu0 %4469
      %4471 = vrot.lane.b32.xlu0 %v2351, 3
      %v4472 = vpop.permute.xlu0 %4471
      %4473 = vrot.lane.b32.xlu0 %v2364, 3
      %v4474 = vpop.permute.xlu0 %4473
      %4475 = vrot.lane.b32.xlu0 %v2377, 3
      %v4476 = vpop.permute.xlu0 %4475
      %4477 = vrot.lane.b32.xlu0 %v2390, 3
      %v4478 = vpop.permute.xlu0 %4477
      %4479 = vrot.lane.b32.xlu0 %v2403, 3
      %v4480 = vpop.permute.xlu0 %4479
      %4481 = vrot.lane.b32.xlu0 %v2416, 3
      %v4482 = vpop.permute.xlu0 %4481
      %4483 = vrot.lane.b32.xlu0 %v2719, 3
      %v4484 = vpop.permute.xlu0 %4483
      %4485 = vrot.lane.b32.xlu0 %v2727, 3
      %v4486 = vpop.permute.xlu0 %4485
      %4487 = vrot.lane.b32.xlu0 %v2868, 3
      %v4488 = vpop.permute.xlu0 %4487
      %4489 = vrot.lane.b32.xlu0 %v3095, 3
      %v4490 = vpop.permute.xlu0 %4489
      %4491 = vrot.lane.b32.xlu0 %v3103, 3
      %v4492 = vpop.permute.xlu0 %4491
      %4493 = vrot.lane.b32.xlu0 %v3244, 3
      %v4494 = vpop.permute.xlu0 %4493
      %4495 = vrot.lane.b32.xlu0 %v4446, 3
      %v4496 = vpop.permute.xlu0 %4495
      %4497 = vrot.lane.b32.xlu0 %v4454, 3
      %v4498 = vpop.permute.xlu0 %4497
      %4499 = vrot.lane.b32.xlu0 %v4455, 3
      %v4500 = vpop.permute.xlu0 %4499
      %v4501 = vrot.slane %v3391, 1
      %v4502 = vrot.slane %v3392, 1
      %v4503 = vsel %vm2068, %v4501, %v4502
      %v4504 = vrot.slane %v4434, 1
      %v4505 = vsel %vm2068, %v4502, %v4504
      %4506 = vrot.lane.b32.xlu0 %v2087, 6
      %v4507 = vpop.permute.xlu0 %4506
      %4508 = vrot.lane.b32.xlu0 %v2092, 6
      %v4509 = vpop.permute.xlu0 %4508
      %4510 = vrot.lane.b32.xlu0 %v2097, 6
      %v4511 = vpop.permute.xlu0 %4510
      %4512 = vrot.lane.b32.xlu0 %v2102, 6
      %v4513 = vpop.permute.xlu0 %4512
      %4514 = vrot.lane.b32.xlu0 %v2107, 6
      %v4515 = vpop.permute.xlu0 %4514
      %4516 = vrot.lane.b32.xlu0 %v2112, 6
      %v4517 = vpop.permute.xlu0 %4516
      %4518 = vrot.lane.b32.xlu0 %v2117, 6
      %v4519 = vpop.permute.xlu0 %4518
      %4520 = vrot.lane.b32.xlu0 %v2122, 6
      %v4521 = vpop.permute.xlu0 %4520
      %4522 = vrot.lane.b32.xlu0 %v2127, 6
      %v4523 = vpop.permute.xlu0 %4522
      %4524 = vrot.lane.b32.xlu0 %v2132, 6
      %v4525 = vpop.permute.xlu0 %4524
      %4526 = vrot.lane.b32.xlu0 %v2137, 6
      %v4527 = vpop.permute.xlu0 %4526
      %4528 = vrot.lane.b32.xlu0 %v2142, 6
      %v4529 = vpop.permute.xlu0 %4528
      %4530 = vrot.lane.b32.xlu0 %v2147, 6
      %v4531 = vpop.permute.xlu0 %4530
      %4532 = vrot.lane.b32.xlu0 %v2794, 6
      %v4533 = vpop.permute.xlu0 %4532
      %4534 = vrot.lane.b32.xlu0 %v2796, 6
      %v4535 = vpop.permute.xlu0 %4534
      %4536 = vrot.lane.b32.xlu0 %v2795, 6
      %v4537 = vpop.permute.xlu0 %4536
      %4538 = vrot.lane.b32.xlu0 %v3170, 6
      %v4539 = vpop.permute.xlu0 %4538
      %4540 = vrot.lane.b32.xlu0 %v3172, 6
      %v4541 = vpop.permute.xlu0 %4540
      %4542 = vrot.lane.b32.xlu0 %v3171, 6
      %v4543 = vpop.permute.xlu0 %4542
      %4544 = vrot.lane.b32.xlu0 %v4503, 6
      %v4545 = vpop.permute.xlu0 %4544
      %4546 = vrot.lane.b32.xlu0 %v4505, 6
      %v4547 = vpop.permute.xlu0 %4546
      %4548 = vrot.lane.b32.xlu0 %v4504, 6
      %v4549 = vpop.permute.xlu0 %4548
      %v4550 = vrot.slane %v4436, 1
      %v4551 = vrot.slane %v4438, 2
      %v4552 = vor.u32 %v4550, %v4551
      %v4553 = vrot.slane %v4447, 1
      %v4554 = vrot.slane %v4443, 2
      %v4555 = vor.u32 %v4553, %v4554
      %v4556 = vsel %vm2213, %v4552, %v4555
      %v4557 = vrot.slane %v4455, 1
      %v4558 = vrot.slane %v4451, 2
      %v4559 = vor.u32 %v4557, %v4558
      %v4560 = vsel %vm2213, %v4555, %v4559
      %4561 = vrot.lane.b32.xlu0 %v2262, 9
      %v4562 = vpop.permute.xlu0 %4561
      %4563 = vrot.lane.b32.xlu0 %v2275, 9
      %v4564 = vpop.permute.xlu0 %4563
      %4565 = vrot.lane.b32.xlu0 %v2288, 9
      %v4566 = vpop.permute.xlu0 %4565
      %4567 = vrot.lane.b32.xlu0 %v2301, 9
      %v4568 = vpop.permute.xlu0 %4567
      %4569 = vrot.lane.b32.xlu0 %v2314, 9
      %v4570 = vpop.permute.xlu0 %4569
      %4571 = vrot.lane.b32.xlu0 %v2327, 9
      %v4572 = vpop.permute.xlu0 %4571
      %4573 = vrot.lane.b32.xlu0 %v2340, 9
      %v4574 = vpop.permute.xlu0 %4573
      %4575 = vrot.lane.b32.xlu0 %v2353, 9
      %v4576 = vpop.permute.xlu0 %4575
      %4577 = vrot.lane.b32.xlu0 %v2366, 9
      %v4578 = vpop.permute.xlu0 %4577
      %4579 = vrot.lane.b32.xlu0 %v2379, 9
      %v4580 = vpop.permute.xlu0 %4579
      %4581 = vrot.lane.b32.xlu0 %v2392, 9
      %v4582 = vpop.permute.xlu0 %4581
      %4583 = vrot.lane.b32.xlu0 %v2405, 9
      %v4584 = vpop.permute.xlu0 %4583
      %4585 = vrot.lane.b32.xlu0 %v2418, 9
      %v4586 = vpop.permute.xlu0 %4585
      %4587 = vrot.lane.b32.xlu0 %v2867, 9
      %v4588 = vpop.permute.xlu0 %4587
      %4589 = vrot.lane.b32.xlu0 %v2873, 9
      %v4590 = vpop.permute.xlu0 %4589
      %4591 = vrot.lane.b32.xlu0 %v2870, 9
      %v4592 = vpop.permute.xlu0 %4591
      %4593 = vrot.lane.b32.xlu0 %v3243, 9
      %v4594 = vpop.permute.xlu0 %4593
      %4595 = vrot.lane.b32.xlu0 %v3249, 9
      %v4596 = vpop.permute.xlu0 %4595
      %4597 = vrot.lane.b32.xlu0 %v3246, 9
      %v4598 = vpop.permute.xlu0 %4597
      %4599 = vrot.lane.b32.xlu0 %v4556, 9
      %v4600 = vpop.permute.xlu0 %4599
      %4601 = vrot.lane.b32.xlu0 %v4560, 9
      %v4602 = vpop.permute.xlu0 %4601
      %4603 = vrot.lane.b32.xlu0 %v4557, 9
      %v4604 = vpop.permute.xlu0 %4603
      %v4609 = vunpack.c.l.b16 %v1470
      %v4610 = vunpack.c.l.b16 %v1471
      %v4611 = vunpack.c.l.b16 %v1472
      %v4612 = vunpack.c.l.b16 %v1473
      %v4613 = vpack.c.b16 %v4610, %v4609
      %v4614 = vpack.c.b16 %v4612, %v4611
      %vm4615 = vsmask.f32 256
      %v4616 = vrot.slane %v1765, 7
      %v4617 = vor.u32 %v4616, %v1767
      %v4618 = vrot.slane %v1776, 7
      %v4619 = vor.u32 %v4618, %v1772
      %v4620 = vsel %vm4615, %v4616, %v4619
      %v4621 = vrot.slane %v1785, 7
      %v4622 = vor.u32 %v4621, %v1787
      %v4623 = vrot.slane %v1796, 7
      %v4624 = vor.u32 %v4623, %v1792
      %v4625 = vsel %vm4615, %v4621, %v4624
      %v4626 = vrot.slane %v1805, 7
      %v4627 = vor.u32 %v4626, %v1807
      %v4628 = vrot.slane %v1816, 7
      %v4629 = vor.u32 %v4628, %v1812
      %v4630 = vsel %vm4615, %v4626, %v4629
      %v4631 = vrot.slane %v1825, 7
      %v4632 = vor.u32 %v4631, %v1827
      %v4633 = vrot.slane %v1836, 7
      %v4634 = vor.u32 %v4633, %v1832
      %v4635 = vsel %vm4615, %v4631, %v4634
      %v4636 = vrot.slane %v1845, 7
      %v4637 = vor.u32 %v4636, %v1847
      %v4638 = vrot.slane %v1856, 7
      %v4639 = vor.u32 %v4638, %v1852
      %v4640 = vsel %vm4615, %v4636, %v4639
      %v4641 = vrot.slane %v1865, 7
      %v4642 = vor.u32 %v4641, %v1867
      %v4643 = vrot.slane %v1876, 7
      %v4644 = vor.u32 %v4643, %v1872
      %v4645 = vsel %vm4615, %v4641, %v4644
      %v4646 = vrot.slane %v1885, 7
      %v4647 = vor.u32 %v4646, %v1887
      %v4648 = vrot.slane %v1896, 7
      %v4649 = vor.u32 %v4648, %v1892
      %v4650 = vsel %vm4615, %v4646, %v4649
      %v4651 = vrot.slane %v1905, 7
      %v4652 = vor.u32 %v4651, %v1907
      %v4653 = vrot.slane %v1916, 7
      %v4654 = vor.u32 %v4653, %v1912
      %v4655 = vsel %vm4615, %v4651, %v4654
      %v4656 = vrot.slane %v1925, 7
      %v4657 = vor.u32 %v4656, %v1927
      %v4658 = vrot.slane %v1936, 7
      %v4659 = vor.u32 %v4658, %v1932
      %v4660 = vsel %vm4615, %v4656, %v4659
      %v4661 = vrot.slane %v1945, 7
      %v4662 = vor.u32 %v4661, %v1947
      %v4663 = vrot.slane %v1956, 7
      %v4664 = vor.u32 %v4663, %v1952
      %v4665 = vsel %vm4615, %v4661, %v4664
      %v4666 = vrot.slane %v1965, 7
      %v4667 = vor.u32 %v4666, %v1967
      %v4668 = vrot.slane %v1976, 7
      %v4669 = vor.u32 %v4668, %v1972
      %v4670 = vsel %vm4615, %v4666, %v4669
      %v4671 = vrot.slane %v1985, 7
      %v4672 = vor.u32 %v4671, %v1987
      %v4673 = vrot.slane %v1996, 7
      %v4674 = vor.u32 %v4673, %v1992
      %v4675 = vsel %vm4615, %v4671, %v4674
      %v4676 = vrot.slane %v2709, 7
      %v4677 = vor.u32 %v4676, %v2711
      %v4678 = vrot.slane %v2720, 7
      %v4679 = vor.u32 %v4678, %v2716
      %v4680 = vsel %vm4615, %v4676, %v4679
      %v4681 = vrot.slane %v3085, 7
      %v4682 = vor.u32 %v4681, %v3087
      %v4683 = vrot.slane %v3096, 7
      %v4684 = vor.u32 %v4683, %v3092
      %v4685 = vsel %vm4615, %v4681, %v4684
      %v4686 = vrot.slane %v4436, 7
      %v4687 = vor.u32 %v4686, %v4438
      %v4688 = vrot.slane %v4447, 7
      %v4689 = vor.u32 %v4688, %v4443
      %v4690 = vsel %vm4615, %v4686, %v4689
      %v4692 = vshrl.u32 %v4613, 16
      %v4694 = vrot.slane %v4692, 7
      %v4695 = vshll.u32 %v4613, 16
      %v4697 = vor.u32 %v4694, %v4695
      %v4699 = vshrl.u32 %v4614, 16
      %v4701 = vrot.slane %v4699, 7
      %v4702 = vshll.u32 %v4614, 16
      %v4704 = vor.u32 %v4701, %v4702
      %v4705 = vsel %vm4615, %v4694, %v4704
      %4706 = vrot.lane.b32.xlu0 %v4617, 12
      %v4707 = vpop.permute.xlu0 %4706
      %4708 = vrot.lane.b32.xlu0 %v4620, 12
      %v4709 = vpop.permute.xlu0 %4708
      %4710 = vrot.lane.b32.xlu0 %v4618, 12
      %v4711 = vpop.permute.xlu0 %4710
      %4712 = vrot.lane.b32.xlu0 %v4622, 12
      %v4713 = vpop.permute.xlu0 %4712
      %4714 = vrot.lane.b32.xlu0 %v4625, 12
      %v4715 = vpop.permute.xlu0 %4714
      %4716 = vrot.lane.b32.xlu0 %v4623, 12
      %v4717 = vpop.permute.xlu0 %4716
      %4718 = vrot.lane.b32.xlu0 %v4627, 12
      %v4719 = vpop.permute.xlu0 %4718
      %4720 = vrot.lane.b32.xlu0 %v4630, 12
      %v4721 = vpop.permute.xlu0 %4720
      %4722 = vrot.lane.b32.xlu0 %v4628, 12
      %v4723 = vpop.permute.xlu0 %4722
      %4724 = vrot.lane.b32.xlu0 %v4632, 12
      %v4725 = vpop.permute.xlu0 %4724
      %4726 = vrot.lane.b32.xlu0 %v4635, 12
      %v4727 = vpop.permute.xlu0 %4726
      %4728 = vrot.lane.b32.xlu0 %v4633, 12
      %v4729 = vpop.permute.xlu0 %4728
      %4730 = vrot.lane.b32.xlu0 %v4637, 12
      %v4731 = vpop.permute.xlu0 %4730
      %4732 = vrot.lane.b32.xlu0 %v4640, 12
      %v4733 = vpop.permute.xlu0 %4732
      %4734 = vrot.lane.b32.xlu0 %v4638, 12
      %v4735 = vpop.permute.xlu0 %4734
      %4736 = vrot.lane.b32.xlu0 %v4642, 12
      %v4737 = vpop.permute.xlu0 %4736
      %4738 = vrot.lane.b32.xlu0 %v4645, 12
      %v4739 = vpop.permute.xlu0 %4738
      %4740 = vrot.lane.b32.xlu0 %v4643, 12
      %v4741 = vpop.permute.xlu0 %4740
      %4742 = vrot.lane.b32.xlu0 %v4647, 12
      %v4743 = vpop.permute.xlu0 %4742
      %4744 = vrot.lane.b32.xlu0 %v4650, 12
      %v4745 = vpop.permute.xlu0 %4744
      %4746 = vrot.lane.b32.xlu0 %v4648, 12
      %v4747 = vpop.permute.xlu0 %4746
      %4748 = vrot.lane.b32.xlu0 %v4652, 12
      %v4749 = vpop.permute.xlu0 %4748
      %4750 = vrot.lane.b32.xlu0 %v4655, 12
      %v4751 = vpop.permute.xlu0 %4750
      %4752 = vrot.lane.b32.xlu0 %v4653, 12
      %v4753 = vpop.permute.xlu0 %4752
      %4754 = vrot.lane.b32.xlu0 %v4657, 12
      %v4755 = vpop.permute.xlu0 %4754
      %4756 = vrot.lane.b32.xlu0 %v4660, 12
      %v4757 = vpop.permute.xlu0 %4756
      %4758 = vrot.lane.b32.xlu0 %v4658, 12
      %v4759 = vpop.permute.xlu0 %4758
      %4760 = vrot.lane.b32.xlu0 %v4662, 12
      %v4761 = vpop.permute.xlu0 %4760
      %4762 = vrot.lane.b32.xlu0 %v4665, 12
      %v4763 = vpop.permute.xlu0 %4762
      %4764 = vrot.lane.b32.xlu0 %v4663, 12
      %v4765 = vpop.permute.xlu0 %4764
      %4766 = vrot.lane.b32.xlu0 %v4667, 12
      %v4767 = vpop.permute.xlu0 %4766
      %4768 = vrot.lane.b32.xlu0 %v4670, 12
      %v4769 = vpop.permute.xlu0 %4768
      %4770 = vrot.lane.b32.xlu0 %v4668, 12
      %v4771 = vpop.permute.xlu0 %4770
      %4772 = vrot.lane.b32.xlu0 %v4672, 12
      %v4773 = vpop.permute.xlu0 %4772
      %4774 = vrot.lane.b32.xlu0 %v4675, 12
      %v4775 = vpop.permute.xlu0 %4774
      %4776 = vrot.lane.b32.xlu0 %v4673, 12
      %v4777 = vpop.permute.xlu0 %4776
      %4778 = vrot.lane.b32.xlu0 %v4677, 12
      %v4779 = vpop.permute.xlu0 %4778
      %4780 = vrot.lane.b32.xlu0 %v4680, 12
      %v4781 = vpop.permute.xlu0 %4780
      %4782 = vrot.lane.b32.xlu0 %v4678, 12
      %v4783 = vpop.permute.xlu0 %4782
      %4784 = vrot.lane.b32.xlu0 %v4682, 12
      %v4785 = vpop.permute.xlu0 %4784
      %4786 = vrot.lane.b32.xlu0 %v4685, 12
      %v4787 = vpop.permute.xlu0 %4786
      %4788 = vrot.lane.b32.xlu0 %v4683, 12
      %v4789 = vpop.permute.xlu0 %4788
      %4790 = vrot.lane.b32.xlu0 %v4687, 12
      %v4791 = vpop.permute.xlu0 %4790
      %4792 = vrot.lane.b32.xlu0 %v4690, 12
      %v4793 = vpop.permute.xlu0 %4792
      %4794 = vrot.lane.b32.xlu0 %v4688, 12
      %v4795 = vpop.permute.xlu0 %4794
      %4796 = vrot.lane.b32.xlu0 %v4697, 12
      %v4797 = vpop.permute.xlu0 %4796
      %4798 = vrot.lane.b32.xlu0 %v4705, 12
      %v4799 = vpop.permute.xlu0 %4798
      %4800 = vrot.lane.b32.xlu0 %v4701, 12
      %v4801 = vpop.permute.xlu0 %4800
      %v4803 = vunpack.c.l.b16 %v1474
      %v4804 = vpack.c.b16 %v4803, %v4803
      %4805 = vrot.lane.b32.xlu0 %v1671, 15
      %v4806 = vpop.permute.xlu0 %4805
      %4807 = vrot.lane.b32.xlu0 %v1672, 15
      %v4808 = vpop.permute.xlu0 %4807
      %4809 = vrot.lane.b32.xlu0 %v1673, 15
      %v4810 = vpop.permute.xlu0 %4809
      %4811 = vrot.lane.b32.xlu0 %v1674, 15
      %v4812 = vpop.permute.xlu0 %4811
      %4813 = vrot.lane.b32.xlu0 %v1675, 15
      %v4814 = vpop.permute.xlu0 %4813
      %4815 = vrot.lane.b32.xlu0 %v1676, 15
      %v4816 = vpop.permute.xlu0 %4815
      %4817 = vrot.lane.b32.xlu0 %v1677, 15
      %v4818 = vpop.permute.xlu0 %4817
      %4819 = vrot.lane.b32.xlu0 %v1678, 15
      %v4820 = vpop.permute.xlu0 %4819
      %4821 = vrot.lane.b32.xlu0 %v1679, 15
      %v4822 = vpop.permute.xlu0 %4821
      %4823 = vrot.lane.b32.xlu0 %v1680, 15
      %v4824 = vpop.permute.xlu0 %4823
      %4825 = vrot.lane.b32.xlu0 %v1681, 15
      %v4826 = vpop.permute.xlu0 %4825
      %4827 = vrot.lane.b32.xlu0 %v1682, 15
      %v4828 = vpop.permute.xlu0 %4827
      %4829 = vrot.lane.b32.xlu0 %v2707, 15
      %v4830 = vpop.permute.xlu0 %4829
      %4831 = vrot.lane.b32.xlu0 %v3015, 15
      %v4832 = vpop.permute.xlu0 %4831
      %4833 = vrot.lane.b32.xlu0 %v3016, 15
      %v4834 = vpop.permute.xlu0 %4833
      %4835 = vrot.lane.b32.xlu0 %v3083, 15
      %v4836 = vpop.permute.xlu0 %4835
      %4837 = vrot.lane.b32.xlu0 %v3391, 15
      %v4838 = vpop.permute.xlu0 %4837
      %4839 = vrot.lane.b32.xlu0 %v3392, 15
      %v4840 = vpop.permute.xlu0 %4839
      %4841 = vrot.lane.b32.xlu0 %v4434, 15
      %v4842 = vpop.permute.xlu0 %4841
      %4843 = vrot.lane.b32.xlu0 %v4613, 15
      %v4844 = vpop.permute.xlu0 %4843
      %4845 = vrot.lane.b32.xlu0 %v4614, 15
      %v4846 = vpop.permute.xlu0 %4845
      %4847 = vrot.lane.b32.xlu0 %v4804, 15
      %v4848 = vpop.permute.xlu0 %4847
      %v4849 = vrot.slane %v4695, 1
      %v4850 = vor.u32 %v4692, %v4849
      %v4851 = vrot.slane %v4702, 1
      %v4852 = vsel %vm1683, %v4850, %v4851
      %v4853 = vor.u32 %v4699, %v4851
      %v4855 = vshll.u32 %v4804, 16
      %v4857 = vrot.slane %v4855, 1
      %v4858 = vsel %vm1683, %v4853, %v4857
      %v4859 = vshrl.u32 %v4804, 16
      %4861 = vrot.lane.b32.xlu0 %v2273, 18
      %v4862 = vpop.permute.xlu0 %4861
      %4863 = vrot.lane.b32.xlu0 %v2286, 18
      %v4864 = vpop.permute.xlu0 %4863
      %4865 = vrot.lane.b32.xlu0 %v2299, 18
      %v4866 = vpop.permute.xlu0 %4865
      %4867 = vrot.lane.b32.xlu0 %v2312, 18
      %v4868 = vpop.permute.xlu0 %4867
      %4869 = vrot.lane.b32.xlu0 %v2325, 18
      %v4870 = vpop.permute.xlu0 %4869
      %4871 = vrot.lane.b32.xlu0 %v2338, 18
      %v4872 = vpop.permute.xlu0 %4871
      %4873 = vrot.lane.b32.xlu0 %v2351, 18
      %v4874 = vpop.permute.xlu0 %4873
      %4875 = vrot.lane.b32.xlu0 %v2364, 18
      %v4876 = vpop.permute.xlu0 %4875
      %4877 = vrot.lane.b32.xlu0 %v2377, 18
      %v4878 = vpop.permute.xlu0 %4877
      %4879 = vrot.lane.b32.xlu0 %v2390, 18
      %v4880 = vpop.permute.xlu0 %4879
      %4881 = vrot.lane.b32.xlu0 %v2403, 18
      %v4882 = vpop.permute.xlu0 %4881
      %4883 = vrot.lane.b32.xlu0 %v2416, 18
      %v4884 = vpop.permute.xlu0 %4883
      %4885 = vrot.lane.b32.xlu0 %v2868, 18
      %v4886 = vpop.permute.xlu0 %4885
      %4887 = vrot.lane.b32.xlu0 %v3095, 18
      %v4888 = vpop.permute.xlu0 %4887
      %4889 = vrot.lane.b32.xlu0 %v3103, 18
      %v4890 = vpop.permute.xlu0 %4889
      %4891 = vrot.lane.b32.xlu0 %v3244, 18
      %v4892 = vpop.permute.xlu0 %4891
      %4893 = vrot.lane.b32.xlu0 %v4446, 18
      %v4894 = vpop.permute.xlu0 %4893
      %4895 = vrot.lane.b32.xlu0 %v4454, 18
      %v4896 = vpop.permute.xlu0 %4895
      %4897 = vrot.lane.b32.xlu0 %v4455, 18
      %v4898 = vpop.permute.xlu0 %4897
      %4899 = vrot.lane.b32.xlu0 %v4852, 18
      %v4900 = vpop.permute.xlu0 %4899
      %4901 = vrot.lane.b32.xlu0 %v4858, 18
      %v4902 = vpop.permute.xlu0 %4901
      %4903 = vrot.lane.b32.xlu0 %v4859, 18
      %v4904 = vpop.permute.xlu0 %4903
      %v4905 = vrot.slane %v4613, 1
      %v4906 = vrot.slane %v4614, 1
      %v4907 = vsel %vm2068, %v4905, %v4906
      %v4908 = vrot.slane %v4804, 1
      %v4909 = vsel %vm2068, %v4906, %v4908
      %4910 = vrot.lane.b32.xlu0 %v2092, 21
      %v4911 = vpop.permute.xlu0 %4910
      %4912 = vrot.lane.b32.xlu0 %v2097, 21
      %v4913 = vpop.permute.xlu0 %4912
      %4914 = vrot.lane.b32.xlu0 %v2102, 21
      %v4915 = vpop.permute.xlu0 %4914
      %4916 = vrot.lane.b32.xlu0 %v2107, 21
      %v4917 = vpop.permute.xlu0 %4916
      %4918 = vrot.lane.b32.xlu0 %v2112, 21
      %v4919 = vpop.permute.xlu0 %4918
      %4920 = vrot.lane.b32.xlu0 %v2117, 21
      %v4921 = vpop.permute.xlu0 %4920
      %4922 = vrot.lane.b32.xlu0 %v2122, 21
      %v4923 = vpop.permute.xlu0 %4922
      %4924 = vrot.lane.b32.xlu0 %v2127, 21
      %v4925 = vpop.permute.xlu0 %4924
      %4926 = vrot.lane.b32.xlu0 %v2132, 21
      %v4927 = vpop.permute.xlu0 %4926
      %4928 = vrot.lane.b32.xlu0 %v2137, 21
      %v4929 = vpop.permute.xlu0 %4928
      %4930 = vrot.lane.b32.xlu0 %v2142, 21
      %v4931 = vpop.permute.xlu0 %4930
      %4932 = vrot.lane.b32.xlu0 %v2147, 21
      %v4933 = vpop.permute.xlu0 %4932
      %4934 = vrot.lane.b32.xlu0 %v2795, 21
      %v4935 = vpop.permute.xlu0 %4934
      %4936 = vrot.lane.b32.xlu0 %v3170, 21
      %v4937 = vpop.permute.xlu0 %4936
      %4938 = vrot.lane.b32.xlu0 %v3172, 21
      %v4939 = vpop.permute.xlu0 %4938
      %4940 = vrot.lane.b32.xlu0 %v3171, 21
      %v4941 = vpop.permute.xlu0 %4940
      %4942 = vrot.lane.b32.xlu0 %v4503, 21
      %v4943 = vpop.permute.xlu0 %4942
      %4944 = vrot.lane.b32.xlu0 %v4505, 21
      %v4945 = vpop.permute.xlu0 %4944
      %4946 = vrot.lane.b32.xlu0 %v4504, 21
      %v4947 = vpop.permute.xlu0 %4946
      %4948 = vrot.lane.b32.xlu0 %v4907, 21
      %v4949 = vpop.permute.xlu0 %4948
      %4950 = vrot.lane.b32.xlu0 %v4909, 21
      %v4951 = vpop.permute.xlu0 %4950
      %4952 = vrot.lane.b32.xlu0 %v4908, 21
      %v4953 = vpop.permute.xlu0 %4952
      %v4954 = vrot.slane %v4692, 1
      %v4955 = vrot.slane %v4695, 2
      %v4956 = vor.u32 %v4954, %v4955
      %v4957 = vrot.slane %v4699, 1
      %v4958 = vrot.slane %v4702, 2
      %v4959 = vor.u32 %v4957, %v4958
      %v4960 = vsel %vm2213, %v4956, %v4959
      %v4961 = vrot.slane %v4859, 1
      %v4962 = vrot.slane %v4855, 2
      %v4963 = vor.u32 %v4961, %v4962
      %v4964 = vsel %vm2213, %v4959, %v4963
      %4965 = vrot.lane.b32.xlu0 %v2275, 24
      %v4966 = vpop.permute.xlu0 %4965
      %4967 = vrot.lane.b32.xlu0 %v2288, 24
      %v4968 = vpop.permute.xlu0 %4967
      %4969 = vrot.lane.b32.xlu0 %v2301, 24
      %v4970 = vpop.permute.xlu0 %4969
      %4971 = vrot.lane.b32.xlu0 %v2314, 24
      %v4972 = vpop.permute.xlu0 %4971
      %4973 = vrot.lane.b32.xlu0 %v2327, 24
      %v4974 = vpop.permute.xlu0 %4973
      %4975 = vrot.lane.b32.xlu0 %v2340, 24
      %v4976 = vpop.permute.xlu0 %4975
      %4977 = vrot.lane.b32.xlu0 %v2353, 24
      %v4978 = vpop.permute.xlu0 %4977
      %4979 = vrot.lane.b32.xlu0 %v2366, 24
      %v4980 = vpop.permute.xlu0 %4979
      %4981 = vrot.lane.b32.xlu0 %v2379, 24
      %v4982 = vpop.permute.xlu0 %4981
      %4983 = vrot.lane.b32.xlu0 %v2392, 24
      %v4984 = vpop.permute.xlu0 %4983
      %4985 = vrot.lane.b32.xlu0 %v2405, 24
      %v4986 = vpop.permute.xlu0 %4985
      %4987 = vrot.lane.b32.xlu0 %v2418, 24
      %v4988 = vpop.permute.xlu0 %4987
      %4989 = vrot.lane.b32.xlu0 %v2870, 24
      %v4990 = vpop.permute.xlu0 %4989
      %4991 = vrot.lane.b32.xlu0 %v3243, 24
      %v4992 = vpop.permute.xlu0 %4991
      %4993 = vrot.lane.b32.xlu0 %v3249, 24
      %v4994 = vpop.permute.xlu0 %4993
      %4995 = vrot.lane.b32.xlu0 %v3246, 24
      %v4996 = vpop.permute.xlu0 %4995
      %4997 = vrot.lane.b32.xlu0 %v4556, 24
      %v4998 = vpop.permute.xlu0 %4997
      %4999 = vrot.lane.b32.xlu0 %v4560, 24
      %v5000 = vpop.permute.xlu0 %4999
      %5001 = vrot.lane.b32.xlu0 %v4557, 24
      %v5002 = vpop.permute.xlu0 %5001
      %5003 = vrot.lane.b32.xlu0 %v4960, 24
      %v5004 = vpop.permute.xlu0 %5003
      %5005 = vrot.lane.b32.xlu0 %v4964, 24
      %v5006 = vpop.permute.xlu0 %5005
      %5007 = vrot.lane.b32.xlu0 %v4961, 24
      %v5008 = vpop.permute.xlu0 %5007
      %v5010 = vsel %vm3457, %v1670, %v4458
      %v5012 = vsel %vm3457, %v1671, %v4460
      %v5014 = vsel %vm3457, %v1672, %v4462
      %v5016 = vsel %vm3457, %v1673, %v4464
      %v5018 = vsel %vm3457, %v1674, %v4466
      %v5020 = vsel %vm3457, %v1675, %v4468
      %v5022 = vsel %vm3457, %v1676, %v4470
      %v5024 = vsel %vm3457, %v1677, %v4472
      %v5026 = vsel %vm3457, %v1678, %v4474
      %v5028 = vsel %vm3457, %v1679, %v4476
      %v5030 = vsel %vm3457, %v1680, %v4478
      %v5032 = vsel %vm3457, %v1681, %v4480
      %v5034 = vsel %vm3457, %v1682, %v4482
      %v5036 = vsel %vm3457, %v2639, %v4484
      %v5038 = vsel %vm3457, %v2640, %v4486
      %v5040 = vsel %vm3457, %v2707, %v4488
      %v5042 = vsel %vm3457, %v3015, %v4490
      %v5044 = vsel %vm3457, %v3016, %v4492
      %v5046 = vsel %vm3457, %v3083, %v4494
      %v5048 = vsel %vm3457, %v3391, %v4496
      %v5050 = vsel %vm3457, %v3392, %v4498
      %v5052 = vsel %vm3457, %v4434, %v4500
      %v5054 = vsel %vm3522, %v5010, %v4507
      %v5056 = vsel %vm3522, %v5012, %v4509
      %v5058 = vsel %vm3522, %v5014, %v4511
      %v5060 = vsel %vm3522, %v5016, %v4513
      %v5062 = vsel %vm3522, %v5018, %v4515
      %v5064 = vsel %vm3522, %v5020, %v4517
      %v5066 = vsel %vm3522, %v5022, %v4519
      %v5068 = vsel %vm3522, %v5024, %v4521
      %v5070 = vsel %vm3522, %v5026, %v4523
      %v5072 = vsel %vm3522, %v5028, %v4525
      %v5074 = vsel %vm3522, %v5030, %v4527
      %v5076 = vsel %vm3522, %v5032, %v4529
      %v5078 = vsel %vm3522, %v5034, %v4531
      %v5080 = vsel %vm3522, %v5036, %v4533
      %v5082 = vsel %vm3522, %v5038, %v4535
      %v5084 = vsel %vm3522, %v5040, %v4537
      %v5086 = vsel %vm3522, %v5042, %v4539
      %v5088 = vsel %vm3522, %v5044, %v4541
      %v5090 = vsel %vm3522, %v5046, %v4543
      %v5092 = vsel %vm3522, %v5048, %v4545
      %v5094 = vsel %vm3522, %v5050, %v4547
      %v5096 = vsel %vm3522, %v5052, %v4549
      %v5098 = vsel %vm3587, %v5054, %v4562
      %v5100 = vsel %vm3587, %v5056, %v4564
      %v5102 = vsel %vm3587, %v5058, %v4566
      %v5104 = vsel %vm3587, %v5060, %v4568
      %v5106 = vsel %vm3587, %v5062, %v4570
      %v5108 = vsel %vm3587, %v5064, %v4572
      %v5110 = vsel %vm3587, %v5066, %v4574
      %v5112 = vsel %vm3587, %v5068, %v4576
      %v5114 = vsel %vm3587, %v5070, %v4578
      %v5116 = vsel %vm3587, %v5072, %v4580
      %v5118 = vsel %vm3587, %v5074, %v4582
      %v5120 = vsel %vm3587, %v5076, %v4584
      %v5122 = vsel %vm3587, %v5078, %v4586
      %v5124 = vsel %vm3587, %v5080, %v4588
      %v5126 = vsel %vm3587, %v5082, %v4590
      %v5128 = vsel %vm3587, %v5084, %v4592
      %v5130 = vsel %vm3587, %v5086, %v4594
      %v5132 = vsel %vm3587, %v5088, %v4596
      %v5134 = vsel %vm3587, %v5090, %v4598
      %v5136 = vsel %vm3587, %v5092, %v4600
      %v5138 = vsel %vm3587, %v5094, %v4602
      %v5140 = vsel %vm3587, %v5096, %v4604
      %v5142 = vsel %vm3652, %v3601, %v4707
      %v5144 = vsel %vm3652, %v3603, %v4709
      %v5146 = vsel %vm3652, %v5098, %v4711
      %v5148 = vsel %vm3652, %v3605, %v4713
      %v5150 = vsel %vm3652, %v3607, %v4715
      %v5152 = vsel %vm3652, %v5100, %v4717
      %v5154 = vsel %vm3652, %v3609, %v4719
      %v5156 = vsel %vm3652, %v3611, %v4721
      %v5158 = vsel %vm3652, %v5102, %v4723
      %v5160 = vsel %vm3652, %v3613, %v4725
      %v5162 = vsel %vm3652, %v3615, %v4727
      %v5164 = vsel %vm3652, %v5104, %v4729
      %v5166 = vsel %vm3652, %v3617, %v4731
      %v5168 = vsel %vm3652, %v3619, %v4733
      %v5170 = vsel %vm3652, %v5106, %v4735
      %v5172 = vsel %vm3652, %v3621, %v4737
      %v5174 = vsel %vm3652, %v3623, %v4739
      %v5176 = vsel %vm3652, %v5108, %v4741
      %v5178 = vsel %vm3652, %v3625, %v4743
      %v5180 = vsel %vm3652, %v3627, %v4745
      %v5182 = vsel %vm3652, %v5110, %v4747
      %v5184 = vsel %vm3652, %v3629, %v4749
      %v5186 = vsel %vm3652, %v3631, %v4751
      %v5188 = vsel %vm3652, %v5112, %v4753
      %v5190 = vsel %vm3652, %v3633, %v4755
      %v5192 = vsel %vm3652, %v3635, %v4757
      %v5194 = vsel %vm3652, %v5114, %v4759
      %v5196 = vsel %vm3652, %v3637, %v4761
      %v5198 = vsel %vm3652, %v3639, %v4763
      %v5200 = vsel %vm3652, %v5116, %v4765
      %v5202 = vsel %vm3652, %v3641, %v4767
      %v5204 = vsel %vm3652, %v3643, %v4769
      %v5206 = vsel %vm3652, %v5118, %v4771
      %v5208 = vsel %vm3652, %v3645, %v4773
      %v5210 = vsel %vm3652, %v3647, %v4775
      %v5212 = vsel %vm3652, %v5120, %v4777
      %v5214 = vsel %vm3652, %v3649, %v4779
      %v5216 = vsel %vm3652, %v3651, %v4781
      %v5218 = vsel %vm3652, %v5122, %v4783
      %v5220 = vsel %vm3652, %v5124, %v4785
      %v5222 = vsel %vm3652, %v5126, %v4787
      %v5224 = vsel %vm3652, %v5128, %v4789
      %v5226 = vsel %vm3652, %v5130, %v4791
      %v5228 = vsel %vm3652, %v5132, %v4793
      %v5230 = vsel %vm3652, %v5134, %v4795
      %v5232 = vsel %vm3652, %v5136, %v4797
      %v5234 = vsel %vm3652, %v5138, %v4799
      %v5236 = vsel %vm3652, %v5140, %v4801
      %v5237 = vsel %vm3717, %v5142, %v2654
      %v5238 = vsel %vm3717, %v5144, %v2656
      %v5240 = vsel %vm3717, %v5146, %v4806
      %v5241 = vsel %vm3717, %v5148, %v2658
      %v5242 = vsel %vm3717, %v5150, %v2660
      %v5244 = vsel %vm3717, %v5152, %v4808
      %v5245 = vsel %vm3717, %v5154, %v2662
      %v5246 = vsel %vm3717, %v5156, %v2664
      %v5248 = vsel %vm3717, %v5158, %v4810
      %v5249 = vsel %vm3717, %v5160, %v2666
      %v5250 = vsel %vm3717, %v5162, %v2668
      %v5252 = vsel %vm3717, %v5164, %v4812
      %v5253 = vsel %vm3717, %v5166, %v2670
      %v5254 = vsel %vm3717, %v5168, %v2672
      %v5256 = vsel %vm3717, %v5170, %v4814
      %v5257 = vsel %vm3717, %v5172, %v2674
      %v5258 = vsel %vm3717, %v5174, %v2676
      %v5260 = vsel %vm3717, %v5176, %v4816
      %v5261 = vsel %vm3717, %v5178, %v2678
      %v5262 = vsel %vm3717, %v5180, %v2680
      %v5264 = vsel %vm3717, %v5182, %v4818
      %v5265 = vsel %vm3717, %v5184, %v2682
      %v5266 = vsel %vm3717, %v5186, %v2684
      %v5268 = vsel %vm3717, %v5188, %v4820
      %v5269 = vsel %vm3717, %v5190, %v2686
      %v5270 = vsel %vm3717, %v5192, %v2688
      %v5272 = vsel %vm3717, %v5194, %v4822
      %v5273 = vsel %vm3717, %v5196, %v2690
      %v5274 = vsel %vm3717, %v5198, %v2692
      %v5276 = vsel %vm3717, %v5200, %v4824
      %v5277 = vsel %vm3717, %v5202, %v2694
      %v5278 = vsel %vm3717, %v5204, %v2696
      %v5280 = vsel %vm3717, %v5206, %v4826
      %v5281 = vsel %vm3717, %v5208, %v2698
      %v5282 = vsel %vm3717, %v5210, %v2700
      %v5284 = vsel %vm3717, %v5212, %v4828
      %v5285 = vsel %vm3717, %v5214, %v2702
      %v5286 = vsel %vm3717, %v5216, %v2704
      %v5288 = vsel %vm3717, %v5218, %v4830
      %v5290 = vsel %vm3717, %v5220, %v4832
      %v5292 = vsel %vm3717, %v5222, %v4834
      %v5294 = vsel %vm3717, %v5224, %v4836
      %v5296 = vsel %vm3717, %v5226, %v4838
      %v5298 = vsel %vm3717, %v5228, %v4840
      %v5300 = vsel %vm3717, %v5230, %v4842
      %v5302 = vsel %vm3717, %v5232, %v4844
      %v5304 = vsel %vm3717, %v5234, %v4846
      %v5306 = vsel %vm3717, %v5236, %v4848
      %v5307 = vsel %vm3782, %v5237, %v2741
      %v5308 = vsel %vm3782, %v5238, %v2743
      %v5310 = vsel %vm3782, %v5240, %v4862
      %v5311 = vsel %vm3782, %v5241, %v2745
      %v5312 = vsel %vm3782, %v5242, %v2747
      %v5314 = vsel %vm3782, %v5244, %v4864
      %v5315 = vsel %vm3782, %v5245, %v2749
      %v5316 = vsel %vm3782, %v5246, %v2751
      %v5318 = vsel %vm3782, %v5248, %v4866
      %v5319 = vsel %vm3782, %v5249, %v2753
      %v5320 = vsel %vm3782, %v5250, %v2755
      %v5322 = vsel %vm3782, %v5252, %v4868
      %v5323 = vsel %vm3782, %v5253, %v2757
      %v5324 = vsel %vm3782, %v5254, %v2759
      %v5326 = vsel %vm3782, %v5256, %v4870
      %v5327 = vsel %vm3782, %v5257, %v2761
      %v5328 = vsel %vm3782, %v5258, %v2763
      %v5330 = vsel %vm3782, %v5260, %v4872
      %v5331 = vsel %vm3782, %v5261, %v2765
      %v5332 = vsel %vm3782, %v5262, %v2767
      %v5334 = vsel %vm3782, %v5264, %v4874
      %v5335 = vsel %vm3782, %v5265, %v2769
      %v5336 = vsel %vm3782, %v5266, %v2771
      %v5338 = vsel %vm3782, %v5268, %v4876
      %v5339 = vsel %vm3782, %v5269, %v2773
      %v5340 = vsel %vm3782, %v5270, %v2775
      %v5342 = vsel %vm3782, %v5272, %v4878
      %v5343 = vsel %vm3782, %v5273, %v2777
      %v5344 = vsel %vm3782, %v5274, %v2779
      %v5346 = vsel %vm3782, %v5276, %v4880
      %v5347 = vsel %vm3782, %v5277, %v2781
      %v5348 = vsel %vm3782, %v5278, %v2783
      %v5350 = vsel %vm3782, %v5280, %v4882
      %v5351 = vsel %vm3782, %v5281, %v2785
      %v5352 = vsel %vm3782, %v5282, %v2787
      %v5354 = vsel %vm3782, %v5284, %v4884
      %v5355 = vsel %vm3782, %v5285, %v2789
      %v5356 = vsel %vm3782, %v5286, %v2791
      %v5358 = vsel %vm3782, %v5288, %v4886
      %v5360 = vsel %vm3782, %v5290, %v4888
      %v5362 = vsel %vm3782, %v5292, %v4890
      %v5364 = vsel %vm3782, %v5294, %v4892
      %v5366 = vsel %vm3782, %v5296, %v4894
      %v5368 = vsel %vm3782, %v5298, %v4896
      %v5370 = vsel %vm3782, %v5300, %v4898
      %v5372 = vsel %vm3782, %v5302, %v4900
      %v5374 = vsel %vm3782, %v5304, %v4902
      %v5376 = vsel %vm3782, %v5306, %v4904
      %v5377 = vsel %vm3847, %v5307, %v2810
      %v5378 = vsel %vm3847, %v5308, %v2812
      %v5380 = vsel %vm3847, %v5310, %v4911
      %v5381 = vsel %vm3847, %v5311, %v2814
      %v5382 = vsel %vm3847, %v5312, %v2816
      %v5384 = vsel %vm3847, %v5314, %v4913
      %v5385 = vsel %vm3847, %v5315, %v2818
      %v5386 = vsel %vm3847, %v5316, %v2820
      %v5388 = vsel %vm3847, %v5318, %v4915
      %v5389 = vsel %vm3847, %v5319, %v2822
      %v5390 = vsel %vm3847, %v5320, %v2824
      %v5392 = vsel %vm3847, %v5322, %v4917
      %v5393 = vsel %vm3847, %v5323, %v2826
      %v5394 = vsel %vm3847, %v5324, %v2828
      %v5396 = vsel %vm3847, %v5326, %v4919
      %v5397 = vsel %vm3847, %v5327, %v2830
      %v5398 = vsel %vm3847, %v5328, %v2832
      %v5400 = vsel %vm3847, %v5330, %v4921
      %v5401 = vsel %vm3847, %v5331, %v2834
      %v5402 = vsel %vm3847, %v5332, %v2836
      %v5404 = vsel %vm3847, %v5334, %v4923
      %v5405 = vsel %vm3847, %v5335, %v2838
      %v5406 = vsel %vm3847, %v5336, %v2840
      %v5408 = vsel %vm3847, %v5338, %v4925
      %v5409 = vsel %vm3847, %v5339, %v2842
      %v5410 = vsel %vm3847, %v5340, %v2844
      %v5412 = vsel %vm3847, %v5342, %v4927
      %v5413 = vsel %vm3847, %v5343, %v2846
      %v5414 = vsel %vm3847, %v5344, %v2848
      %v5416 = vsel %vm3847, %v5346, %v4929
      %v5417 = vsel %vm3847, %v5347, %v2850
      %v5418 = vsel %vm3847, %v5348, %v2852
      %v5420 = vsel %vm3847, %v5350, %v4931
      %v5421 = vsel %vm3847, %v5351, %v2854
      %v5422 = vsel %vm3847, %v5352, %v2856
      %v5424 = vsel %vm3847, %v5354, %v4933
      %v5425 = vsel %vm3847, %v5355, %v2858
      %v5426 = vsel %vm3847, %v5356, %v2860
      %v5428 = vsel %vm3847, %v5358, %v4935
      %v5430 = vsel %vm3847, %v5360, %v4937
      %v5432 = vsel %vm3847, %v5362, %v4939
      %v5434 = vsel %vm3847, %v5364, %v4941
      %v5436 = vsel %vm3847, %v5366, %v4943
      %v5438 = vsel %vm3847, %v5368, %v4945
      %v5440 = vsel %vm3847, %v5370, %v4947
      %v5442 = vsel %vm3847, %v5372, %v4949
      %v5444 = vsel %vm3847, %v5374, %v4951
      %v5446 = vsel %vm3847, %v5376, %v4953
      %v5447 = vsel %vm3912, %v5377, %v2887
      %v5448 = vsel %vm3912, %v5378, %v2889
      %v5450 = vsel %vm3912, %v5380, %v4966
      %v5451 = vsel %vm3912, %v5381, %v2891
      %v5452 = vsel %vm3912, %v5382, %v2893
      %v5454 = vsel %vm3912, %v5384, %v4968
      %v5455 = vsel %vm3912, %v5385, %v2895
      %v5456 = vsel %vm3912, %v5386, %v2897
      %v5458 = vsel %vm3912, %v5388, %v4970
      %v5459 = vsel %vm3912, %v5389, %v2899
      %v5460 = vsel %vm3912, %v5390, %v2901
      %v5462 = vsel %vm3912, %v5392, %v4972
      %v5463 = vsel %vm3912, %v5393, %v2903
      %v5464 = vsel %vm3912, %v5394, %v2905
      %v5466 = vsel %vm3912, %v5396, %v4974
      %v5467 = vsel %vm3912, %v5397, %v2907
      %v5468 = vsel %vm3912, %v5398, %v2909
      %v5470 = vsel %vm3912, %v5400, %v4976
      %v5471 = vsel %vm3912, %v5401, %v2911
      %v5472 = vsel %vm3912, %v5402, %v2913
      %v5474 = vsel %vm3912, %v5404, %v4978
      %v5475 = vsel %vm3912, %v5405, %v2915
      %v5476 = vsel %vm3912, %v5406, %v2917
      %v5478 = vsel %vm3912, %v5408, %v4980
      %v5479 = vsel %vm3912, %v5409, %v2919
      %v5480 = vsel %vm3912, %v5410, %v2921
      %v5482 = vsel %vm3912, %v5412, %v4982
      %v5483 = vsel %vm3912, %v5413, %v2923
      %v5484 = vsel %vm3912, %v5414, %v2925
      %v5486 = vsel %vm3912, %v5416, %v4984
      %v5487 = vsel %vm3912, %v5417, %v2927
      %v5488 = vsel %vm3912, %v5418, %v2929
      %v5490 = vsel %vm3912, %v5420, %v4986
      %v5491 = vsel %vm3912, %v5421, %v2931
      %v5492 = vsel %vm3912, %v5422, %v2933
      %v5494 = vsel %vm3912, %v5424, %v4988
      %v5495 = vsel %vm3912, %v5425, %v2935
      %v5496 = vsel %vm3912, %v5426, %v2937
      %v5498 = vsel %vm3912, %v5428, %v4990
      %v5500 = vsel %vm3912, %v5430, %v4992
      %v5502 = vsel %vm3912, %v5432, %v4994
      %v5504 = vsel %vm3912, %v5434, %v4996
      %v5506 = vsel %vm3912, %v5436, %v4998
      %v5508 = vsel %vm3912, %v5438, %v5000
      %v5510 = vsel %vm3912, %v5440, %v5002
      %v5512 = vsel %vm3912, %v5442, %v5004
      %v5514 = vsel %vm3912, %v5444, %v5006
      %v5516 = vsel %vm3912, %v5446, %v5008
      %v5517 = vshrl.u32 %v5447, 16
      %v5519 = vshll.u32 %v5447, 16
      %v5521 = vrot.slane %v5519, 1
      %v5522 = vor.u32 %v5517, %v5521
      %v5523 = vshll.u32 %v5448, 16
      %v5525 = vrot.slane %v5523, 1
      %v5526 = vsel %vm1683, %v5522, %v5525
      %v5527 = vshrl.u32 %v5448, 16
      %v5529 = vor.u32 %v5527, %v5525
      %v5530 = vshll.u32 %v5450, 16
      %v5532 = vrot.slane %v5530, 1
      %v5533 = vsel %vm1683, %v5529, %v5532
      %v5534 = vshrl.u32 %v5451, 16
      %v5536 = vshll.u32 %v5451, 16
      %v5538 = vrot.slane %v5536, 1
      %v5539 = vor.u32 %v5534, %v5538
      %v5540 = vshll.u32 %v5452, 16
      %v5542 = vrot.slane %v5540, 1
      %v5543 = vsel %vm1683, %v5539, %v5542
      %v5544 = vshrl.u32 %v5452, 16
      %v5546 = vor.u32 %v5544, %v5542
      %v5547 = vshll.u32 %v5454, 16
      %v5549 = vrot.slane %v5547, 1
      %v5550 = vsel %vm1683, %v5546, %v5549
      %v5551 = vshrl.u32 %v5455, 16
      %v5553 = vshll.u32 %v5455, 16
      %v5555 = vrot.slane %v5553, 1
      %v5556 = vor.u32 %v5551, %v5555
      %v5557 = vshll.u32 %v5456, 16
      %v5559 = vrot.slane %v5557, 1
      %v5560 = vsel %vm1683, %v5556, %v5559
      %v5561 = vshrl.u32 %v5456, 16
      %v5563 = vor.u32 %v5561, %v5559
      %v5564 = vshll.u32 %v5458, 16
      %v5566 = vrot.slane %v5564, 1
      %v5567 = vsel %vm1683, %v5563, %v5566
      %v5568 = vshrl.u32 %v5459, 16
      %v5570 = vshll.u32 %v5459, 16
      %v5572 = vrot.slane %v5570, 1
      %v5573 = vor.u32 %v5568, %v5572
      %v5574 = vshll.u32 %v5460, 16
      %v5576 = vrot.slane %v5574, 1
      %v5577 = vsel %vm1683, %v5573, %v5576
      %v5578 = vshrl.u32 %v5460, 16
      %v5580 = vor.u32 %v5578, %v5576
      %v5581 = vshll.u32 %v5462, 16
      %v5583 = vrot.slane %v5581, 1
      %v5584 = vsel %vm1683, %v5580, %v5583
      %v5585 = vshrl.u32 %v5463, 16
      %v5587 = vshll.u32 %v5463, 16
      %v5589 = vrot.slane %v5587, 1
      %v5590 = vor.u32 %v5585, %v5589
      %v5591 = vshll.u32 %v5464, 16
      %v5593 = vrot.slane %v5591, 1
      %v5594 = vsel %vm1683, %v5590, %v5593
      %v5595 = vshrl.u32 %v5464, 16
      %v5597 = vor.u32 %v5595, %v5593
      %v5598 = vshll.u32 %v5466, 16
      %v5600 = vrot.slane %v5598, 1
      %v5601 = vsel %vm1683, %v5597, %v5600
      %v5602 = vshrl.u32 %v5467, 16
      %v5604 = vshll.u32 %v5467, 16
      %v5606 = vrot.slane %v5604, 1
      %v5607 = vor.u32 %v5602, %v5606
      %v5608 = vshll.u32 %v5468, 16
      %v5610 = vrot.slane %v5608, 1
      %v5611 = vsel %vm1683, %v5607, %v5610
      %v5612 = vshrl.u32 %v5468, 16
      %v5614 = vor.u32 %v5612, %v5610
      %v5615 = vshll.u32 %v5470, 16
      %v5617 = vrot.slane %v5615, 1
      %v5618 = vsel %vm1683, %v5614, %v5617
      %v5619 = vshrl.u32 %v5471, 16
      %v5621 = vshll.u32 %v5471, 16
      %v5623 = vrot.slane %v5621, 1
      %v5624 = vor.u32 %v5619, %v5623
      %v5625 = vshll.u32 %v5472, 16
      %v5627 = vrot.slane %v5625, 1
      %v5628 = vsel %vm1683, %v5624, %v5627
      %v5629 = vshrl.u32 %v5472, 16
      %v5631 = vor.u32 %v5629, %v5627
      %v5632 = vshll.u32 %v5474, 16
      %v5634 = vrot.slane %v5632, 1
      %v5635 = vsel %vm1683, %v5631, %v5634
      %v5636 = vshrl.u32 %v5475, 16
      %v5638 = vshll.u32 %v5475, 16
      %v5640 = vrot.slane %v5638, 1
      %v5641 = vor.u32 %v5636, %v5640
      %v5642 = vshll.u32 %v5476, 16
      %v5644 = vrot.slane %v5642, 1
      %v5645 = vsel %vm1683, %v5641, %v5644
      %v5646 = vshrl.u32 %v5476, 16
      %v5648 = vor.u32 %v5646, %v5644
      %v5649 = vshll.u32 %v5478, 16
      %v5651 = vrot.slane %v5649, 1
      %v5652 = vsel %vm1683, %v5648, %v5651
      %v5653 = vshrl.u32 %v5479, 16
      %v5655 = vshll.u32 %v5479, 16
      %v5657 = vrot.slane %v5655, 1
      %v5658 = vor.u32 %v5653, %v5657
      %v5659 = vshll.u32 %v5480, 16
      %v5661 = vrot.slane %v5659, 1
      %v5662 = vsel %vm1683, %v5658, %v5661
      %v5663 = vshrl.u32 %v5480, 16
      %v5665 = vor.u32 %v5663, %v5661
      %v5666 = vshll.u32 %v5482, 16
      %v5668 = vrot.slane %v5666, 1
      %v5669 = vsel %vm1683, %v5665, %v5668
      %v5670 = vshrl.u32 %v5483, 16
      %v5672 = vshll.u32 %v5483, 16
      %v5674 = vrot.slane %v5672, 1
      %v5675 = vor.u32 %v5670, %v5674
      %v5676 = vshll.u32 %v5484, 16
      %v5678 = vrot.slane %v5676, 1
      %v5679 = vsel %vm1683, %v5675, %v5678
      %v5680 = vshrl.u32 %v5484, 16
      %v5682 = vor.u32 %v5680, %v5678
      %v5683 = vshll.u32 %v5486, 16
      %v5685 = vrot.slane %v5683, 1
      %v5686 = vsel %vm1683, %v5682, %v5685
      %v5687 = vshrl.u32 %v5487, 16
      %v5689 = vshll.u32 %v5487, 16
      %v5691 = vrot.slane %v5689, 1
      %v5692 = vor.u32 %v5687, %v5691
      %v5693 = vshll.u32 %v5488, 16
      %v5695 = vrot.slane %v5693, 1
      %v5696 = vsel %vm1683, %v5692, %v5695
      %v5697 = vshrl.u32 %v5488, 16
      %v5699 = vor.u32 %v5697, %v5695
      %v5700 = vshll.u32 %v5490, 16
      %v5702 = vrot.slane %v5700, 1
      %v5703 = vsel %vm1683, %v5699, %v5702
      %v5704 = vshrl.u32 %v5491, 16
      %v5706 = vshll.u32 %v5491, 16
      %v5708 = vrot.slane %v5706, 1
      %v5709 = vor.u32 %v5704, %v5708
      %v5710 = vshll.u32 %v5492, 16
      %v5712 = vrot.slane %v5710, 1
      %v5713 = vsel %vm1683, %v5709, %v5712
      %v5714 = vshrl.u32 %v5492, 16
      %v5716 = vor.u32 %v5714, %v5712
      %v5717 = vshll.u32 %v5494, 16
      %v5719 = vrot.slane %v5717, 1
      %v5720 = vsel %vm1683, %v5716, %v5719
      %v5721 = vshrl.u32 %v5495, 16
      %v5723 = vshll.u32 %v5495, 16
      %v5725 = vrot.slane %v5723, 1
      %v5726 = vor.u32 %v5721, %v5725
      %v5727 = vshll.u32 %v5496, 16
      %v5729 = vrot.slane %v5727, 1
      %v5730 = vsel %vm1683, %v5726, %v5729
      %v5731 = vshrl.u32 %v5496, 16
      %v5733 = vor.u32 %v5731, %v5729
      %v5734 = vshll.u32 %v5498, 16
      %v5736 = vrot.slane %v5734, 1
      %v5737 = vsel %vm1683, %v5733, %v5736
      %v5738 = vshrl.u32 %v5500, 16
      %v5740 = vshll.u32 %v5500, 16
      %v5742 = vrot.slane %v5740, 1
      %v5743 = vor.u32 %v5738, %v5742
      %v5744 = vshll.u32 %v5502, 16
      %v5746 = vrot.slane %v5744, 1
      %v5747 = vsel %vm1683, %v5743, %v5746
      %v5748 = vshrl.u32 %v5502, 16
      %v5750 = vor.u32 %v5748, %v5746
      %v5751 = vshll.u32 %v5504, 16
      %v5753 = vrot.slane %v5751, 1
      %v5754 = vsel %vm1683, %v5750, %v5753
      %v5755 = vshrl.u32 %v5506, 16
      %v5757 = vshll.u32 %v5506, 16
      %v5759 = vrot.slane %v5757, 1
      %v5760 = vor.u32 %v5755, %v5759
      %v5761 = vshll.u32 %v5508, 16
      %v5763 = vrot.slane %v5761, 1
      %v5764 = vsel %vm1683, %v5760, %v5763
      %v5765 = vshrl.u32 %v5508, 16
      %v5767 = vor.u32 %v5765, %v5763
      %v5768 = vshll.u32 %v5510, 16
      %v5770 = vrot.slane %v5768, 1
      %v5771 = vsel %vm1683, %v5767, %v5770
      %v5772 = vshrl.u32 %v5512, 16
      %v5774 = vshll.u32 %v5512, 16
      %v5776 = vrot.slane %v5774, 1
      %v5777 = vor.u32 %v5772, %v5776
      %v5778 = vshll.u32 %v5514, 16
      %v5780 = vrot.slane %v5778, 1
      %v5781 = vsel %vm1683, %v5777, %v5780
      %v5782 = vshrl.u32 %v5514, 16
      %v5784 = vor.u32 %v5782, %v5780
      %v5785 = vshll.u32 %v5516, 16
      %v5787 = vrot.slane %v5785, 1
      %v5788 = vsel %vm1683, %v5784, %v5787
      %5789 = vrot.lane.b32.xlu0 %v5526, 48
      %v5790 = vpop.permute.xlu0 %5789
      %5791 = vrot.lane.b32.xlu0 %v5533, 48
      %v5792 = vpop.permute.xlu0 %5791
      %5793 = vrot.lane.b32.xlu0 %v5543, 48
      %v5794 = vpop.permute.xlu0 %5793
      %5795 = vrot.lane.b32.xlu0 %v5550, 48
      %v5796 = vpop.permute.xlu0 %5795
      %5797 = vrot.lane.b32.xlu0 %v5560, 48
      %v5798 = vpop.permute.xlu0 %5797
      %5799 = vrot.lane.b32.xlu0 %v5567, 48
      %v5800 = vpop.permute.xlu0 %5799
      %5801 = vrot.lane.b32.xlu0 %v5577, 48
      %v5802 = vpop.permute.xlu0 %5801
      %5803 = vrot.lane.b32.xlu0 %v5584, 48
      %v5804 = vpop.permute.xlu0 %5803
      %5805 = vrot.lane.b32.xlu0 %v5594, 48
      %v5806 = vpop.permute.xlu0 %5805
      %5807 = vrot.lane.b32.xlu0 %v5601, 48
      %v5808 = vpop.permute.xlu0 %5807
      %5809 = vrot.lane.b32.xlu0 %v5611, 48
      %v5810 = vpop.permute.xlu0 %5809
      %5811 = vrot.lane.b32.xlu0 %v5618, 48
      %v5812 = vpop.permute.xlu0 %5811
      %5813 = vrot.lane.b32.xlu0 %v5628, 48
      %v5814 = vpop.permute.xlu0 %5813
      %5815 = vrot.lane.b32.xlu0 %v5635, 48
      %v5816 = vpop.permute.xlu0 %5815
      %5817 = vrot.lane.b32.xlu0 %v5645, 48
      %v5818 = vpop.permute.xlu0 %5817
      %5819 = vrot.lane.b32.xlu0 %v5652, 48
      %v5820 = vpop.permute.xlu0 %5819
      %5821 = vrot.lane.b32.xlu0 %v5662, 48
      %v5822 = vpop.permute.xlu0 %5821
      %5823 = vrot.lane.b32.xlu0 %v5669, 48
      %v5824 = vpop.permute.xlu0 %5823
      %5825 = vrot.lane.b32.xlu0 %v5679, 48
      %v5826 = vpop.permute.xlu0 %5825
      %5827 = vrot.lane.b32.xlu0 %v5686, 48
      %v5828 = vpop.permute.xlu0 %5827
      %5829 = vrot.lane.b32.xlu0 %v5696, 48
      %v5830 = vpop.permute.xlu0 %5829
      %5831 = vrot.lane.b32.xlu0 %v5703, 48
      %v5832 = vpop.permute.xlu0 %5831
      %5833 = vrot.lane.b32.xlu0 %v5713, 48
      %v5834 = vpop.permute.xlu0 %5833
      %5835 = vrot.lane.b32.xlu0 %v5720, 48
      %v5836 = vpop.permute.xlu0 %5835
      %5837 = vrot.lane.b32.xlu0 %v5730, 48
      %v5838 = vpop.permute.xlu0 %5837
      %5839 = vrot.lane.b32.xlu0 %v5737, 48
      %v5840 = vpop.permute.xlu0 %5839
      %5841 = vrot.lane.b32.xlu0 %v5747, 48
      %v5842 = vpop.permute.xlu0 %5841
      %5843 = vrot.lane.b32.xlu0 %v5754, 48
      %v5844 = vpop.permute.xlu0 %5843
      %5845 = vrot.lane.b32.xlu0 %v5764, 48
      %v5846 = vpop.permute.xlu0 %5845
      %5847 = vrot.lane.b32.xlu0 %v5771, 48
      %v5848 = vpop.permute.xlu0 %5847
      %5849 = vrot.lane.b32.xlu0 %v5781, 48
      %v5850 = vpop.permute.xlu0 %5849
      %5851 = vrot.lane.b32.xlu0 %v5788, 48
      %v5852 = vpop.permute.xlu0 %5851
      %vm5853 = vcmask 392192
      %v5855 = vsel %vm5853, %v4369, %v5790
      %v5857 = vsel %vm5853, %v4371, %v5792
      %v5859 = vsel %vm5853, %v4373, %v5794
      %v5861 = vsel %vm5853, %v4375, %v5796
      %v5863 = vsel %vm5853, %v4377, %v5798
      %v5865 = vsel %vm5853, %v4379, %v5800
      %v5867 = vsel %vm5853, %v4381, %v5802
      %v5869 = vsel %vm5853, %v4383, %v5804
      %v5871 = vsel %vm5853, %v4385, %v5806
      %v5873 = vsel %vm5853, %v4387, %v5808
      %v5875 = vsel %vm5853, %v4389, %v5810
      %v5877 = vsel %vm5853, %v4391, %v5812
      %v5879 = vsel %vm5853, %v4393, %v5814
      %v5881 = vsel %vm5853, %v4395, %v5816
      %v5883 = vsel %vm5853, %v4397, %v5818
      %v5885 = vsel %vm5853, %v4399, %v5820
      %v5887 = vsel %vm5853, %v4401, %v5822
      %v5889 = vsel %vm5853, %v4403, %v5824
      %v5891 = vsel %vm5853, %v4405, %v5826
      %v5893 = vsel %vm5853, %v4407, %v5828
      %v5895 = vsel %vm5853, %v4409, %v5830
      %v5897 = vsel %vm5853, %v4411, %v5832
      %v5899 = vsel %vm5853, %v4413, %v5834
      %v5901 = vsel %vm5853, %v4415, %v5836
      %v5903 = vsel %vm5853, %v4417, %v5838
      %v5905 = vsel %vm5853, %v4419, %v5840
      %v5907 = vsel %vm5853, %v4421, %v5842
      %v5909 = vsel %vm5853, %v4423, %v5844
      %v5911 = vsel %vm5853, %v4425, %v5846
      %v5913 = vsel %vm5853, %v4427, %v5848
      %v5915 = vsel %vm5853, %v4429, %v5850
      %v5917 = vsel %vm5853, %v4431, %v5852
      %v5918 = vld [vmem:[%s1] sm:$0xf]
      %v5919 = vld [vmem:[%s1 + $0x4] sm:$0xf]
      %v5920 = vld [vmem:[%s1 + $0x8] sm:$0xf]
      %v5921 = vld [vmem:[%s1 + $0xc] sm:$0xf]
      %v5922 = vld [vmem:[%s1 + $0x10] sm:$0xf]
      %v5923 = vld [vmem:[%s1 + $0x14] sm:$0xf]
      %v5924 = vld [vmem:[%s1 + $0x18] sm:$0xf]
      %v5925 = vld [vmem:[%s1 + $0x1c] sm:$0xf]
      %v5926 = vld [vmem:[%s1 + $0x20] sm:$0xf]
      %v5927 = vld [vmem:[%s1 + $0x24] sm:$0x3]
      %v5928 = vld [vmem:[%s2] sm:$0x1]
      %v5930 = vlaneseq
      %v5931 = vshrl.u32 %v5930, 7
      %v5932 = vsub.s32 0, %v5931
      %v5933 = vrot.slane %v5928, %v5932
      %v5945 = vunpack.c.l.b16 %v5918
      %v5946 = vunpack.c.l.b16 %v5919
      %v5947 = vunpack.c.l.b16 %v5920
      %v5948 = vunpack.c.l.b16 %v5921
      %v5949 = vunpack.c.l.b16 %v5922
      %v5950 = vunpack.c.l.b16 %v5923
      %v5951 = vunpack.c.l.b16 %v5924
      %v5952 = vunpack.c.l.b16 %v5925
      %v5953 = vunpack.c.l.b16 %v5926
      %v5954 = vunpack.c.l.b16 %v5927
      %v5955 = vpack.c.b16 %v5946, %v5945
      %v5956 = vpack.c.b16 %v5948, %v5947
      %v5957 = vpack.c.b16 %v5950, %v5949
      %v5958 = vpack.c.b16 %v5952, %v5951
      %v5959 = vpack.c.b16 %v5954, %v5953
      %vm5964 = vcmask 613376
      %v5965 = vsel %vm5964, %v5855, 0
      %v5967 = vsel %vm5964, %v5857, 0
      %v5969 = vsel %vm5964, %v5859, 0
      %v5971 = vsel %vm5964, %v5861, 0
      %v5973 = vsel %vm5964, %v5863, 0
      %v5975 = vsel %vm5964, %v5865, 0
      %v5977 = vsel %vm5964, %v5867, 0
      %v5979 = vsel %vm5964, %v5869, 0
      %v5981 = vsel %vm5964, %v5871, 0
      %v5983 = vsel %vm5964, %v5873, 0
      %v5985 = vsel %vm5964, %v5875, 0
      %v5987 = vsel %vm5964, %v5877, 0
      %v5989 = vsel %vm5964, %v5879, 0
      %v5991 = vsel %vm5964, %v5881, 0
      %v5993 = vsel %vm5964, %v5883, 0
      %v5995 = vsel %vm5964, %v5885, 0
      %v5997 = vsel %vm5964, %v5887, 0
      %v5999 = vsel %vm5964, %v5889, 0
      %v6001 = vsel %vm5964, %v5891, 0
      %v6003 = vsel %vm5964, %v5893, 0
      %v6005 = vsel %vm5964, %v5895, 0
      %v6007 = vsel %vm5964, %v5897, 0
      %v6009 = vsel %vm5964, %v5899, 0
      %v6011 = vsel %vm5964, %v5901, 0
      %v6013 = vsel %vm5964, %v5903, 0
      %v6015 = vsel %vm5964, %v5905, 0
      %v6017 = vsel %vm5964, %v5907, 0
      %v6019 = vsel %vm5964, %v5909, 0
      %v6021 = vsel %vm5964, %v5911, 0
      %v6023 = vsel %vm5964, %v5913, 0
      %v6025 = vsel %vm5964, %v5915, 0
      %v6027 = vsel %vm5964, %v5917, 0
      %vm6029 = vcmask 1044480
      %vm6030 = vcmask 1045504
      %v6031 = vsel %vm6029, 4294967295, 65535
      %v6032 = vsel %vm6030, %v6031, 0
      %v6034 = vand.u32 %v5959, %v6032
      %6036 = vmatprep.subr.bf16.mxu0 0
      %6037 = vmatpush1.bf16.msra.mxu0 %v5955
      %6038 = vmatprep.subr.bf16.mxu0 0
      %6039 = vmatpush1.bf16.msra.mxu0 %v5956
      %6040 = vmatprep.subr.bf16.mxu0 0
      %6041 = vmatpush1.bf16.msra.mxu0 %v5957
      %6042 = vmatprep.subr.bf16.mxu0 0
      %6043 = vmatpush1.bf16.msra.mxu0 %v5958
      %6044 = vmatprep.subr.bf16.mxu0 0
      %6045 = vmatpush1.bf16.msra.mxu0 %v6034
      %6046 = vmatprep.subr.bf16.mxu0 0
      %6047 = vmatpush1.bf16.msra.mxu0 0
      %6048 = vmatprep.subr.bf16.mxu0 0
      %6049 = vmatpush1.bf16.msra.mxu0 0
      %6050 = vmatprep.subr.bf16.mxu0 0
      %6051 = vmatpush1.bf16.msra.mxu0 0
      %6052 = vmatprep.subr.bf16.mxu0 0
      %6053 = vmatpush1.bf16.msra.mxu0 0
      %6054 = vmatprep.subr.bf16.mxu0 0
      %6055 = vmatpush1.bf16.msra.mxu0 0
      %6056 = vmatprep.subr.bf16.mxu0 0
      %6057 = vmatpush1.bf16.msra.mxu0 0
      %6058 = vmatprep.subr.bf16.mxu0 0
      %6059 = vmatpush1.bf16.msra.mxu0 0
      %6060 = vmatprep.subr.bf16.mxu0 0
      %6061 = vmatpush1.bf16.msra.mxu0 0
      %6062 = vmatprep.subr.bf16.mxu0 0
      %6063 = vmatpush1.bf16.msra.mxu0 0
      %6064 = vmatprep.subr.bf16.mxu0 0
      %6065 = vmatpush1.bf16.msra.mxu0 0
      %6066 = vmatprep.subr.bf16.mxu0 0
      %6067 = vmatpush1.bf16.msra.mxu0 0
      %6068 = vmatprep.mubr.bf16.mxu0 0
      %6069 = vmatmul.mubr.bf16.gmra.mrb[0].mxu0 %v5965
      %v6070 = vpop.f32.mrb[0].mxu0
      %v6071 = vadd.f32 %v5933, %v6070
      %v6072 = vpop.f32.mrb[0].mxu0
      %v6073 = vpop.f32.mrb[0].mxu0
      %v6074 = vadd.f32 %v5933, %v6073
      %v6075 = vpop.f32.mrb[0].mxu0
      %6076 = vmatprep.mubr.bf16.mxu0 0
      %6077 = vmatmul.mubr.bf16.gmra.mrb[0].mxu0 %v5967
      %v6078 = vpop.f32.mrb[0].mxu0
      %v6079 = vadd.f32 %v5933, %v6078
      %v6080 = vpop.f32.mrb[0].mxu0
      %v6081 = vpop.f32.mrb[0].mxu0
      %v6082 = vadd.f32 %v5933, %v6081
      %v6083 = vpop.f32.mrb[0].mxu0
      %6084 = vmatprep.mubr.bf16.mxu0 0
      %6085 = vmatmul.mubr.bf16.gmra.mrb[0].mxu0 %v5969
      %v6086 = vpop.f32.mrb[0].mxu0
      %v6087 = vadd.f32 %v5933, %v6086
      %v6088 = vpop.f32.mrb[0].mxu0
      %v6089 = vpop.f32.mrb[0].mxu0
      %v6090 = vadd.f32 %v5933, %v6089
      %v6091 = vpop.f32.mrb[0].mxu0
      %6092 = vmatprep.mubr.bf16.mxu0 0
      %6093 = vmatmul.mubr.bf16.gmra.mrb[0].mxu0 %v5971
      %v6094 = vpop.f32.mrb[0].mxu0
      %v6095 = vadd.f32 %v5933, %v6094
      %v6096 = vpop.f32.mrb[0].mxu0
      %v6097 = vpop.f32.mrb[0].mxu0
      %v6098 = vadd.f32 %v5933, %v6097
      %v6099 = vpop.f32.mrb[0].mxu0
      %6100 = vmatprep.mubr.bf16.mxu0 0
      %6101 = vmatmul.mubr.bf16.gmra.mrb[0].mxu0 %v5973
      %v6102 = vpop.f32.mrb[0].mxu0
      %v6103 = vadd.f32 %v5933, %v6102
      %v6104 = vpop.f32.mrb[0].mxu0
      %v6105 = vpop.f32.mrb[0].mxu0
      %v6106 = vadd.f32 %v5933, %v6105
      %v6107 = vpop.f32.mrb[0].mxu0
      %6108 = vmatprep.mubr.bf16.mxu0 0
      %6109 = vmatmul.mubr.bf16.gmra.mrb[0].mxu0 %v5975
      %v6110 = vpop.f32.mrb[0].mxu0
      %v6111 = vadd.f32 %v5933, %v6110
      %v6112 = vpop.f32.mrb[0].mxu0
      %v6113 = vpop.f32.mrb[0].mxu0
      %v6114 = vadd.f32 %v5933, %v6113
      %v6115 = vpop.f32.mrb[0].mxu0
      %6116 = vmatprep.mubr.bf16.mxu0 0
      %6117 = vmatmul.mubr.bf16.gmra.mrb[0].mxu0 %v5977
      %v6118 = vpop.f32.mrb[0].mxu0
      %v6119 = vadd.f32 %v5933, %v6118
      %v6120 = vpop.f32.mrb[0].mxu0
      %v6121 = vpop.f32.mrb[0].mxu0
      %v6122 = vadd.f32 %v5933, %v6121
      %v6123 = vpop.f32.mrb[0].mxu0
      %6124 = vmatprep.mubr.bf16.mxu0 0
      %6125 = vmatmul.mubr.bf16.gmra.mrb[0].mxu0 %v5979
      %v6126 = vpop.f32.mrb[0].mxu0
      %v6127 = vadd.f32 %v5933, %v6126
      %v6128 = vpop.f32.mrb[0].mxu0
      %v6129 = vpop.f32.mrb[0].mxu0
      %v6130 = vadd.f32 %v5933, %v6129
      %v6131 = vpop.f32.mrb[0].mxu0
      %6132 = vmatprep.mubr.bf16.mxu0 0
      %6133 = vmatmul.mubr.bf16.gmra.mrb[0].mxu0 %v5981
      %v6134 = vpop.f32.mrb[0].mxu0
      %v6135 = vadd.f32 %v5933, %v6134
      %v6136 = vpop.f32.mrb[0].mxu0
      %v6137 = vpop.f32.mrb[0].mxu0
      %v6138 = vadd.f32 %v5933, %v6137
      %v6139 = vpop.f32.mrb[0].mxu0
      %6140 = vmatprep.mubr.bf16.mxu0 0
      %6141 = vmatmul.mubr.bf16.gmra.mrb[0].mxu0 %v5983
      %v6142 = vpop.f32.mrb[0].mxu0
      %v6143 = vadd.f32 %v5933, %v6142
      %v6144 = vpop.f32.mrb[0].mxu0
      %v6145 = vpop.f32.mrb[0].mxu0
      %v6146 = vadd.f32 %v5933, %v6145
      %v6147 = vpop.f32.mrb[0].mxu0
      %6148 = vmatprep.mubr.bf16.mxu0 0
      %6149 = vmatmul.mubr.bf16.gmra.mrb[0].mxu0 %v5985
      %v6150 = vpop.f32.mrb[0].mxu0
      %v6151 = vadd.f32 %v5933, %v6150
      %v6152 = vpop.f32.mrb[0].mxu0
      %v6153 = vpop.f32.mrb[0].mxu0
      %v6154 = vadd.f32 %v5933, %v6153
      %v6155 = vpop.f32.mrb[0].mxu0
      %6156 = vmatprep.mubr.bf16.mxu0 0
      %6157 = vmatmul.mubr.bf16.gmra.mrb[0].mxu0 %v5987
      %v6158 = vpop.f32.mrb[0].mxu0
      %v6159 = vadd.f32 %v5933, %v6158
      %v6160 = vpop.f32.mrb[0].mxu0
      %v6161 = vpop.f32.mrb[0].mxu0
      %v6162 = vadd.f32 %v5933, %v6161
      %v6163 = vpop.f32.mrb[0].mxu0
      %6164 = vmatprep.mubr.bf16.mxu0 0
      %6165 = vmatmul.mubr.bf16.gmra.mrb[0].mxu0 %v5989
      %v6166 = vpop.f32.mrb[0].mxu0
      %v6167 = vadd.f32 %v5933, %v6166
      %v6168 = vpop.f32.mrb[0].mxu0
      %v6169 = vpop.f32.mrb[0].mxu0
      %v6170 = vadd.f32 %v5933, %v6169
      %v6171 = vpop.f32.mrb[0].mxu0
      %6172 = vmatprep.mubr.bf16.mxu0 0
      %6173 = vmatmul.mubr.bf16.gmra.mrb[0].mxu0 %v5991
      %v6174 = vpop.f32.mrb[0].mxu0
      %v6175 = vadd.f32 %v5933, %v6174
      %v6176 = vpop.f32.mrb[0].mxu0
      %v6177 = vpop.f32.mrb[0].mxu0
      %v6178 = vadd.f32 %v5933, %v6177
      %v6179 = vpop.f32.mrb[0].mxu0
      %6180 = vmatprep.mubr.bf16.mxu0 0
      %6181 = vmatmul.mubr.bf16.gmra.mrb[0].mxu0 %v5993
      %v6182 = vpop.f32.mrb[0].mxu0
      %v6183 = vadd.f32 %v5933, %v6182
      %v6184 = vpop.f32.mrb[0].mxu0
      %v6185 = vpop.f32.mrb[0].mxu0
      %v6186 = vadd.f32 %v5933, %v6185
      %v6187 = vpop.f32.mrb[0].mxu0
      %6188 = vmatprep.mubr.bf16.mxu0 0
      %6189 = vmatmul.mubr.bf16.gmra.mrb[0].mxu0 %v5995
      %v6190 = vpop.f32.mrb[0].mxu0
      %v6191 = vadd.f32 %v5933, %v6190
      %v6192 = vpop.f32.mrb[0].mxu0
      %v6193 = vpop.f32.mrb[0].mxu0
      %v6194 = vadd.f32 %v5933, %v6193
      %v6195 = vpop.f32.mrb[0].mxu0
      %6196 = vmatprep.mubr.bf16.mxu0 0
      %6197 = vmatmul.mubr.bf16.gmra.mrb[0].mxu0 %v5997
      %v6198 = vpop.f32.mrb[0].mxu0
      %v6199 = vadd.f32 %v5933, %v6198
      %v6200 = vpop.f32.mrb[0].mxu0
      %v6201 = vpop.f32.mrb[0].mxu0
      %v6202 = vadd.f32 %v5933, %v6201
      %v6203 = vpop.f32.mrb[0].mxu0
      %6204 = vmatprep.mubr.bf16.mxu0 0
      %6205 = vmatmul.mubr.bf16.gmra.mrb[0].mxu0 %v5999
      %v6206 = vpop.f32.mrb[0].mxu0
      %v6207 = vadd.f32 %v5933, %v6206
      %v6208 = vpop.f32.mrb[0].mxu0
      %v6209 = vpop.f32.mrb[0].mxu0
      %v6210 = vadd.f32 %v5933, %v6209
      %v6211 = vpop.f32.mrb[0].mxu0
      %6212 = vmatprep.mubr.bf16.mxu0 0
      %6213 = vmatmul.mubr.bf16.gmra.mrb[0].mxu0 %v6001
      %v6214 = vpop.f32.mrb[0].mxu0
      %v6215 = vadd.f32 %v5933, %v6214
      %v6216 = vpop.f32.mrb[0].mxu0
      %v6217 = vpop.f32.mrb[0].mxu0
      %v6218 = vadd.f32 %v5933, %v6217
      %v6219 = vpop.f32.mrb[0].mxu0
      %6220 = vmatprep.mubr.bf16.mxu0 0
      %6221 = vmatmul.mubr.bf16.gmra.mrb[0].mxu0 %v6003
      %v6222 = vpop.f32.mrb[0].mxu0
      %v6223 = vadd.f32 %v5933, %v6222
      %v6224 = vpop.f32.mrb[0].mxu0
      %v6225 = vpop.f32.mrb[0].mxu0
      %v6226 = vadd.f32 %v5933, %v6225
      %v6227 = vpop.f32.mrb[0].mxu0
      %6228 = vmatprep.mubr.bf16.mxu0 0
      %6229 = vmatmul.mubr.bf16.gmra.mrb[0].mxu0 %v6005
      %v6230 = vpop.f32.mrb[0].mxu0
      %v6231 = vadd.f32 %v5933, %v6230
      %v6232 = vpop.f32.mrb[0].mxu0
      %v6233 = vpop.f32.mrb[0].mxu0
      %v6234 = vadd.f32 %v5933, %v6233
      %v6235 = vpop.f32.mrb[0].mxu0
      %6236 = vmatprep.mubr.bf16.mxu0 0
      %6237 = vmatmul.mubr.bf16.gmra.mrb[0].mxu0 %v6007
      %v6238 = vpop.f32.mrb[0].mxu0
      %v6239 = vadd.f32 %v5933, %v6238
      %v6240 = vpop.f32.mrb[0].mxu0
      %v6241 = vpop.f32.mrb[0].mxu0
      %v6242 = vadd.f32 %v5933, %v6241
      %v6243 = vpop.f32.mrb[0].mxu0
      %6244 = vmatprep.mubr.bf16.mxu0 0
      %6245 = vmatmul.mubr.bf16.gmra.mrb[0].mxu0 %v6009
      %v6246 = vpop.f32.mrb[0].mxu0
      %v6247 = vadd.f32 %v5933, %v6246
      %v6248 = vpop.f32.mrb[0].mxu0
      %v6249 = vpop.f32.mrb[0].mxu0
      %v6250 = vadd.f32 %v5933, %v6249
      %v6251 = vpop.f32.mrb[0].mxu0
      %6252 = vmatprep.mubr.bf16.mxu0 0
      %6253 = vmatmul.mubr.bf16.gmra.mrb[0].mxu0 %v6011
      %v6254 = vpop.f32.mrb[0].mxu0
      %v6255 = vadd.f32 %v5933, %v6254
      %v6256 = vpop.f32.mrb[0].mxu0
      %v6257 = vpop.f32.mrb[0].mxu0
      %v6258 = vadd.f32 %v5933, %v6257
      %v6259 = vpop.f32.mrb[0].mxu0
      %6260 = vmatprep.mubr.bf16.mxu0 0
      %6261 = vmatmul.mubr.bf16.gmra.mrb[0].mxu0 %v6013
      %v6262 = vpop.f32.mrb[0].mxu0
      %v6263 = vadd.f32 %v5933, %v6262
      %v6264 = vpop.f32.mrb[0].mxu0
      %v6265 = vpop.f32.mrb[0].mxu0
      %v6266 = vadd.f32 %v5933, %v6265
      %v6267 = vpop.f32.mrb[0].mxu0
      %6268 = vmatprep.mubr.bf16.mxu0 0
      %6269 = vmatmul.mubr.bf16.gmra.mrb[0].mxu0 %v6015
      %v6270 = vpop.f32.mrb[0].mxu0
      %v6271 = vadd.f32 %v5933, %v6270
      %v6272 = vpop.f32.mrb[0].mxu0
      %v6273 = vpop.f32.mrb[0].mxu0
      %v6274 = vadd.f32 %v5933, %v6273
      %v6275 = vpop.f32.mrb[0].mxu0
      %6276 = vmatprep.mubr.bf16.mxu0 0
      %6277 = vmatmul.mubr.bf16.gmra.mrb[0].mxu0 %v6017
      %v6278 = vpop.f32.mrb[0].mxu0
      %v6279 = vadd.f32 %v5933, %v6278
      %v6280 = vpop.f32.mrb[0].mxu0
      %v6281 = vpop.f32.mrb[0].mxu0
      %v6282 = vadd.f32 %v5933, %v6281
      %v6283 = vpop.f32.mrb[0].mxu0
      %6284 = vmatprep.mubr.bf16.mxu0 0
      %6285 = vmatmul.mubr.bf16.gmra.mrb[0].mxu0 %v6019
      %v6286 = vpop.f32.mrb[0].mxu0
      %v6287 = vadd.f32 %v5933, %v6286
      %v6288 = vpop.f32.mrb[0].mxu0
      %v6289 = vpop.f32.mrb[0].mxu0
      %v6290 = vadd.f32 %v5933, %v6289
      %v6291 = vpop.f32.mrb[0].mxu0
      %6292 = vmatprep.mubr.bf16.mxu0 0
      %6293 = vmatmul.mubr.bf16.gmra.mrb[0].mxu0 %v6021
      %v6294 = vpop.f32.mrb[0].mxu0
      %v6295 = vadd.f32 %v5933, %v6294
      %v6296 = vpop.f32.mrb[0].mxu0
      %v6297 = vpop.f32.mrb[0].mxu0
      %v6298 = vadd.f32 %v5933, %v6297
      %v6299 = vpop.f32.mrb[0].mxu0
      %6300 = vmatprep.mubr.bf16.mxu0 0
      %6301 = vmatmul.mubr.bf16.gmra.mrb[0].mxu0 %v6023
      %v6302 = vpop.f32.mrb[0].mxu0
      %v6303 = vadd.f32 %v5933, %v6302
      %v6304 = vpop.f32.mrb[0].mxu0
      %v6305 = vpop.f32.mrb[0].mxu0
      %v6306 = vadd.f32 %v5933, %v6305
      %v6307 = vpop.f32.mrb[0].mxu0
      %6308 = vmatprep.mubr.bf16.mxu0 0
      %6309 = vmatmul.mubr.bf16.gmra.mrb[0].mxu0 %v6025
      %v6310 = vpop.f32.mrb[0].mxu0
      %v6311 = vadd.f32 %v5933, %v6310
      %v6312 = vpop.f32.mrb[0].mxu0
      %v6313 = vpop.f32.mrb[0].mxu0
      %v6314 = vadd.f32 %v5933, %v6313
      %v6315 = vpop.f32.mrb[0].mxu0
      %6316 = vmatprep.mubr.bf16.mxu0 0
      %6317 = vmatmul.mubr.bf16.gmra.mrb[0].mxu0 %v6027
      %v6318 = vpop.f32.mrb[0].mxu0
      %v6319 = vadd.f32 %v5933, %v6318
      %v6320 = vpop.f32.mrb[0].mxu0
      %v6321 = vpop.f32.mrb[0].mxu0
      %v6322 = vadd.f32 %v5933, %v6321
      %v6323 = vpop.f32.mrb[0].mxu0
      %6324 = vdwg.mxu0
      %v6325 = vld [vmem:[%s3] sm:$0x1]
      %v6327 = vlaneseq
      %v6328 = vshrl.u32 %v6327, 7
      %v6329 = vsub.s32 0, %v6328
      %v6330 = vrot.slane %v6325, %v6329
      %v6332 = vmul.f32 %v6071, %v6330
      %v6333 = vmul.f32 %v6074, %v6330
      %v6334 = vmul.f32 %v6079, %v6330
      %v6335 = vmul.f32 %v6082, %v6330
      %v6336 = vmul.f32 %v6087, %v6330
      %v6337 = vmul.f32 %v6090, %v6330
      %v6338 = vmul.f32 %v6095, %v6330
      %v6339 = vmul.f32 %v6098, %v6330
      %v6340 = vmul.f32 %v6103, %v6330
      %v6341 = vmul.f32 %v6106, %v6330
      %v6342 = vmul.f32 %v6111, %v6330
      %v6343 = vmul.f32 %v6114, %v6330
      %v6344 = vmul.f32 %v6119, %v6330
      %v6345 = vmul.f32 %v6122, %v6330
      %v6346 = vmul.f32 %v6127, %v6330
      %v6347 = vmul.f32 %v6130, %v6330
      %v6348 = vmul.f32 %v6135, %v6330
      %v6349 = vmul.f32 %v6138, %v6330
      %v6350 = vmul.f32 %v6143, %v6330
      %v6351 = vmul.f32 %v6146, %v6330
      %v6352 = vmul.f32 %v6151, %v6330
      %v6353 = vmul.f32 %v6154, %v6330
      %v6354 = vmul.f32 %v6159, %v6330
      %v6355 = vmul.f32 %v6162, %v6330
      %v6356 = vmul.f32 %v6167, %v6330
      %v6357 = vmul.f32 %v6170, %v6330
      %v6358 = vmul.f32 %v6175, %v6330
      %v6359 = vmul.f32 %v6178, %v6330
      %v6360 = vmul.f32 %v6183, %v6330
      %v6361 = vmul.f32 %v6186, %v6330
      %v6362 = vmul.f32 %v6191, %v6330
      %v6363 = vmul.f32 %v6194, %v6330
      %v6364 = vmul.f32 %v6199, %v6330
      %v6365 = vmul.f32 %v6202, %v6330
      %v6366 = vmul.f32 %v6207, %v6330
      %v6367 = vmul.f32 %v6210, %v6330
      %v6368 = vmul.f32 %v6215, %v6330
      %v6369 = vmul.f32 %v6218, %v6330
      %v6370 = vmul.f32 %v6223, %v6330
      %v6371 = vmul.f32 %v6226, %v6330
      %v6372 = vmul.f32 %v6231, %v6330
      %v6373 = vmul.f32 %v6234, %v6330
      %v6374 = vmul.f32 %v6239, %v6330
      %v6375 = vmul.f32 %v6242, %v6330
      %v6376 = vmul.f32 %v6247, %v6330
      %v6377 = vmul.f32 %v6250, %v6330
      %v6378 = vmul.f32 %v6255, %v6330
      %v6379 = vmul.f32 %v6258, %v6330
      %v6380 = vmul.f32 %v6263, %v6330
      %v6381 = vmul.f32 %v6266, %v6330
      %v6382 = vmul.f32 %v6271, %v6330
      %v6383 = vmul.f32 %v6274, %v6330
      %v6384 = vmul.f32 %v6279, %v6330
      %v6385 = vmul.f32 %v6282, %v6330
      %v6386 = vmul.f32 %v6287, %v6330
      %v6387 = vmul.f32 %v6290, %v6330
      %v6388 = vmul.f32 %v6295, %v6330
      %v6389 = vmul.f32 %v6298, %v6330
      %v6390 = vmul.f32 %v6303, %v6330
      %v6391 = vmul.f32 %v6306, %v6330
      %v6392 = vmul.f32 %v6311, %v6330
      %v6393 = vmul.f32 %v6314, %v6330
      %v6394 = vmul.f32 %v6319, %v6330
      %v6395 = vmul.f32 %v6322, %v6330
      %v6396 = vld [vmem:[%s4] sm:$0x1]
      %v6398 = vlaneseq
      %v6399 = vshrl.u32 %v6398, 7
      %v6400 = vsub.s32 0, %v6399
      %v6401 = vrot.slane %v6396, %v6400
      %v6403 = vadd.f32 %v6332, %v6401
      %v6404 = vadd.f32 %v6333, %v6401
      %v6405 = vadd.f32 %v6334, %v6401
      %v6406 = vadd.f32 %v6335, %v6401
      %v6407 = vadd.f32 %v6336, %v6401
      %v6408 = vadd.f32 %v6337, %v6401
      %v6409 = vadd.f32 %v6338, %v6401
      %v6410 = vadd.f32 %v6339, %v6401
      %v6411 = vadd.f32 %v6340, %v6401
      %v6412 = vadd.f32 %v6341, %v6401
      %v6413 = vadd.f32 %v6342, %v6401
      %v6414 = vadd.f32 %v6343, %v6401
      %v6415 = vadd.f32 %v6344, %v6401
      %v6416 = vadd.f32 %v6345, %v6401
      %v6417 = vadd.f32 %v6346, %v6401
      %v6418 = vadd.f32 %v6347, %v6401
      %v6419 = vadd.f32 %v6348, %v6401
      %v6420 = vadd.f32 %v6349, %v6401
      %v6421 = vadd.f32 %v6350, %v6401
      %v6422 = vadd.f32 %v6351, %v6401
      %v6423 = vadd.f32 %v6352, %v6401
      %v6424 = vadd.f32 %v6353, %v6401
      %v6425 = vadd.f32 %v6354, %v6401
      %v6426 = vadd.f32 %v6355, %v6401
      %v6427 = vadd.f32 %v6356, %v6401
      %v6428 = vadd.f32 %v6357, %v6401
      %v6429 = vadd.f32 %v6358, %v6401
      %v6430 = vadd.f32 %v6359, %v6401
      %v6431 = vadd.f32 %v6360, %v6401
      %v6432 = vadd.f32 %v6361, %v6401
      %v6433 = vadd.f32 %v6362, %v6401
      %v6434 = vadd.f32 %v6363, %v6401
      %v6435 = vadd.f32 %v6364, %v6401
      %v6436 = vadd.f32 %v6365, %v6401
      %v6437 = vadd.f32 %v6366, %v6401
      %v6438 = vadd.f32 %v6367, %v6401
      %v6439 = vadd.f32 %v6368, %v6401
      %v6440 = vadd.f32 %v6369, %v6401
      %v6441 = vadd.f32 %v6370, %v6401
      %v6442 = vadd.f32 %v6371, %v6401
      %v6443 = vadd.f32 %v6372, %v6401
      %v6444 = vadd.f32 %v6373, %v6401
      %v6445 = vadd.f32 %v6374, %v6401
      %v6446 = vadd.f32 %v6375, %v6401
      %v6447 = vadd.f32 %v6376, %v6401
      %v6448 = vadd.f32 %v6377, %v6401
      %v6449 = vadd.f32 %v6378, %v6401
      %v6450 = vadd.f32 %v6379, %v6401
      %v6451 = vadd.f32 %v6380, %v6401
      %v6452 = vadd.f32 %v6381, %v6401
      %v6453 = vadd.f32 %v6382, %v6401
      %v6454 = vadd.f32 %v6383, %v6401
      %v6455 = vadd.f32 %v6384, %v6401
      %v6456 = vadd.f32 %v6385, %v6401
      %v6457 = vadd.f32 %v6386, %v6401
      %v6458 = vadd.f32 %v6387, %v6401
      %v6459 = vadd.f32 %v6388, %v6401
      %v6460 = vadd.f32 %v6389, %v6401
      %v6461 = vadd.f32 %v6390, %v6401
      %v6462 = vadd.f32 %v6391, %v6401
      %v6463 = vadd.f32 %v6392, %v6401
      %v6464 = vadd.f32 %v6393, %v6401
      %v6465 = vadd.f32 %v6394, %v6401
      %v6466 = vadd.f32 %v6395, %v6401
      %v6467 = vpack.c.bf16 %v6404, %v6403
      %v6468 = vpack.c.bf16 %v6406, %v6405
      %v6469 = vpack.c.bf16 %v6408, %v6407
      %v6470 = vpack.c.bf16 %v6410, %v6409
      %v6471 = vpack.c.bf16 %v6412, %v6411
      %v6472 = vpack.c.bf16 %v6414, %v6413
      %v6473 = vpack.c.bf16 %v6416, %v6415
      %v6474 = vpack.c.bf16 %v6418, %v6417
      %v6475 = vpack.c.bf16 %v6420, %v6419
      %v6476 = vpack.c.bf16 %v6422, %v6421
      %v6477 = vpack.c.bf16 %v6424, %v6423
      %v6478 = vpack.c.bf16 %v6426, %v6425
      %v6479 = vpack.c.bf16 %v6428, %v6427
      %v6480 = vpack.c.bf16 %v6430, %v6429
      %v6481 = vpack.c.bf16 %v6432, %v6431
      %v6482 = vpack.c.bf16 %v6434, %v6433
      %v6483 = vpack.c.bf16 %v6436, %v6435
      %v6484 = vpack.c.bf16 %v6438, %v6437
      %v6485 = vpack.c.bf16 %v6440, %v6439
      %v6486 = vpack.c.bf16 %v6442, %v6441
      %v6487 = vpack.c.bf16 %v6444, %v6443
      %v6488 = vpack.c.bf16 %v6446, %v6445
      %v6489 = vpack.c.bf16 %v6448, %v6447
      %v6490 = vpack.c.bf16 %v6450, %v6449
      %v6491 = vpack.c.bf16 %v6452, %v6451
      %v6492 = vpack.c.bf16 %v6454, %v6453
      %v6493 = vpack.c.bf16 %v6456, %v6455
      %v6494 = vpack.c.bf16 %v6458, %v6457
      %v6495 = vpack.c.bf16 %v6460, %v6459
      %v6496 = vpack.c.bf16 %v6462, %v6461
      %v6497 = vpack.c.bf16 %v6464, %v6463
      %v6498 = vpack.c.bf16 %v6466, %v6465
      %v6531 = vunpack.c.l.b16 %v6467
      %v6532 = vunpack.c.h.b16 %v6467
      %v6533 = vunpack.c.l.b16 %v6468
      %v6534 = vunpack.c.h.b16 %v6468
      %v6535 = vunpack.c.l.b16 %v6469
      %v6536 = vunpack.c.h.b16 %v6469
      %v6537 = vunpack.c.l.b16 %v6470
      %v6538 = vunpack.c.h.b16 %v6470
      %v6539 = vunpack.c.l.b16 %v6471
      %v6540 = vunpack.c.h.b16 %v6471
      %v6541 = vunpack.c.l.b16 %v6472
      %v6542 = vunpack.c.h.b16 %v6472
      %v6543 = vunpack.c.l.b16 %v6473
      %v6544 = vunpack.c.h.b16 %v6473
      %v6545 = vunpack.c.l.b16 %v6474
      %v6546 = vunpack.c.h.b16 %v6474
      %v6547 = vunpack.c.l.b16 %v6475
      %v6548 = vunpack.c.h.b16 %v6475
      %v6549 = vunpack.c.l.b16 %v6476
      %v6550 = vunpack.c.h.b16 %v6476
      %v6551 = vunpack.c.l.b16 %v6477
      %v6552 = vunpack.c.h.b16 %v6477
      %v6553 = vunpack.c.l.b16 %v6478
      %v6554 = vunpack.c.h.b16 %v6478
      %v6555 = vunpack.c.l.b16 %v6479
      %v6556 = vunpack.c.h.b16 %v6479
      %v6557 = vunpack.c.l.b16 %v6480
      %v6558 = vunpack.c.h.b16 %v6480
      %v6559 = vunpack.c.l.b16 %v6481
      %v6560 = vunpack.c.h.b16 %v6481
      %v6561 = vunpack.c.l.b16 %v6482
      %v6562 = vunpack.c.h.b16 %v6482
      %v6563 = vunpack.c.l.b16 %v6483
      %v6564 = vunpack.c.h.b16 %v6483
      %v6565 = vunpack.c.l.b16 %v6484
      %v6566 = vunpack.c.h.b16 %v6484
      %v6567 = vunpack.c.l.b16 %v6485
      %v6568 = vunpack.c.h.b16 %v6485
      %v6569 = vunpack.c.l.b16 %v6486
      %v6570 = vunpack.c.h.b16 %v6486
      %v6571 = vunpack.c.l.b16 %v6487
      %v6572 = vunpack.c.h.b16 %v6487
      %v6573 = vunpack.c.l.b16 %v6488
      %v6574 = vunpack.c.h.b16 %v6488
      %v6575 = vunpack.c.l.b16 %v6489
      %v6576 = vunpack.c.h.b16 %v6489
      %v6577 = vunpack.c.l.b16 %v6490
      %v6578 = vunpack.c.h.b16 %v6490
      %v6579 = vunpack.c.l.b16 %v6491
      %v6580 = vunpack.c.h.b16 %v6491
      %v6581 = vunpack.c.l.b16 %v6492
      %v6582 = vunpack.c.h.b16 %v6492
      %v6583 = vunpack.c.l.b16 %v6493
      %v6584 = vunpack.c.h.b16 %v6493
      %v6585 = vunpack.c.l.b16 %v6494
      %v6586 = vunpack.c.h.b16 %v6494
      %v6587 = vunpack.c.l.b16 %v6495
      %v6588 = vunpack.c.h.b16 %v6495
      %v6589 = vunpack.c.l.b16 %v6496
      %v6590 = vunpack.c.h.b16 %v6496
      %v6591 = vunpack.c.l.b16 %v6497
      %v6592 = vunpack.c.h.b16 %v6497
      %v6593 = vunpack.c.l.b16 %v6498
      %v6594 = vunpack.c.h.b16 %v6498
      %v6595 = vpack.c.b16 %v6531, %v6531
      %v6596 = vpack.c.b16 %v6532, %v6532
      %v6597 = vpack.c.b16 %v6533, %v6533
      %v6598 = vpack.c.b16 %v6534, %v6534
      %v6599 = vpack.c.b16 %v6535, %v6535
      %v6600 = vpack.c.b16 %v6536, %v6536
      %v6601 = vpack.c.b16 %v6537, %v6537
      %v6602 = vpack.c.b16 %v6538, %v6538
      %v6603 = vpack.c.b16 %v6539, %v6539
      %v6604 = vpack.c.b16 %v6540, %v6540
      %v6605 = vpack.c.b16 %v6541, %v6541
      %v6606 = vpack.c.b16 %v6542, %v6542
      %v6607 = vpack.c.b16 %v6543, %v6543
      %v6608 = vpack.c.b16 %v6544, %v6544
      %v6609 = vpack.c.b16 %v6545, %v6545
      %v6610 = vpack.c.b16 %v6546, %v6546
      %v6611 = vpack.c.b16 %v6547, %v6547
      %v6612 = vpack.c.b16 %v6548, %v6548
      %v6613 = vpack.c.b16 %v6549, %v6549
      %v6614 = vpack.c.b16 %v6550, %v6550
      %v6615 = vpack.c.b16 %v6551, %v6551
      %v6616 = vpack.c.b16 %v6552, %v6552
      %v6617 = vpack.c.b16 %v6553, %v6553
      %v6618 = vpack.c.b16 %v6554, %v6554
      %v6619 = vpack.c.b16 %v6555, %v6555
      %v6620 = vpack.c.b16 %v6556, %v6556
      %v6621 = vpack.c.b16 %v6557, %v6557
      %v6622 = vpack.c.b16 %v6558, %v6558
      %v6623 = vpack.c.b16 %v6559, %v6559
      %v6624 = vpack.c.b16 %v6560, %v6560
      %v6625 = vpack.c.b16 %v6561, %v6561
      %v6626 = vpack.c.b16 %v6562, %v6562
      %v6627 = vpack.c.b16 %v6563, %v6563
      %v6628 = vpack.c.b16 %v6564, %v6564
      %v6629 = vpack.c.b16 %v6565, %v6565
      %v6630 = vpack.c.b16 %v6566, %v6566
      %v6631 = vpack.c.b16 %v6567, %v6567
      %v6632 = vpack.c.b16 %v6568, %v6568
      %v6633 = vpack.c.b16 %v6569, %v6569
      %v6634 = vpack.c.b16 %v6570, %v6570
      %v6635 = vpack.c.b16 %v6571, %v6571
      %v6636 = vpack.c.b16 %v6572, %v6572
      %v6637 = vpack.c.b16 %v6573, %v6573
      %v6638 = vpack.c.b16 %v6574, %v6574
      %v6639 = vpack.c.b16 %v6575, %v6575
      %v6640 = vpack.c.b16 %v6576, %v6576
      %v6641 = vpack.c.b16 %v6577, %v6577
      %v6642 = vpack.c.b16 %v6578, %v6578
      %v6643 = vpack.c.b16 %v6579, %v6579
      %v6644 = vpack.c.b16 %v6580, %v6580
      %v6645 = vpack.c.b16 %v6581, %v6581
      %v6646 = vpack.c.b16 %v6582, %v6582
      %v6647 = vpack.c.b16 %v6583, %v6583
      %v6648 = vpack.c.b16 %v6584, %v6584
      %v6649 = vpack.c.b16 %v6585, %v6585
      %v6650 = vpack.c.b16 %v6586, %v6586
      %v6651 = vpack.c.b16 %v6587, %v6587
      %v6652 = vpack.c.b16 %v6588, %v6588
      %v6653 = vpack.c.b16 %v6589, %v6589
      %v6654 = vpack.c.b16 %v6590, %v6590
      %v6655 = vpack.c.b16 %v6591, %v6591
      %v6656 = vpack.c.b16 %v6592, %v6592
      %v6657 = vpack.c.b16 %v6593, %v6593
      %v6658 = vpack.c.b16 %v6594, %v6594
      %vm6723 = vcmask 240640
      %6724 = vst.msk [vmem:[%s246] sm:$0xf] %vm6723, %v6595
      %6725 = vst.msk [vmem:[%s246 + $0x4] sm:$0xf] %vm6723, %v6596
      %6726 = vst.msk [vmem:[%s246 + $0x8] sm:$0xf] %vm6723, %v6597
      %6727 = vst.msk [vmem:[%s246 + $0xc] sm:$0xf] %vm6723, %v6598
      %6728 = vst.msk [vmem:[%s246 + $0x10] sm:$0xf] %vm6723, %v6599
      %6729 = vst.msk [vmem:[%s246 + $0x14] sm:$0xf] %vm6723, %v6600
      %6730 = vst.msk [vmem:[%s246 + $0x18] sm:$0xf] %vm6723, %v6601
      %6731 = vst.msk [vmem:[%s246 + $0x1c] sm:$0xf] %vm6723, %v6602
      %6732 = vst.msk [vmem:[%s246 + $0x20] sm:$0xf] %vm6723, %v6603
      %6733 = vst.msk [vmem:[%s246 + $0x24] sm:$0xf] %vm6723, %v6604
      %6734 = vst.msk [vmem:[%s246 + $0x28] sm:$0xf] %vm6723, %v6605
      %6735 = vst.msk [vmem:[%s246 + $0x2c] sm:$0xf] %vm6723, %v6606
      %6736 = vst.msk [vmem:[%s246 + $0x30] sm:$0xf] %vm6723, %v6607
      %6737 = vst.msk [vmem:[%s246 + $0x34] sm:$0xf] %vm6723, %v6608
      %6738 = vst.msk [vmem:[%s246 + $0x38] sm:$0xf] %vm6723, %v6609
      %6739 = vst.msk [vmem:[%s246 + $0x3c] sm:$0xf] %vm6723, %v6610
      %6740 = vst.msk [vmem:[%s246 + $0x40] sm:$0xf] %vm6723, %v6611
      %6741 = vst.msk [vmem:[%s246 + $0x44] sm:$0xf] %vm6723, %v6612
      %6742 = vst.msk [vmem:[%s246 + $0x48] sm:$0xf] %vm6723, %v6613
      %6743 = vst.msk [vmem:[%s246 + $0x4c] sm:$0xf] %vm6723, %v6614
      %6744 = vst.msk [vmem:[%s246 + $0x50] sm:$0xf] %vm6723, %v6615
      %6745 = vst.msk [vmem:[%s246 + $0x54] sm:$0xf] %vm6723, %v6616
      %6746 = vst.msk [vmem:[%s246 + $0x58] sm:$0xf] %vm6723, %v6617
      %6747 = vst.msk [vmem:[%s246 + $0x5c] sm:$0xf] %vm6723, %v6618
      %6748 = vst.msk [vmem:[%s246 + $0x60] sm:$0xf] %vm6723, %v6619
      %6749 = vst.msk [vmem:[%s246 + $0x64] sm:$0xf] %vm6723, %v6620
      %6750 = vst.msk [vmem:[%s246 + $0x68] sm:$0xf] %vm6723, %v6621
      %6751 = vst.msk [vmem:[%s246 + $0x6c] sm:$0xf] %vm6723, %v6622
      %6752 = vst.msk [vmem:[%s246 + $0x70] sm:$0xf] %vm6723, %v6623
      %6753 = vst.msk [vmem:[%s246 + $0x74] sm:$0xf] %vm6723, %v6624
      %6754 = vst.msk [vmem:[%s246 + $0x78] sm:$0xf] %vm6723, %v6625
      %6755 = vst.msk [vmem:[%s246 + $0x7c] sm:$0xf] %vm6723, %v6626
      %6756 = vst.msk [vmem:[%s246 + $0x80] sm:$0xf] %vm6723, %v6627
      %6757 = vst.msk [vmem:[%s246 + $0x84] sm:$0xf] %vm6723, %v6628
      %6758 = vst.msk [vmem:[%s246 + $0x88] sm:$0xf] %vm6723, %v6629
      %6759 = vst.msk [vmem:[%s246 + $0x8c] sm:$0xf] %vm6723, %v6630
      %6760 = vst.msk [vmem:[%s246 + $0x90] sm:$0xf] %vm6723, %v6631
      %6761 = vst.msk [vmem:[%s246 + $0x94] sm:$0xf] %vm6723, %v6632
      %6762 = vst.msk [vmem:[%s246 + $0x98] sm:$0xf] %vm6723, %v6633
      %6763 = vst.msk [vmem:[%s246 + $0x9c] sm:$0xf] %vm6723, %v6634
      %6764 = vst.msk [vmem:[%s246 + $0xa0] sm:$0xf] %vm6723, %v6635
      %6765 = vst.msk [vmem:[%s246 + $0xa4] sm:$0xf] %vm6723, %v6636
      %6766 = vst.msk [vmem:[%s246 + $0xa8] sm:$0xf] %vm6723, %v6637
      %6767 = vst.msk [vmem:[%s246 + $0xac] sm:$0xf] %vm6723, %v6638
      %6768 = vst.msk [vmem:[%s246 + $0xb0] sm:$0xf] %vm6723, %v6639
      %6769 = vst.msk [vmem:[%s246 + $0xb4] sm:$0xf] %vm6723, %v6640
      %6770 = vst.msk [vmem:[%s246 + $0xb8] sm:$0xf] %vm6723, %v6641
      %6771 = vst.msk [vmem:[%s246 + $0xbc] sm:$0xf] %vm6723, %v6642
      %6772 = vst.msk [vmem:[%s246 + $0xc0] sm:$0xf] %vm6723, %v6643
      %6773 = vst.msk [vmem:[%s246 + $0xc4] sm:$0xf] %vm6723, %v6644
      %6774 = vst.msk [vmem:[%s246 + $0xc8] sm:$0xf] %vm6723, %v6645
      %6775 = vst.msk [vmem:[%s246 + $0xcc] sm:$0xf] %vm6723, %v6646
      %6776 = vst.msk [vmem:[%s246 + $0xd0] sm:$0xf] %vm6723, %v6647
      %6777 = vst.msk [vmem:[%s246 + $0xd4] sm:$0xf] %vm6723, %v6648
      %6778 = vst.msk [vmem:[%s246 + $0xd8] sm:$0xf] %vm6723, %v6649
      %6779 = vst.msk [vmem:[%s246 + $0xdc] sm:$0xf] %vm6723, %v6650
      %6780 = vst.msk [vmem:[%s246 + $0xe0] sm:$0xf] %vm6723, %v6651
      %6781 = vst.msk [vmem:[%s246 + $0xe4] sm:$0xf] %vm6723, %v6652
      %6782 = vst.msk [vmem:[%s246 + $0xe8] sm:$0xf] %vm6723, %v6653
      %6783 = vst.msk [vmem:[%s246 + $0xec] sm:$0xf] %vm6723, %v6654
      %6784 = vst.msk [vmem:[%s246 + $0xf0] sm:$0xf] %vm6723, %v6655
      %6785 = vst.msk [vmem:[%s246 + $0xf4] sm:$0xf] %vm6723, %v6656
      %6786 = vst.msk [vmem:[%s246 + $0xf8] sm:$0xf] %vm6723, %v6657
      %6787 = vst.msk [vmem:[%s246 + $0xfc] sm:$0xf] %vm6723, %v6658
      %s6788 = smul.u32 64, %s21
      %p6789 = scmp.lt.s32.totalorder %s20, 1
      %s6790 = scalar_select %p6789, %s20, 1
      %p6791 = scmp.lt.s32.totalorder %s6788, 127
      %s6792 = scalar_select %p6791, %s6788, 127
      %s6793 = smul.addr %s6790, 128
      %s6794 = sadd.s32 %s6792, %s6793
      %s6795 = smul.addr %s6794, 4
      %s6796 = scalar_lea.vmem %s5, %s6795
      // Predicated region
      $region45: #{tpu_custom_call.1} parent=39 // pred_check
        %p6797 = pneg %p158
      $region46: #{tpu_custom_call.1} parent=39 // pred_check_branch
        %6799 = sbr.rel (%p6797) target = $region48
      $region47: #{tpu_custom_call.1} parent=39 // pred_region
        %s6800 = smul.u32 64, %s21
      $region48: #{tpu_custom_call.1} parent=39 // pred_fallthru
        _
    $region40: #{tpu_custom_call.1} parent=5 // pred_fallthru
      _
    %p6801 = scmp.le.s32.totalorder 2, %s11
    // Predicated region
    $region49: #{tpu_custom_call.1} parent=5 // pred_check
      %p6802 = pneg %p6801
    $region50: #{tpu_custom_call.1} parent=5 // pred_check_branch
      %6804 = sbr.rel (%p6802) target = $region52
    $region51: #{tpu_custom_call.1} parent=5 // pred_region
      %s6805 = ssub.s32 %s11, 2
      // Predicated region
      $region53: #{tpu_custom_call.1} parent=51 // pred_check
        %p6806 = pneg %p164
      $region54: #{tpu_custom_call.1} parent=51 // pred_check_branch
        %6808 = sbr.rel (%p6806) target = $region56
      $region55: #{tpu_custom_call.1} parent=51 // pred_region
        %s6809 = smul.u32 64, %s23
        %p6810 = scmp.lt.s32.totalorder %s22, 1
        %s6811 = scalar_select %p6810, %s22, 1
        %p6812 = scmp.lt.s32.totalorder %s6809, 127
        %s6813 = scalar_select %p6812, %s6809, 127
        %s6814 = smul.addr %s6811, 128
        %s6815 = sadd.s32 %s6813, %s6814
        %s6816 = smul.addr %s6815, 4
        %s6817 = scalar_lea.vmem %s5, %s6816
      $region56: #{tpu_custom_call.1} parent=51 // pred_fallthru
        _
    $region52: #{tpu_custom_call.1} parent=5 // pred_fallthru
      _
  $region6: #{tpu_custom_call.1} parent=0 // loop_footer
    %s15 = sadd.s32 1, %s11
  $region7: #{tpu_custom_call.1} parent=0 // loop_footer_branch
    %10 = sbr.rel target = $region3
  $region8: #{tpu_custom_call.1} parent=0 // loop_exit
    _

</llo_original>
